<compile_context>
chip_gen: v5e
topology: v5e:2x2
jax: 0.10.0
libtpu: 0.0.40
codegen_flags: <defaults>
</compile_context>

<pallas_src>
import functools

import jax
import jax.numpy as jnp
from jax.experimental import pallas as pl
from jax.experimental.pallas import tpu as pltpu


def _round_up(n, m):
    return ((n + m - 1) // m) * m


def _dropout_bits(rng_key, shape):
    """Two independent uint32 bit planes (one per dropout layer)."""
    k1, k2 = jax.random.split(rng_key)
    return (jax.random.bits(k1, shape, dtype=jnp.uint32),
            jax.random.bits(k2, shape, dtype=jnp.uint32))


def _keep_from_bits(bits, dropout_p):
    """Boolean keep mask with P(keep) = 1 - dropout_p from raw uint32 bits.

    Integer threshold compare (no float-uniform round trip). The bits are shifted down
    to 24 bits so a plain signed int32 compare suffices.
    """
    thresh = jnp.int32(int(round(dropout_p * (1 << 24))))
    return (bits >> 8).astype(jnp.int32) >= thresh


# ----------------------------------------------------------------------------- kernel


def policy_kernel(*refs, dropout_p, training):
    if training:
        (x_ref, w1_ref, b1_ref, w2_ref, b2_ref, w3_ref, b3_ref,
         m1_ref, m2_ref, o_ref) = refs
    else:
        (x_ref, w1_ref, b1_ref, w2_ref, b2_ref, w3_ref, b3_ref, o_ref) = refs
        m1_ref = m2_ref = None

    w_dt = w1_ref.dtype  # matmul-input dtype (bfloat16 on the fast path)

    def dropout(v, m_ref):
        # Elementwise math stays in f32; only the matmul inputs are narrow.
        if (not training) or dropout_p <= 0.0:
            return v
        keep = _keep_from_bits(m_ref[...], dropout_p)
        scale = jnp.float32(1.0 / (1.0 - dropout_p))
        return jnp.where(keep, v * scale, jnp.float32(0.0))

    # fc1 -> dropout -> relu   (K zero-padded to 128 in the wrapper: full-lane MXU pass)
    x = x_ref[...].astype(w_dt)
    h = jnp.dot(x, w1_ref[...], preferred_element_type=jnp.float32) + b1_ref[...]
    h = jnp.maximum(dropout(h, m1_ref), 0.0)

    # fc2 -> dropout -> relu   (dominant cost: the H x H weight, VMEM-resident across grid)
    h = jnp.dot(h.astype(w_dt), w2_ref[...],
                preferred_element_type=jnp.float32) + b2_ref[...]
    h = jnp.maximum(dropout(h, m2_ref), 0.0)

    # fc3 logits. Output columns zero-padded to 128 -> unmasked lane-dense store.
    out = jnp.dot(h.astype(w_dt), w3_ref[...],
                  preferred_element_type=jnp.float32) + b3_ref[...]
    o_ref[...] = out.astype(o_ref.dtype)


# ----------------------------------------------------------------------------- wrapper


def policy_forward(x, params, *, dropout_p=0.5, training=False, rng_key=None,
                   weight_dtype=jnp.bfloat16, block_b=256):
    """Policy forward pass in a single Pallas TPU kernel.

    x: (B, input_dim) float32
    params: dict with w1 (in,H), b1 (1,H), w2 (H,H), b2 (1,H), w3 (H,out), b3 (1,out)
    """
    if training and not (0.0 <= dropout_p < 1.0):
        raise ValueError("dropout_p must be in [0, 1) when training (p=1 would div by zero)")
    use_dropout = training and dropout_p > 0.0
    if use_dropout and rng_key is None:
        raise ValueError("training-mode dropout requires rng_key")

    B, in_dim = x.shape
    H = params["w1"].shape[1]
    out_dim = params["w3"].shape[1]

    # Padding for clean TPU layouts.
    k_pad = _round_up(max(in_dim, 1), 128)     # fc1 contraction dim -> full 128-lane vregs
    out_pad = _round_up(max(out_dim, 1), 128)  # fc3 output -> unmasked lane-dense store
    tb = min(_round_up(block_b, 8), _round_up(B, 8))  # rows per grid step (multiple of 8)
    b_pad = _round_up(B, tb)
    grid = (b_pad // tb,)

    f32 = jnp.float32
    x_p = jnp.zeros((b_pad, k_pad), f32).at[:B, :in_dim].set(x.astype(f32))
    w1 = jnp.zeros((k_pad, H), weight_dtype).at[:in_dim, :].set(
        params["w1"].astype(weight_dtype))
    b1 = params["b1"].astype(f32)
    w2 = params["w2"].astype(weight_dtype)
    b2 = params["b2"].astype(f32)
    w3 = jnp.zeros((H, out_pad), weight_dtype).at[:, :out_dim].set(
        params["w3"].astype(weight_dtype))
    b3 = jnp.zeros((1, out_pad), f32).at[:, :out_dim].set(params["b3"].astype(f32))

    row = lambda i: (i, 0)     # x / masks / output tiles stream with the grid
    const = lambda i: (0, 0)   # weights & biases stay VMEM-resident across grid steps

    # NOTE: whole-weight-in-VMEM is fine up to a few MiB (hidden=1024 bf16 ~2 MiB).  If
    # hidden_dim is scaled up (e.g. 4096), tile fc2 over K with an extra grid axis and an
    # f32 accumulator scratch, and set vmem_limit_bytes explicitly (v7x has only 64 MiB).
    in_specs = [
        pl.BlockSpec((tb, k_pad), row),
        pl.BlockSpec((k_pad, H), const),
        pl.BlockSpec((1, H), const),
        pl.BlockSpec((H, H), const),
        pl.BlockSpec((1, H), const),
        pl.BlockSpec((H, out_pad), const),
        pl.BlockSpec((1, out_pad), const),
    ]
    inputs = [x_p, w1, b1, w2, b2, w3, b3]

    if use_dropout:
        bits1, bits2 = _dropout_bits(rng_key, (b_pad, H))
        in_specs += [pl.BlockSpec((tb, H), row), pl.BlockSpec((tb, H), row)]
        inputs += [bits1, bits2]

    kernel = functools.partial(policy_kernel, dropout_p=dropout_p, training=use_dropout)

    out = pl.pallas_call(
        kernel,
        out_shape=jax.ShapeDtypeStruct((b_pad, out_pad), jnp.float32),
        grid=grid,
        in_specs=in_specs,
        out_specs=pl.BlockSpec((tb, out_pad), row),
        compiler_params=pltpu.CompilerParams(
            dimension_semantics=("parallel",)),  # batch tiles shard across TCs (v7x megacore)
    )(*inputs)

    return out[:B, :out_dim]


# ----------------------------------------------------------------------------- reference / init


def policy_forward_ref(x, params, *, weight_dtype=jnp.float32, masks=None):
    """Pure-JAX reference. masks = (m1, m2) scaled dropout masks, or None for eval mode."""
    def lin(a, w, b):
        return jnp.dot(a.astype(weight_dtype), w.astype(weight_dtype),
                       preferred_element_type=jnp.float32) + b.astype(jnp.float32)

    h = lin(x, params["w1"], params["b1"])
    if masks is not None:
        h = h * masks[0]
    h = jnp.maximum(h, 0.0)
    h = lin(h, params["w2"], params["b2"])
    if masks is not None:
        h = h * masks[1]
    h = jnp.maximum(h, 0.0)
    return lin(h, params["w3"], params["b3"])


def make_dropout_masks(rng_key, shape, dropout_p):
    """Reconstruct (in pure JAX) exactly the masks the kernel applies, for testing."""
    bits1, bits2 = _dropout_bits(rng_key, shape)
    scale = 1.0 / (1.0 - dropout_p)
    m1 = _keep_from_bits(bits1, dropout_p).astype(jnp.float32) * scale
    m2 = _keep_from_bits(bits2, dropout_p).astype(jnp.float32) * scale
    return m1, m2


def init_params(key, input_dim, hidden_dim, output_dim):
    """Mimics PyTorch's default Linear init (uniform +/- 1/sqrt(fan_in))."""
    ks = jax.random.split(key, 6)

    def linear(kw, kb, fan_in, fan_out):
        bound = 1.0 / jnp.sqrt(fan_in)
        w = jax.random.uniform(kw, (fan_in, fan_out), jnp.float32, -bound, bound)
        b = jax.random.uniform(kb, (1, fan_out), jnp.float32, -bound, bound)
        return w, b

    w1, b1 = linear(ks[0], ks[1], input_dim, hidden_dim)
    w2, b2 = linear(ks[2], ks[3], hidden_dim, hidden_dim)
    w3, b3 = linear(ks[4], ks[5], hidden_dim, output_dim)
    return dict(w1=w1, b1=b1, w2=w2, b2=b2, w3=w3, b3=b3)


if __name__ == "__main__":
    # CartPole-v1: obs dim 4, action dim 2; 8 parallel workers -> batch 8.
    input_dim, hidden_dim, output_dim = 4, 1024, 2
    batch = 8

    key = jax.random.PRNGKey(0)
    k_x, k_p, k_d, k_x2 = jax.random.split(key, 4)
    x = jax.random.normal(k_x, (batch, input_dim), jnp.float32)
    params = init_params(k_p, input_dim, hidden_dim, output_dim)

    # 1) Eval mode, f32 weights: exact check against the pure-JAX reference.
    y = policy_forward(x, params, training=False, weight_dtype=jnp.float32)
    jax.block_until_ready(y)
    assert y.shape == (batch, output_dim)
    ref = policy_forward_ref(x, params)
    assert jnp.allclose(y, ref, atol=1e-4, rtol=1e-4)

    # 2) Eval mode, bf16 weights (DMA-optimized fast path): checked against a reference
    #    that uses the identically-rounded bf16 inputs with f32 accumulation.
    y_bf = policy_forward(x, params, training=False, weight_dtype=jnp.bfloat16)
    jax.block_until_ready(y_bf)
    ref_bf = policy_forward_ref(x, params, weight_dtype=jnp.bfloat16)
    assert jnp.allclose(y_bf, ref_bf, atol=1e-2, rtol=1e-2)

    # 3) Multi-tile grid: weights stay VMEM-resident while batch tiles stream.
    xb = jax.random.normal(k_x2, (32, input_dim), jnp.float32)
    yb = policy_forward(xb, params, training=False, weight_dtype=jnp.float32, block_b=8)
    jax.block_until_ready(yb)
    refb = policy_forward_ref(xb, params)
    assert yb.shape == (32, output_dim)
    assert jnp.allclose(yb, refb, atol=1e-4, rtol=1e-4)

    # 4) Train mode: dropout bits fed to the kernel, checked exactly against a pure-JAX
    #    forward that applies the identical masks.
    p = 0.5
    y_tr = policy_forward(x, params, dropout_p=p, training=True,
                          rng_key=k_d, weight_dtype=jnp.float32)
    jax.block_until_ready(y_tr)
    masks = make_dropout_masks(k_d, (batch, hidden_dim), p)
    ref_tr = policy_forward_ref(x, params, masks=masks)
    assert y_tr.shape == (batch, output_dim)
    assert jnp.all(jnp.isfinite(y_tr))
    assert jnp.allclose(y_tr, ref_tr, atol=1e-4, rtol=1e-4)

    print("KERNEL_OK")
</pallas_src>

<mosaic_0001>
module attributes {stable_mosaic.version = 11 : i64} {
  func.func @policy_kernel(%arg0: i32, %arg1: memref<8x128xf32, #tpu.memory_space<vmem>>, %arg2: memref<128x1024xf32, #tpu.memory_space<vmem>>, %arg3: memref<1x1024xf32, #tpu.memory_space<vmem>>, %arg4: memref<1024x1024xf32, #tpu.memory_space<vmem>>, %arg5: memref<1x1024xf32, #tpu.memory_space<vmem>>, %arg6: memref<1024x128xf32, #tpu.memory_space<vmem>>, %arg7: memref<1x128xf32, #tpu.memory_space<vmem>>, %arg8: memref<8x128xf32, #tpu.memory_space<vmem>>) attributes {dimension_semantics = [#tpu.dimension_semantics<parallel>], iteration_bounds = array<i64: 1>, scalar_prefetch = 0 : i64, scratch_operands = 0 : i64, tpu.core_type = #tpu.core_type<tc>, window_params = [{transform_indices = @transform_0, window_bounds = array<i64: 8, 128>}, {pipeline_mode = #tpu.pipeline_mode<synchronous>, transform_indices = @transform_1, window_bounds = array<i64: 128, 1024>}, {pipeline_mode = #tpu.pipeline_mode<synchronous>, transform_indices = @transform_2, window_bounds = array<i64: 1, 1024>}, {pipeline_mode = #tpu.pipeline_mode<synchronous>, transform_indices = @transform_3, window_bounds = array<i64: 1024, 1024>}, {pipeline_mode = #tpu.pipeline_mode<synchronous>, transform_indices = @transform_4, window_bounds = array<i64: 1, 1024>}, {pipeline_mode = #tpu.pipeline_mode<synchronous>, transform_indices = @transform_5, window_bounds = array<i64: 1024, 128>}, {pipeline_mode = #tpu.pipeline_mode<synchronous>, transform_indices = @transform_6, window_bounds = array<i64: 1, 128>}, {transform_indices = @transform_7, window_bounds = array<i64: 8, 128>}]} {
    %c0 = arith.constant 0 : index
    %c0_0 = arith.constant 0 : index
    %0 = vector.load %arg1[%c0, %c0_0] : memref<8x128xf32, #tpu.memory_space<vmem>>, vector<8x128xf32>
    %c0_1 = arith.constant 0 : index
    %c0_2 = arith.constant 0 : index
    %1 = vector.load %arg2[%c0_1, %c0_2] : memref<128x1024xf32, #tpu.memory_space<vmem>>, vector<128x1024xf32>
    %cst = arith.constant dense<0.000000e+00> : vector<8x1024xf32>
    %2 = tpu.matmul %0, %1, %cst {dimension_numbers = #tpu.dot_dimension_numbers<[1], [0], [0], [1], [0, 0, 1, 1], [], []>} : vector<8x128xf32>, vector<128x1024xf32>, vector<8x1024xf32> -> vector<8x1024xf32>
    %c0_3 = arith.constant 0 : index
    %c0_4 = arith.constant 0 : index
    %3 = vector.load %arg3[%c0_3, %c0_4] : memref<1x1024xf32, #tpu.memory_space<vmem>>, vector<1x1024xf32>
    %4 = vector.broadcast %3 : vector<1x1024xf32> to vector<8x1024xf32>
    %5 = arith.addf %2, %4 : vector<8x1024xf32>
    %cst_5 = arith.constant 0.000000e+00 : f32
    %6 = vector.broadcast %cst_5 : f32 to vector<8x1024xf32>
    %7 = arith.maximumf %5, %6 : vector<8x1024xf32>
    %c0_6 = arith.constant 0 : index
    %c0_7 = arith.constant 0 : index
    %8 = vector.load %arg4[%c0_6, %c0_7] : memref<1024x1024xf32, #tpu.memory_space<vmem>>, vector<1024x1024xf32>
    %cst_8 = arith.constant dense<0.000000e+00> : vector<8x1024xf32>
    %9 = tpu.matmul %7, %8, %cst_8 {dimension_numbers = #tpu.dot_dimension_numbers<[1], [0], [0], [1], [0, 0, 1, 1], [], []>} : vector<8x1024xf32>, vector<1024x1024xf32>, vector<8x1024xf32> -> vector<8x1024xf32>
    %c0_9 = arith.constant 0 : index
    %c0_10 = arith.constant 0 : index
    %10 = vector.load %arg5[%c0_9, %c0_10] : memref<1x1024xf32, #tpu.memory_space<vmem>>, vector<1x1024xf32>
    %11 = vector.broadcast %10 : vector<1x1024xf32> to vector<8x1024xf32>
    %12 = arith.addf %9, %11 : vector<8x1024xf32>
    %cst_11 = arith.constant 0.000000e+00 : f32
    %13 = vector.broadcast %cst_11 : f32 to vector<8x1024xf32>
    %14 = arith.maximumf %12, %13 : vector<8x1024xf32>
    %c0_12 = arith.constant 0 : index
    %c0_13 = arith.constant 0 : index
    %15 = vector.load %arg6[%c0_12, %c0_13] : memref<1024x128xf32, #tpu.memory_space<vmem>>, vector<1024x128xf32>
    %cst_14 = arith.constant dense<0.000000e+00> : vector<8x128xf32>
    %16 = tpu.matmul %14, %15, %cst_14 {dimension_numbers = #tpu.dot_dimension_numbers<[1], [0], [0], [1], [0, 0, 1, 1], [], []>} : vector<8x1024xf32>, vector<1024x128xf32>, vector<8x128xf32> -> vector<8x128xf32>
    %c0_15 = arith.constant 0 : index
    %c0_16 = arith.constant 0 : index
    %17 = vector.load %arg7[%c0_15, %c0_16] : memref<1x128xf32, #tpu.memory_space<vmem>>, vector<1x128xf32>
    %18 = vector.broadcast %17 : vector<1x128xf32> to vector<8x128xf32>
    %19 = arith.addf %16, %18 : vector<8x128xf32>
    %c0_17 = arith.constant 0 : index
    %c0_18 = arith.constant 0 : index
    %20 = vector.load %arg8[%c0_17, %c0_18] : memref<8x128xf32, #tpu.memory_space<vmem>>, vector<8x128xf32>
    tpu.vector_store %arg8[%c0_17, %c0_18], %19 {strides = array<i32>} : memref<8x128xf32, #tpu.memory_space<vmem>>, vector<8x128xf32>,
    return
  }
  func.func @transform_0(%arg0: i32) -> (i32, i32) {
    %c0_i32 = arith.constant 0 : i32
    %c0_i32_0 = arith.constant 0 : i32
    return %arg0, %c0_i32 : i32, i32
  }
  func.func @transform_1(%arg0: i32) -> (i32, i32) {
    %c0_i32 = arith.constant 0 : i32
    %c0_i32_0 = arith.constant 0 : i32
    %c0_i32_1 = arith.constant 0 : i32
    return %c0_i32, %c0_i32_0 : i32, i32
  }
  func.func @transform_2(%arg0: i32) -> (i32, i32) {
    %c0_i32 = arith.constant 0 : i32
    %c0_i32_0 = arith.constant 0 : i32
    %c0_i32_1 = arith.constant 0 : i32
    return %c0_i32, %c0_i32_0 : i32, i32
  }
  func.func @transform_3(%arg0: i32) -> (i32, i32) {
    %c0_i32 = arith.constant 0 : i32
    %c0_i32_0 = arith.constant 0 : i32
    %c0_i32_1 = arith.constant 0 : i32
    return %c0_i32, %c0_i32_0 : i32, i32
  }
  func.func @transform_4(%arg0: i32) -> (i32, i32) {
    %c0_i32 = arith.constant 0 : i32
    %c0_i32_0 = arith.constant 0 : i32
    %c0_i32_1 = arith.constant 0 : i32
    return %c0_i32, %c0_i32_0 : i32, i32
  }
  func.func @transform_5(%arg0: i32) -> (i32, i32) {
    %c0_i32 = arith.constant 0 : i32
    %c0_i32_0 = arith.constant 0 : i32
    %c0_i32_1 = arith.constant 0 : i32
    return %c0_i32, %c0_i32_0 : i32, i32
  }
  func.func @transform_6(%arg0: i32) -> (i32, i32) {
    %c0_i32 = arith.constant 0 : i32
    %c0_i32_0 = arith.constant 0 : i32
    %c0_i32_1 = arith.constant 0 : i32
    return %c0_i32, %c0_i32_0 : i32, i32
  }
  func.func @transform_7(%arg0: i32) -> (i32, i32) {
    %c0_i32 = arith.constant 0 : i32
    %c0_i32_0 = arith.constant 0 : i32
    return %arg0, %c0_i32 : i32, i32
  }
}

</mosaic_0001>

<llo_original>
// kernel: tpu_custom_call.1
$region0: #{tpu_custom_call.1}
  #allocation0 [shape = 'u32[]', space=smem, size = 0x4, offset = 0x4, fixed_abs, tag = 'smem constant byte address 0x4 - core index']
  #allocation1 [shape = 'u32[72,128]{1,0:T(1,128)}', space=vmem, size = 0x9000, scoped, tag = 'internal scratch']
  %s0 = inlined_call_operand.hbm [shape: f32[8,128], index: 0, kind: input, shape index: {}]
  %s1 = inlined_call_operand.hbm [shape: f32[128,1024], index: 1, kind: input, shape index: {}]
  %s2 = inlined_call_operand.hbm [shape: f32[1,1024], index: 2, kind: input, shape index: {}]
  %s3 = inlined_call_operand.hbm [shape: f32[1024,1024], index: 3, kind: input, shape index: {}]
  %s4 = inlined_call_operand.hbm [shape: f32[1,1024], index: 4, kind: input, shape index: {}]
  %s5 = inlined_call_operand.hbm [shape: f32[1024,128], index: 5, kind: input, shape index: {}]
  %s6 = inlined_call_operand.hbm [shape: f32[1,128], index: 6, kind: input, shape index: {}]
  %s7 = inlined_call_operand.hbm [shape: f32[8,128], index: 7, kind: output, shape index: {}]
  %s8 = sld [smem:[#allocation0]]
  $region66: #{tpu_custom_call.1} parent=0
    _
  %s10 = ssub.s32 1, %s8
  %s11 = scalar_select 0, %s10, %s8
  $region1: #{tpu_custom_call.1} parent=0
    #allocation2 [shape = 'u8[4096]{0}', space=vmem, size = 0x1000, scoped, tag = 'input window, operand 0, single buffered']
    #allocation3 [shape = 's32[1]{0}', space=sflag, size = 0x4, scoped, tag = 'scoped memory for tpu_custom_call.1']
    #allocation4 [shape = 's32[1]{0}', space=sflag, size = 0x4, scoped, tag = 'scoped memory for tpu_custom_call.1']
    #allocation5 [shape = 'u8[524288]{0}', space=vmem, size = 0x80000, scoped, tag = 'input window, operand 1, single buffered']
    #allocation6 [shape = 's32[1]{0}', space=sflag, size = 0x4, scoped, tag = 'scoped memory for tpu_custom_call.1']
    #allocation7 [shape = 'u8[4096]{0}', space=vmem, size = 0x1000, scoped, tag = 'input window, operand 2, single buffered']
    #allocation8 [shape = 'u8[4194304]{0}', space=vmem, size = 0x400000, scoped, tag = 'input window, operand 3, single buffered']
    #allocation9 [shape = 's32[1]{0}', space=sflag, size = 0x4, scoped, tag = 'scoped memory for tpu_custom_call.1']
    #allocation10 [shape = 'u8[4096]{0}', space=vmem, size = 0x1000, scoped, tag = 'input window, operand 4, single buffered']
    #allocation11 [shape = 'u8[524288]{0}', space=vmem, size = 0x80000, scoped, tag = 'input window, operand 5, single buffered']
    #allocation12 [shape = 's32[1]{0}', space=sflag, size = 0x4, scoped, tag = 'scoped memory for tpu_custom_call.1']
    #allocation13 [shape = 'u8[512]{0}', space=vmem, size = 0x400, scoped, tag = 'input window, operand 6, single buffered']
    #allocation14 [shape = 'u8[4096]{0}', space=vmem, size = 0x1000, scoped, tag = 'output window, operand 0, single buffered']
    %12 = vsyncpa [#allocation3], 0
    %13 = vsyncpa [#allocation6], 0
    %14 = vsyncpa [#allocation9], 0
    %15 = vsyncpa [#allocation12], 0
    %16 = vsyncpa [#allocation4], 0
    // Predicated region
    $region2: #{tpu_custom_call.1} parent=1 // pred_check
      _
    $region3: #{tpu_custom_call.1} parent=1 // pred_check_branch
      %18 = sbr.rel (0) target = $region5
    $region4: #{tpu_custom_call.1} parent=1 // pred_region
      %20 = vsyncadd [#allocation3], 0
      %s22 = sshll.u32 %s0, 4
      %s23 = int_to_ptr.hbm [resolvable:$true] %s22
      %s24 = sshll.u32 [#allocation2], 4
      %s25 = int_to_ptr.vmem [resolvable:$true] %s24
      %27 = dma.hbm_to_vmem [thread:$0]  %s23, 128, %s25, [#allocation3]
    $region5: #{tpu_custom_call.1} parent=1 // pred_fallthru
      _
    // Predicated region
    $region6: #{tpu_custom_call.1} parent=1 // pred_check
      _
    $region7: #{tpu_custom_call.1} parent=1 // pred_check_branch
      %29 = sbr.rel (0) target = $region9
    $region8: #{tpu_custom_call.1} parent=1 // pred_region
      %31 = vsyncadd [#allocation6], 0
      %s32 = sshll.u32 %s1, 4
      %s33 = int_to_ptr.hbm [resolvable:$true] %s32
      %s34 = sshll.u32 [#allocation5], 4
      %s35 = int_to_ptr.vmem [resolvable:$true] %s34
      %40 = dma.hbm_to_vmem [thread:$0]  %s33, 16384, %s35, [#allocation6], 1024, 1024, 64
    $region9: #{tpu_custom_call.1} parent=1 // pred_fallthru
      _
    // Predicated region
    $region10: #{tpu_custom_call.1} parent=1 // pred_check
      _
    $region11: #{tpu_custom_call.1} parent=1 // pred_check_branch
      %42 = sbr.rel (0) target = $region13
    $region12: #{tpu_custom_call.1} parent=1 // pred_region
      %44 = vsyncadd [#allocation6], 0
      %s46 = sshll.u32 %s2, 4
      %s47 = int_to_ptr.hbm [resolvable:$true] %s46
      %s48 = sshll.u32 [#allocation7], 4
      %s49 = int_to_ptr.vmem [resolvable:$true] %s48
      %51 = dma.hbm_to_vmem [thread:$0]  %s47, 128, %s49, [#allocation6]
    $region13: #{tpu_custom_call.1} parent=1 // pred_fallthru
      _
    // Predicated region
    $region14: #{tpu_custom_call.1} parent=1 // pred_check
      _
    $region15: #{tpu_custom_call.1} parent=1 // pred_check_branch
      %53 = sbr.rel (0) target = $region17
    $region16: #{tpu_custom_call.1} parent=1 // pred_region
      %55 = vsyncadd [#allocation9], 0
      %s56 = sshll.u32 %s3, 4
      %s57 = int_to_ptr.hbm [resolvable:$true] %s56
      %s58 = sshll.u32 [#allocation8], 4
      %s59 = int_to_ptr.vmem [resolvable:$true] %s58
      %64 = dma.hbm_to_vmem [thread:$0]  %s57, 131072, %s59, [#allocation9], 1024, 1024, 64
    $region17: #{tpu_custom_call.1} parent=1 // pred_fallthru
      _
    // Predicated region
    $region18: #{tpu_custom_call.1} parent=1 // pred_check
      _
    $region19: #{tpu_custom_call.1} parent=1 // pred_check_branch
      %66 = sbr.rel (0) target = $region21
    $region20: #{tpu_custom_call.1} parent=1 // pred_region
      %68 = vsyncadd [#allocation9], 0
      %s70 = sshll.u32 %s4, 4
      %s71 = int_to_ptr.hbm [resolvable:$true] %s70
      %s72 = sshll.u32 [#allocation10], 4
      %s73 = int_to_ptr.vmem [resolvable:$true] %s72
      %75 = dma.hbm_to_vmem [thread:$0]  %s71, 128, %s73, [#allocation9]
    $region21: #{tpu_custom_call.1} parent=1 // pred_fallthru
      _
    // Predicated region
    $region22: #{tpu_custom_call.1} parent=1 // pred_check
      _
    $region23: #{tpu_custom_call.1} parent=1 // pred_check_branch
      %77 = sbr.rel (0) target = $region25
    $region24: #{tpu_custom_call.1} parent=1 // pred_region
      %79 = vsyncadd [#allocation12], 0
      %s80 = sshll.u32 %s5, 4
      %s81 = int_to_ptr.hbm [resolvable:$true] %s80
      %s82 = sshll.u32 [#allocation11], 4
      %s83 = int_to_ptr.vmem [resolvable:$true] %s82
      %88 = dma.hbm_to_vmem [thread:$0]  %s81, 16384, %s83, [#allocation12], 128, 128, 8
    $region25: #{tpu_custom_call.1} parent=1 // pred_fallthru
      _
    // Predicated region
    $region26: #{tpu_custom_call.1} parent=1 // pred_check
      _
    $region27: #{tpu_custom_call.1} parent=1 // pred_check_branch
      %90 = sbr.rel (0) target = $region29
    $region28: #{tpu_custom_call.1} parent=1 // pred_region
      %92 = vsyncadd [#allocation12], 0
      %s94 = sshll.u32 %s6, 4
      %s95 = int_to_ptr.hbm [resolvable:$true] %s94
      %s96 = sshll.u32 [#allocation13], 4
      %s97 = int_to_ptr.vmem [resolvable:$true] %s96
      %99 = dma.hbm_to_vmem [thread:$0]  %s95, 16, %s97, [#allocation12]
    $region29: #{tpu_custom_call.1} parent=1 // pred_fallthru
      _
    // Predicated region
    $region30: #{tpu_custom_call.1} parent=1 // pred_check
      _
    $region31: #{tpu_custom_call.1} parent=1 // pred_check_branch
      %101 = sbr.rel (0) target = $region33
    $region32: #{tpu_custom_call.1} parent=1 // pred_region
      %103 = dma.done [#allocation3], 128
    $region33: #{tpu_custom_call.1} parent=1 // pred_fallthru
      _
    // Predicated region
    $region34: #{tpu_custom_call.1} parent=1 // pred_check
      _
    $region35: #{tpu_custom_call.1} parent=1 // pred_check_branch
      %105 = sbr.rel (0) target = $region37
    $region36: #{tpu_custom_call.1} parent=1 // pred_region
      %107 = dma.done [#allocation6], 16384
    $region37: #{tpu_custom_call.1} parent=1 // pred_fallthru
      _
    // Predicated region
    $region38: #{tpu_custom_call.1} parent=1 // pred_check
      _
    $region39: #{tpu_custom_call.1} parent=1 // pred_check_branch
      %109 = sbr.rel (0) target = $region41
    $region40: #{tpu_custom_call.1} parent=1 // pred_region
      %111 = dma.done [#allocation6], 128
    $region41: #{tpu_custom_call.1} parent=1 // pred_fallthru
      _
    // Predicated region
    $region42: #{tpu_custom_call.1} parent=1 // pred_check
      _
    $region43: #{tpu_custom_call.1} parent=1 // pred_check_branch
      %113 = sbr.rel (0) target = $region45
    $region44: #{tpu_custom_call.1} parent=1 // pred_region
      %115 = dma.done [#allocation9], 131072
    $region45: #{tpu_custom_call.1} parent=1 // pred_fallthru
      _
    // Predicated region
    $region46: #{tpu_custom_call.1} parent=1 // pred_check
      _
    $region47: #{tpu_custom_call.1} parent=1 // pred_check_branch
      %117 = sbr.rel (0) target = $region49
    $region48: #{tpu_custom_call.1} parent=1 // pred_region
      %119 = dma.done [#allocation9], 128
    $region49: #{tpu_custom_call.1} parent=1 // pred_fallthru
      _
    // Predicated region
    $region50: #{tpu_custom_call.1} parent=1 // pred_check
      _
    $region51: #{tpu_custom_call.1} parent=1 // pred_check_branch
      %121 = sbr.rel (0) target = $region53
    $region52: #{tpu_custom_call.1} parent=1 // pred_region
      %123 = dma.done [#allocation12], 16384
    $region53: #{tpu_custom_call.1} parent=1 // pred_fallthru
      _
    // Predicated region
    $region54: #{tpu_custom_call.1} parent=1 // pred_check
      _
    $region55: #{tpu_custom_call.1} parent=1 // pred_check_branch
      %125 = sbr.rel (0) target = $region57
    $region56: #{tpu_custom_call.1} parent=1 // pred_region
      %127 = dma.done [#allocation12], 16
    $region57: #{tpu_custom_call.1} parent=1 // pred_fallthru
      _
    %v128 = vld [vmem:[#allocation2] sm:$0xff]
    %v129 = vld [vmem:[#allocation5] sm:$0xff]
    %v130 = vld [vmem:[#allocation5 + $0x8] sm:$0xff]
    %v131 = vld [vmem:[#allocation5 + $0x10] sm:$0xff]
    %v132 = vld [vmem:[#allocation5 + $0x18] sm:$0xff]
    %v133 = vld [vmem:[#allocation5 + $0x20] sm:$0xff]
    %v134 = vld [vmem:[#allocation5 + $0x28] sm:$0xff]
    %v135 = vld [vmem:[#allocation5 + $0x30] sm:$0xff]
    %v136 = vld [vmem:[#allocation5 + $0x38] sm:$0xff]
    %v137 = vld [vmem:[#allocation5 + $0x40] sm:$0xff]
    %v138 = vld [vmem:[#allocation5 + $0x48] sm:$0xff]
    %v139 = vld [vmem:[#allocation5 + $0x50] sm:$0xff]
    %v140 = vld [vmem:[#allocation5 + $0x58] sm:$0xff]
    %v141 = vld [vmem:[#allocation5 + $0x60] sm:$0xff]
    %v142 = vld [vmem:[#allocation5 + $0x68] sm:$0xff]
    %v143 = vld [vmem:[#allocation5 + $0x70] sm:$0xff]
    %v144 = vld [vmem:[#allocation5 + $0x78] sm:$0xff]
    %v145 = vld [vmem:[#allocation5 + $0x80] sm:$0xff]
    %v146 = vld [vmem:[#allocation5 + $0x88] sm:$0xff]
    %v147 = vld [vmem:[#allocation5 + $0x90] sm:$0xff]
    %v148 = vld [vmem:[#allocation5 + $0x98] sm:$0xff]
    %v149 = vld [vmem:[#allocation5 + $0xa0] sm:$0xff]
    %v150 = vld [vmem:[#allocation5 + $0xa8] sm:$0xff]
    %v151 = vld [vmem:[#allocation5 + $0xb0] sm:$0xff]
    %v152 = vld [vmem:[#allocation5 + $0xb8] sm:$0xff]
    %v153 = vld [vmem:[#allocation5 + $0xc0] sm:$0xff]
    %v154 = vld [vmem:[#allocation5 + $0xc8] sm:$0xff]
    %v155 = vld [vmem:[#allocation5 + $0xd0] sm:$0xff]
    %v156 = vld [vmem:[#allocation5 + $0xd8] sm:$0xff]
    %v157 = vld [vmem:[#allocation5 + $0xe0] sm:$0xff]
    %v158 = vld [vmem:[#allocation5 + $0xe8] sm:$0xff]
    %v159 = vld [vmem:[#allocation5 + $0xf0] sm:$0xff]
    %v160 = vld [vmem:[#allocation5 + $0xf8] sm:$0xff]
    %v161 = vld [vmem:[#allocation5 + $0x100] sm:$0xff]
    %v162 = vld [vmem:[#allocation5 + $0x108] sm:$0xff]
    %v163 = vld [vmem:[#allocation5 + $0x110] sm:$0xff]
    %v164 = vld [vmem:[#allocation5 + $0x118] sm:$0xff]
    %v165 = vld [vmem:[#allocation5 + $0x120] sm:$0xff]
    %v166 = vld [vmem:[#allocation5 + $0x128] sm:$0xff]
    %v167 = vld [vmem:[#allocation5 + $0x130] sm:$0xff]
    %v168 = vld [vmem:[#allocation5 + $0x138] sm:$0xff]
    %v169 = vld [vmem:[#allocation5 + $0x140] sm:$0xff]
    %v170 = vld [vmem:[#allocation5 + $0x148] sm:$0xff]
    %v171 = vld [vmem:[#allocation5 + $0x150] sm:$0xff]
    %v172 = vld [vmem:[#allocation5 + $0x158] sm:$0xff]
    %v173 = vld [vmem:[#allocation5 + $0x160] sm:$0xff]
    %v174 = vld [vmem:[#allocation5 + $0x168] sm:$0xff]
    %v175 = vld [vmem:[#allocation5 + $0x170] sm:$0xff]
    %v176 = vld [vmem:[#allocation5 + $0x178] sm:$0xff]
    %v177 = vld [vmem:[#allocation5 + $0x180] sm:$0xff]
    %v178 = vld [vmem:[#allocation5 + $0x188] sm:$0xff]
    %v179 = vld [vmem:[#allocation5 + $0x190] sm:$0xff]
    %v180 = vld [vmem:[#allocation5 + $0x198] sm:$0xff]
    %v181 = vld [vmem:[#allocation5 + $0x1a0] sm:$0xff]
    %v182 = vld [vmem:[#allocation5 + $0x1a8] sm:$0xff]
    %v183 = vld [vmem:[#allocation5 + $0x1b0] sm:$0xff]
    %v184 = vld [vmem:[#allocation5 + $0x1b8] sm:$0xff]
    %v185 = vld [vmem:[#allocation5 + $0x1c0] sm:$0xff]
    %v186 = vld [vmem:[#allocation5 + $0x1c8] sm:$0xff]
    %v187 = vld [vmem:[#allocation5 + $0x1d0] sm:$0xff]
    %v188 = vld [vmem:[#allocation5 + $0x1d8] sm:$0xff]
    %v189 = vld [vmem:[#allocation5 + $0x1e0] sm:$0xff]
    %v190 = vld [vmem:[#allocation5 + $0x1e8] sm:$0xff]
    %v191 = vld [vmem:[#allocation5 + $0x1f0] sm:$0xff]
    %v192 = vld [vmem:[#allocation5 + $0x1f8] sm:$0xff]
    %v193 = vld [vmem:[#allocation5 + $0x200] sm:$0xff]
    %v194 = vld [vmem:[#allocation5 + $0x208] sm:$0xff]
    %v195 = vld [vmem:[#allocation5 + $0x210] sm:$0xff]
    %v196 = vld [vmem:[#allocation5 + $0x218] sm:$0xff]
    %v197 = vld [vmem:[#allocation5 + $0x220] sm:$0xff]
    %v198 = vld [vmem:[#allocation5 + $0x228] sm:$0xff]
    %v199 = vld [vmem:[#allocation5 + $0x230] sm:$0xff]
    %v200 = vld [vmem:[#allocation5 + $0x238] sm:$0xff]
    %v201 = vld [vmem:[#allocation5 + $0x240] sm:$0xff]
    %v202 = vld [vmem:[#allocation5 + $0x248] sm:$0xff]
    %v203 = vld [vmem:[#allocation5 + $0x250] sm:$0xff]
    %v204 = vld [vmem:[#allocation5 + $0x258] sm:$0xff]
    %v205 = vld [vmem:[#allocation5 + $0x260] sm:$0xff]
    %v206 = vld [vmem:[#allocation5 + $0x268] sm:$0xff]
    %v207 = vld [vmem:[#allocation5 + $0x270] sm:$0xff]
    %v208 = vld [vmem:[#allocation5 + $0x278] sm:$0xff]
    %v209 = vld [vmem:[#allocation5 + $0x280] sm:$0xff]
    %v210 = vld [vmem:[#allocation5 + $0x288] sm:$0xff]
    %v211 = vld [vmem:[#allocation5 + $0x290] sm:$0xff]
    %v212 = vld [vmem:[#allocation5 + $0x298] sm:$0xff]
    %v213 = vld [vmem:[#allocation5 + $0x2a0] sm:$0xff]
    %v214 = vld [vmem:[#allocation5 + $0x2a8] sm:$0xff]
    %v215 = vld [vmem:[#allocation5 + $0x2b0] sm:$0xff]
    %v216 = vld [vmem:[#allocation5 + $0x2b8] sm:$0xff]
    %v217 = vld [vmem:[#allocation5 + $0x2c0] sm:$0xff]
    %v218 = vld [vmem:[#allocation5 + $0x2c8] sm:$0xff]
    %v219 = vld [vmem:[#allocation5 + $0x2d0] sm:$0xff]
    %v220 = vld [vmem:[#allocation5 + $0x2d8] sm:$0xff]
    %v221 = vld [vmem:[#allocation5 + $0x2e0] sm:$0xff]
    %v222 = vld [vmem:[#allocation5 + $0x2e8] sm:$0xff]
    %v223 = vld [vmem:[#allocation5 + $0x2f0] sm:$0xff]
    %v224 = vld [vmem:[#allocation5 + $0x2f8] sm:$0xff]
    %v225 = vld [vmem:[#allocation5 + $0x300] sm:$0xff]
    %v226 = vld [vmem:[#allocation5 + $0x308] sm:$0xff]
    %v227 = vld [vmem:[#allocation5 + $0x310] sm:$0xff]
    %v228 = vld [vmem:[#allocation5 + $0x318] sm:$0xff]
    %v229 = vld [vmem:[#allocation5 + $0x320] sm:$0xff]
    %v230 = vld [vmem:[#allocation5 + $0x328] sm:$0xff]
    %v231 = vld [vmem:[#allocation5 + $0x330] sm:$0xff]
    %v232 = vld [vmem:[#allocation5 + $0x338] sm:$0xff]
    %v233 = vld [vmem:[#allocation5 + $0x340] sm:$0xff]
    %v234 = vld [vmem:[#allocation5 + $0x348] sm:$0xff]
    %v235 = vld [vmem:[#allocation5 + $0x350] sm:$0xff]
    %v236 = vld [vmem:[#allocation5 + $0x358] sm:$0xff]
    %v237 = vld [vmem:[#allocation5 + $0x360] sm:$0xff]
    %v238 = vld [vmem:[#allocation5 + $0x368] sm:$0xff]
    %v239 = vld [vmem:[#allocation5 + $0x370] sm:$0xff]
    %v240 = vld [vmem:[#allocation5 + $0x378] sm:$0xff]
    %v241 = vld [vmem:[#allocation5 + $0x380] sm:$0xff]
    %v242 = vld [vmem:[#allocation5 + $0x388] sm:$0xff]
    %v243 = vld [vmem:[#allocation5 + $0x390] sm:$0xff]
    %v244 = vld [vmem:[#allocation5 + $0x398] sm:$0xff]
    %v245 = vld [vmem:[#allocation5 + $0x3a0] sm:$0xff]
    %v246 = vld [vmem:[#allocation5 + $0x3a8] sm:$0xff]
    %v247 = vld [vmem:[#allocation5 + $0x3b0] sm:$0xff]
    %v248 = vld [vmem:[#allocation5 + $0x3b8] sm:$0xff]
    %v249 = vld [vmem:[#allocation5 + $0x3c0] sm:$0xff]
    %v250 = vld [vmem:[#allocation5 + $0x3c8] sm:$0xff]
    %v251 = vld [vmem:[#allocation5 + $0x3d0] sm:$0xff]
    %v252 = vld [vmem:[#allocation5 + $0x3d8] sm:$0xff]
    %v253 = vld [vmem:[#allocation5 + $0x3e0] sm:$0xff]
    %v254 = vld [vmem:[#allocation5 + $0x3e8] sm:$0xff]
    %v255 = vld [vmem:[#allocation5 + $0x3f0] sm:$0xff]
    %v256 = vld [vmem:[#allocation5 + $0x3f8] sm:$0xff]
    %v257 = vld [vmem:[#allocation7] sm:$0xff]
    %v259 = vperm.slane %v257, 0
    %v260 = vperm.slane %v257, 1
    %v261 = vperm.slane %v257, 2
    %v262 = vperm.slane %v257, 3
    %v263 = vperm.slane %v257, 4
    %v264 = vperm.slane %v257, 5
    %v265 = vperm.slane %v257, 6
    %v266 = vperm.slane %v257, 7
    %275 = vmatpush.msra.mxu0 %v249
    %276 = vmatpush.msra.mxu0 %v241
    %277 = vmatpush.msra.mxu0 %v233
    %278 = vmatpush.msra.mxu0 %v225
    %279 = vmatpush.msra.mxu0 %v217
    %280 = vmatpush.msra.mxu0 %v209
    %281 = vmatpush.msra.mxu0 %v201
    %282 = vmatpush.msra.mxu0 %v193
    %283 = vmatpush.msra.mxu0 %v185
    %284 = vmatpush.msra.mxu0 %v177
    %285 = vmatpush.msra.mxu0 %v169
    %286 = vmatpush.msra.mxu0 %v161
    %287 = vmatpush.msra.mxu0 %v153
    %288 = vmatpush.msra.mxu0 %v145
    %289 = vmatpush.msra.mxu0 %v137
    %290 = vmatpush.msra.mxu0 %v129
    %291 = vmatmul.f32.gmra.mxu0 %v128
    %v292 = vpop.f32.mrf.mxu0
    %v293 = vadd.f32 %v259, %v292
    %294 = vdwg.mxu0
    %295 = vmatpush.msra.mxu0 %v250
    %296 = vmatpush.msra.mxu0 %v242
    %297 = vmatpush.msra.mxu0 %v234
    %298 = vmatpush.msra.mxu0 %v226
    %299 = vmatpush.msra.mxu0 %v218
    %300 = vmatpush.msra.mxu0 %v210
    %301 = vmatpush.msra.mxu0 %v202
    %302 = vmatpush.msra.mxu0 %v194
    %303 = vmatpush.msra.mxu0 %v186
    %304 = vmatpush.msra.mxu0 %v178
    %305 = vmatpush.msra.mxu0 %v170
    %306 = vmatpush.msra.mxu0 %v162
    %307 = vmatpush.msra.mxu0 %v154
    %308 = vmatpush.msra.mxu0 %v146
    %309 = vmatpush.msra.mxu0 %v138
    %310 = vmatpush.msra.mxu0 %v130
    %311 = vmatmul.f32.gmra.mxu0 %v128
    %v312 = vpop.f32.mrf.mxu0
    %v313 = vadd.f32 %v260, %v312
    %314 = vdwg.mxu0
    %315 = vmatpush.msra.mxu0 %v251
    %316 = vmatpush.msra.mxu0 %v243
    %317 = vmatpush.msra.mxu0 %v235
    %318 = vmatpush.msra.mxu0 %v227
    %319 = vmatpush.msra.mxu0 %v219
    %320 = vmatpush.msra.mxu0 %v211
    %321 = vmatpush.msra.mxu0 %v203
    %322 = vmatpush.msra.mxu0 %v195
    %323 = vmatpush.msra.mxu0 %v187
    %324 = vmatpush.msra.mxu0 %v179
    %325 = vmatpush.msra.mxu0 %v171
    %326 = vmatpush.msra.mxu0 %v163
    %327 = vmatpush.msra.mxu0 %v155
    %328 = vmatpush.msra.mxu0 %v147
    %329 = vmatpush.msra.mxu0 %v139
    %330 = vmatpush.msra.mxu0 %v131
    %331 = vmatmul.f32.gmra.mxu0 %v128
    %v332 = vpop.f32.mrf.mxu0
    %v333 = vadd.f32 %v261, %v332
    %334 = vdwg.mxu0
    %335 = vmatpush.msra.mxu0 %v252
    %336 = vmatpush.msra.mxu0 %v244
    %337 = vmatpush.msra.mxu0 %v236
    %338 = vmatpush.msra.mxu0 %v228
    %339 = vmatpush.msra.mxu0 %v220
    %340 = vmatpush.msra.mxu0 %v212
    %341 = vmatpush.msra.mxu0 %v204
    %342 = vmatpush.msra.mxu0 %v196
    %343 = vmatpush.msra.mxu0 %v188
    %344 = vmatpush.msra.mxu0 %v180
    %345 = vmatpush.msra.mxu0 %v172
    %346 = vmatpush.msra.mxu0 %v164
    %347 = vmatpush.msra.mxu0 %v156
    %348 = vmatpush.msra.mxu0 %v148
    %349 = vmatpush.msra.mxu0 %v140
    %350 = vmatpush.msra.mxu0 %v132
    %351 = vmatmul.f32.gmra.mxu0 %v128
    %v352 = vpop.f32.mrf.mxu0
    %v353 = vadd.f32 %v262, %v352
    %354 = vdwg.mxu0
    %355 = vmatpush.msra.mxu0 %v253
    %356 = vmatpush.msra.mxu0 %v245
    %357 = vmatpush.msra.mxu0 %v237
    %358 = vmatpush.msra.mxu0 %v229
    %359 = vmatpush.msra.mxu0 %v221
    %360 = vmatpush.msra.mxu0 %v213
    %361 = vmatpush.msra.mxu0 %v205
    %362 = vmatpush.msra.mxu0 %v197
    %363 = vmatpush.msra.mxu0 %v189
    %364 = vmatpush.msra.mxu0 %v181
    %365 = vmatpush.msra.mxu0 %v173
    %366 = vmatpush.msra.mxu0 %v165
    %367 = vmatpush.msra.mxu0 %v157
    %368 = vmatpush.msra.mxu0 %v149
    %369 = vmatpush.msra.mxu0 %v141
    %370 = vmatpush.msra.mxu0 %v133
    %371 = vmatmul.f32.gmra.mxu0 %v128
    %v372 = vpop.f32.mrf.mxu0
    %v373 = vadd.f32 %v263, %v372
    %374 = vdwg.mxu0
    %375 = vmatpush.msra.mxu0 %v254
    %376 = vmatpush.msra.mxu0 %v246
    %377 = vmatpush.msra.mxu0 %v238
    %378 = vmatpush.msra.mxu0 %v230
    %379 = vmatpush.msra.mxu0 %v222
    %380 = vmatpush.msra.mxu0 %v214
    %381 = vmatpush.msra.mxu0 %v206
    %382 = vmatpush.msra.mxu0 %v198
    %383 = vmatpush.msra.mxu0 %v190
    %384 = vmatpush.msra.mxu0 %v182
    %385 = vmatpush.msra.mxu0 %v174
    %386 = vmatpush.msra.mxu0 %v166
    %387 = vmatpush.msra.mxu0 %v158
    %388 = vmatpush.msra.mxu0 %v150
    %389 = vmatpush.msra.mxu0 %v142
    %390 = vmatpush.msra.mxu0 %v134
    %391 = vmatmul.f32.gmra.mxu0 %v128
    %v392 = vpop.f32.mrf.mxu0
    %v393 = vadd.f32 %v264, %v392
    %394 = vdwg.mxu0
    %395 = vmatpush.msra.mxu0 %v255
    %396 = vmatpush.msra.mxu0 %v247
    %397 = vmatpush.msra.mxu0 %v239
    %398 = vmatpush.msra.mxu0 %v231
    %399 = vmatpush.msra.mxu0 %v223
    %400 = vmatpush.msra.mxu0 %v215
    %401 = vmatpush.msra.mxu0 %v207
    %402 = vmatpush.msra.mxu0 %v199
    %403 = vmatpush.msra.mxu0 %v191
    %404 = vmatpush.msra.mxu0 %v183
    %405 = vmatpush.msra.mxu0 %v175
    %406 = vmatpush.msra.mxu0 %v167
    %407 = vmatpush.msra.mxu0 %v159
    %408 = vmatpush.msra.mxu0 %v151
    %409 = vmatpush.msra.mxu0 %v143
    %410 = vmatpush.msra.mxu0 %v135
    %411 = vmatmul.f32.gmra.mxu0 %v128
    %v412 = vpop.f32.mrf.mxu0
    %v413 = vadd.f32 %v265, %v412
    %414 = vdwg.mxu0
    %415 = vmatpush.msra.mxu0 %v256
    %416 = vmatpush.msra.mxu0 %v248
    %417 = vmatpush.msra.mxu0 %v240
    %418 = vmatpush.msra.mxu0 %v232
    %419 = vmatpush.msra.mxu0 %v224
    %420 = vmatpush.msra.mxu0 %v216
    %421 = vmatpush.msra.mxu0 %v208
    %422 = vmatpush.msra.mxu0 %v200
    %423 = vmatpush.msra.mxu0 %v192
    %424 = vmatpush.msra.mxu0 %v184
    %425 = vmatpush.msra.mxu0 %v176
    %426 = vmatpush.msra.mxu0 %v168
    %427 = vmatpush.msra.mxu0 %v160
    %428 = vmatpush.msra.mxu0 %v152
    %429 = vmatpush.msra.mxu0 %v144
    %430 = vmatpush.msra.mxu0 %v136
    %431 = vmatmul.f32.gmra.mxu0 %v128
    %v432 = vpop.f32.mrf.mxu0
    %v433 = vadd.f32 %v266, %v432
    %434 = vdwg.mxu0
    %v435 = vmax.f32 %v293, 0.0
    %v436 = vmax.f32 %v313, 0.0
    %v437 = vmax.f32 %v333, 0.0
    %v438 = vmax.f32 %v353, 0.0
    %v439 = vmax.f32 %v373, 0.0
    %v440 = vmax.f32 %v393, 0.0
    %v441 = vmax.f32 %v413, 0.0
    %v442 = vmax.f32 %v433, 0.0
    %v443 = vld [vmem:[#allocation8] sm:$0xff]
    %v444 = vld [vmem:[#allocation8 + $0x8] sm:$0xff]
    %v445 = vld [vmem:[#allocation8 + $0x10] sm:$0xff]
    %v446 = vld [vmem:[#allocation8 + $0x18] sm:$0xff]
    %v447 = vld [vmem:[#allocation8 + $0x20] sm:$0xff]
    %v448 = vld [vmem:[#allocation8 + $0x28] sm:$0xff]
    %v449 = vld [vmem:[#allocation8 + $0x30] sm:$0xff]
    %v450 = vld [vmem:[#allocation8 + $0x38] sm:$0xff]
    %v451 = vld [vmem:[#allocation8 + $0x40] sm:$0xff]
    %v452 = vld [vmem:[#allocation8 + $0x48] sm:$0xff]
    %v453 = vld [vmem:[#allocation8 + $0x50] sm:$0xff]
    %v454 = vld [vmem:[#allocation8 + $0x58] sm:$0xff]
    %v455 = vld [vmem:[#allocation8 + $0x60] sm:$0xff]
    %v456 = vld [vmem:[#allocation8 + $0x68] sm:$0xff]
    %v457 = vld [vmem:[#allocation8 + $0x70] sm:$0xff]
    %v458 = vld [vmem:[#allocation8 + $0x78] sm:$0xff]
    %v459 = vld [vmem:[#allocation8 + $0x80] sm:$0xff]
    %v460 = vld [vmem:[#allocation8 + $0x88] sm:$0xff]
    %v461 = vld [vmem:[#allocation8 + $0x90] sm:$0xff]
    %v462 = vld [vmem:[#allocation8 + $0x98] sm:$0xff]
    %v463 = vld [vmem:[#allocation8 + $0xa0] sm:$0xff]
    %v464 = vld [vmem:[#allocation8 + $0xa8] sm:$0xff]
    %v465 = vld [vmem:[#allocation8 + $0xb0] sm:$0xff]
    %v466 = vld [vmem:[#allocation8 + $0xb8] sm:$0xff]
    %v467 = vld [vmem:[#allocation8 + $0xc0] sm:$0xff]
    %v468 = vld [vmem:[#allocation8 + $0xc8] sm:$0xff]
    %v469 = vld [vmem:[#allocation8 + $0xd0] sm:$0xff]
    %v470 = vld [vmem:[#allocation8 + $0xd8] sm:$0xff]
    %v471 = vld [vmem:[#allocation8 + $0xe0] sm:$0xff]
    %v472 = vld [vmem:[#allocation8 + $0xe8] sm:$0xff]
    %v473 = vld [vmem:[#allocation8 + $0xf0] sm:$0xff]
    %v474 = vld [vmem:[#allocation8 + $0xf8] sm:$0xff]
    %v475 = vld [vmem:[#allocation8 + $0x100] sm:$0xff]
    %v476 = vld [vmem:[#allocation8 + $0x108] sm:$0xff]
    %v477 = vld [vmem:[#allocation8 + $0x110] sm:$0xff]
    %v478 = vld [vmem:[#allocation8 + $0x118] sm:$0xff]
    %v479 = vld [vmem:[#allocation8 + $0x120] sm:$0xff]
    %v480 = vld [vmem:[#allocation8 + $0x128] sm:$0xff]
    %v481 = vld [vmem:[#allocation8 + $0x130] sm:$0xff]
    %v482 = vld [vmem:[#allocation8 + $0x138] sm:$0xff]
    %v483 = vld [vmem:[#allocation8 + $0x140] sm:$0xff]
    %v484 = vld [vmem:[#allocation8 + $0x148] sm:$0xff]
    %v485 = vld [vmem:[#allocation8 + $0x150] sm:$0xff]
    %v486 = vld [vmem:[#allocation8 + $0x158] sm:$0xff]
    %v487 = vld [vmem:[#allocation8 + $0x160] sm:$0xff]
    %v488 = vld [vmem:[#allocation8 + $0x168] sm:$0xff]
    %v489 = vld [vmem:[#allocation8 + $0x170] sm:$0xff]
    %v490 = vld [vmem:[#allocation8 + $0x178] sm:$0xff]
    %v491 = vld [vmem:[#allocation8 + $0x180] sm:$0xff]
    %v492 = vld [vmem:[#allocation8 + $0x188] sm:$0xff]
    %v493 = vld [vmem:[#allocation8 + $0x190] sm:$0xff]
    %v494 = vld [vmem:[#allocation8 + $0x198] sm:$0xff]
    %v495 = vld [vmem:[#allocation8 + $0x1a0] sm:$0xff]
    %v496 = vld [vmem:[#allocation8 + $0x1a8] sm:$0xff]
    %v497 = vld [vmem:[#allocation8 + $0x1b0] sm:$0xff]
    %v498 = vld [vmem:[#allocation8 + $0x1b8] sm:$0xff]
    %v499 = vld [vmem:[#allocation8 + $0x1c0] sm:$0xff]
    %v500 = vld [vmem:[#allocation8 + $0x1c8] sm:$0xff]
    %v501 = vld [vmem:[#allocation8 + $0x1d0] sm:$0xff]
    %v502 = vld [vmem:[#allocation8 + $0x1d8] sm:$0xff]
    %v503 = vld [vmem:[#allocation8 + $0x1e0] sm:$0xff]
    %v504 = vld [vmem:[#allocation8 + $0x1e8] sm:$0xff]
    %v505 = vld [vmem:[#allocation8 + $0x1f0] sm:$0xff]
    %v506 = vld [vmem:[#allocation8 + $0x1f8] sm:$0xff]
    %v507 = vld [vmem:[#allocation8 + $0x200] sm:$0xff]
    %v508 = vld [vmem:[#allocation8 + $0x208] sm:$0xff]
    %v509 = vld [vmem:[#allocation8 + $0x210] sm:$0xff]
    %v510 = vld [vmem:[#allocation8 + $0x218] sm:$0xff]
    %v511 = vld [vmem:[#allocation8 + $0x220] sm:$0xff]
    %v512 = vld [vmem:[#allocation8 + $0x228] sm:$0xff]
    %v513 = vld [vmem:[#allocation8 + $0x230] sm:$0xff]
    %v514 = vld [vmem:[#allocation8 + $0x238] sm:$0xff]
    %v515 = vld [vmem:[#allocation8 + $0x240] sm:$0xff]
    %v516 = vld [vmem:[#allocation8 + $0x248] sm:$0xff]
    %v517 = vld [vmem:[#allocation8 + $0x250] sm:$0xff]
    %v518 = vld [vmem:[#allocation8 + $0x258] sm:$0xff]
    %v519 = vld [vmem:[#allocation8 + $0x260] sm:$0xff]
    %v520 = vld [vmem:[#allocation8 + $0x268] sm:$0xff]
    %v521 = vld [vmem:[#allocation8 + $0x270] sm:$0xff]
    %v522 = vld [vmem:[#allocation8 + $0x278] sm:$0xff]
    %v523 = vld [vmem:[#allocation8 + $0x280] sm:$0xff]
    %v524 = vld [vmem:[#allocation8 + $0x288] sm:$0xff]
    %v525 = vld [vmem:[#allocation8 + $0x290] sm:$0xff]
    %v526 = vld [vmem:[#allocation8 + $0x298] sm:$0xff]
    %v527 = vld [vmem:[#allocation8 + $0x2a0] sm:$0xff]
    %v528 = vld [vmem:[#allocation8 + $0x2a8] sm:$0xff]
    %v529 = vld [vmem:[#allocation8 + $0x2b0] sm:$0xff]
    %v530 = vld [vmem:[#allocation8 + $0x2b8] sm:$0xff]
    %v531 = vld [vmem:[#allocation8 + $0x2c0] sm:$0xff]
    %v532 = vld [vmem:[#allocation8 + $0x2c8] sm:$0xff]
    %v533 = vld [vmem:[#allocation8 + $0x2d0] sm:$0xff]
    %v534 = vld [vmem:[#allocation8 + $0x2d8] sm:$0xff]
    %v535 = vld [vmem:[#allocation8 + $0x2e0] sm:$0xff]
    %v536 = vld [vmem:[#allocation8 + $0x2e8] sm:$0xff]
    %v537 = vld [vmem:[#allocation8 + $0x2f0] sm:$0xff]
    %v538 = vld [vmem:[#allocation8 + $0x2f8] sm:$0xff]
    %v539 = vld [vmem:[#allocation8 + $0x300] sm:$0xff]
    %v540 = vld [vmem:[#allocation8 + $0x308] sm:$0xff]
    %v541 = vld [vmem:[#allocation8 + $0x310] sm:$0xff]
    %v542 = vld [vmem:[#allocation8 + $0x318] sm:$0xff]
    %v543 = vld [vmem:[#allocation8 + $0x320] sm:$0xff]
    %v544 = vld [vmem:[#allocation8 + $0x328] sm:$0xff]
    %v545 = vld [vmem:[#allocation8 + $0x330] sm:$0xff]
    %v546 = vld [vmem:[#allocation8 + $0x338] sm:$0xff]
    %v547 = vld [vmem:[#allocation8 + $0x340] sm:$0xff]
    %v548 = vld [vmem:[#allocation8 + $0x348] sm:$0xff]
    %v549 = vld [vmem:[#allocation8 + $0x350] sm:$0xff]
    %v550 = vld [vmem:[#allocation8 + $0x358] sm:$0xff]
    %v551 = vld [vmem:[#allocation8 + $0x360] sm:$0xff]
    %v552 = vld [vmem:[#allocation8 + $0x368] sm:$0xff]
    %v553 = vld [vmem:[#allocation8 + $0x370] sm:$0xff]
    %v554 = vld [vmem:[#allocation8 + $0x378] sm:$0xff]
    %v555 = vld [vmem:[#allocation8 + $0x380] sm:$0xff]
    %v556 = vld [vmem:[#allocation8 + $0x388] sm:$0xff]
    %v557 = vld [vmem:[#allocation8 + $0x390] sm:$0xff]
    %v558 = vld [vmem:[#allocation8 + $0x398] sm:$0xff]
    %v559 = vld [vmem:[#allocation8 + $0x3a0] sm:$0xff]
    %v560 = vld [vmem:[#allocation8 + $0x3a8] sm:$0xff]
    %v561 = vld [vmem:[#allocation8 + $0x3b0] sm:$0xff]
    %v562 = vld [vmem:[#allocation8 + $0x3b8] sm:$0xff]
    %v563 = vld [vmem:[#allocation8 + $0x3c0] sm:$0xff]
    %v564 = vld [vmem:[#allocation8 + $0x3c8] sm:$0xff]
    %v565 = vld [vmem:[#allocation8 + $0x3d0] sm:$0xff]
    %v566 = vld [vmem:[#allocation8 + $0x3d8] sm:$0xff]
    %v567 = vld [vmem:[#allocation8 + $0x3e0] sm:$0xff]
    %v568 = vld [vmem:[#allocation8 + $0x3e8] sm:$0xff]
    %v569 = vld [vmem:[#allocation8 + $0x3f0] sm:$0xff]
    %v570 = vld [vmem:[#allocation8 + $0x3f8] sm:$0xff]
    %v571 = vld [vmem:[#allocation8 + $0x400] sm:$0xff]
    %v572 = vld [vmem:[#allocation8 + $0x408] sm:$0xff]
    %v573 = vld [vmem:[#allocation8 + $0x410] sm:$0xff]
    %v574 = vld [vmem:[#allocation8 + $0x418] sm:$0xff]
    %v575 = vld [vmem:[#allocation8 + $0x420] sm:$0xff]
    %v576 = vld [vmem:[#allocation8 + $0x428] sm:$0xff]
    %v577 = vld [vmem:[#allocation8 + $0x430] sm:$0xff]
    %v578 = vld [vmem:[#allocation8 + $0x438] sm:$0xff]
    %v579 = vld [vmem:[#allocation8 + $0x440] sm:$0xff]
    %v580 = vld [vmem:[#allocation8 + $0x448] sm:$0xff]
    %v581 = vld [vmem:[#allocation8 + $0x450] sm:$0xff]
    %v582 = vld [vmem:[#allocation8 + $0x458] sm:$0xff]
    %v583 = vld [vmem:[#allocation8 + $0x460] sm:$0xff]
    %v584 = vld [vmem:[#allocation8 + $0x468] sm:$0xff]
    %v585 = vld [vmem:[#allocation8 + $0x470] sm:$0xff]
    %v586 = vld [vmem:[#allocation8 + $0x478] sm:$0xff]
    %v587 = vld [vmem:[#allocation8 + $0x480] sm:$0xff]
    %v588 = vld [vmem:[#allocation8 + $0x488] sm:$0xff]
    %v589 = vld [vmem:[#allocation8 + $0x490] sm:$0xff]
    %v590 = vld [vmem:[#allocation8 + $0x498] sm:$0xff]
    %v591 = vld [vmem:[#allocation8 + $0x4a0] sm:$0xff]
    %v592 = vld [vmem:[#allocation8 + $0x4a8] sm:$0xff]
    %v593 = vld [vmem:[#allocation8 + $0x4b0] sm:$0xff]
    %v594 = vld [vmem:[#allocation8 + $0x4b8] sm:$0xff]
    %v595 = vld [vmem:[#allocation8 + $0x4c0] sm:$0xff]
    %v596 = vld [vmem:[#allocation8 + $0x4c8] sm:$0xff]
    %v597 = vld [vmem:[#allocation8 + $0x4d0] sm:$0xff]
    %v598 = vld [vmem:[#allocation8 + $0x4d8] sm:$0xff]
    %v599 = vld [vmem:[#allocation8 + $0x4e0] sm:$0xff]
    %v600 = vld [vmem:[#allocation8 + $0x4e8] sm:$0xff]
    %v601 = vld [vmem:[#allocation8 + $0x4f0] sm:$0xff]
    %v602 = vld [vmem:[#allocation8 + $0x4f8] sm:$0xff]
    %v603 = vld [vmem:[#allocation8 + $0x500] sm:$0xff]
    %v604 = vld [vmem:[#allocation8 + $0x508] sm:$0xff]
    %v605 = vld [vmem:[#allocation8 + $0x510] sm:$0xff]
    %v606 = vld [vmem:[#allocation8 + $0x518] sm:$0xff]
    %v607 = vld [vmem:[#allocation8 + $0x520] sm:$0xff]
    %v608 = vld [vmem:[#allocation8 + $0x528] sm:$0xff]
    %v609 = vld [vmem:[#allocation8 + $0x530] sm:$0xff]
    %v610 = vld [vmem:[#allocation8 + $0x538] sm:$0xff]
    %v611 = vld [vmem:[#allocation8 + $0x540] sm:$0xff]
    %v612 = vld [vmem:[#allocation8 + $0x548] sm:$0xff]
    %v613 = vld [vmem:[#allocation8 + $0x550] sm:$0xff]
    %v614 = vld [vmem:[#allocation8 + $0x558] sm:$0xff]
    %v615 = vld [vmem:[#allocation8 + $0x560] sm:$0xff]
    %v616 = vld [vmem:[#allocation8 + $0x568] sm:$0xff]
    %v617 = vld [vmem:[#allocation8 + $0x570] sm:$0xff]
    %v618 = vld [vmem:[#allocation8 + $0x578] sm:$0xff]
    %v619 = vld [vmem:[#allocation8 + $0x580] sm:$0xff]
    %v620 = vld [vmem:[#allocation8 + $0x588] sm:$0xff]
    %v621 = vld [vmem:[#allocation8 + $0x590] sm:$0xff]
    %v622 = vld [vmem:[#allocation8 + $0x598] sm:$0xff]
    %v623 = vld [vmem:[#allocation8 + $0x5a0] sm:$0xff]
    %v624 = vld [vmem:[#allocation8 + $0x5a8] sm:$0xff]
    %v625 = vld [vmem:[#allocation8 + $0x5b0] sm:$0xff]
    %v626 = vld [vmem:[#allocation8 + $0x5b8] sm:$0xff]
    %v627 = vld [vmem:[#allocation8 + $0x5c0] sm:$0xff]
    %v628 = vld [vmem:[#allocation8 + $0x5c8] sm:$0xff]
    %v629 = vld [vmem:[#allocation8 + $0x5d0] sm:$0xff]
    %v630 = vld [vmem:[#allocation8 + $0x5d8] sm:$0xff]
    %v631 = vld [vmem:[#allocation8 + $0x5e0] sm:$0xff]
    %v632 = vld [vmem:[#allocation8 + $0x5e8] sm:$0xff]
    %v633 = vld [vmem:[#allocation8 + $0x5f0] sm:$0xff]
    %v634 = vld [vmem:[#allocation8 + $0x5f8] sm:$0xff]
    %v635 = vld [vmem:[#allocation8 + $0x600] sm:$0xff]
    %v636 = vld [vmem:[#allocation8 + $0x608] sm:$0xff]
    %v637 = vld [vmem:[#allocation8 + $0x610] sm:$0xff]
    %v638 = vld [vmem:[#allocation8 + $0x618] sm:$0xff]
    %v639 = vld [vmem:[#allocation8 + $0x620] sm:$0xff]
    %v640 = vld [vmem:[#allocation8 + $0x628] sm:$0xff]
    %v641 = vld [vmem:[#allocation8 + $0x630] sm:$0xff]
    %v642 = vld [vmem:[#allocation8 + $0x638] sm:$0xff]
    %v643 = vld [vmem:[#allocation8 + $0x640] sm:$0xff]
    %v644 = vld [vmem:[#allocation8 + $0x648] sm:$0xff]
    %v645 = vld [vmem:[#allocation8 + $0x650] sm:$0xff]
    %v646 = vld [vmem:[#allocation8 + $0x658] sm:$0xff]
    %v647 = vld [vmem:[#allocation8 + $0x660] sm:$0xff]
    %v648 = vld [vmem:[#allocation8 + $0x668] sm:$0xff]
    %v649 = vld [vmem:[#allocation8 + $0x670] sm:$0xff]
    %v650 = vld [vmem:[#allocation8 + $0x678] sm:$0xff]
    %v651 = vld [vmem:[#allocation8 + $0x680] sm:$0xff]
    %v652 = vld [vmem:[#allocation8 + $0x688] sm:$0xff]
    %v653 = vld [vmem:[#allocation8 + $0x690] sm:$0xff]
    %v654 = vld [vmem:[#allocation8 + $0x698] sm:$0xff]
    %v655 = vld [vmem:[#allocation8 + $0x6a0] sm:$0xff]
    %v656 = vld [vmem:[#allocation8 + $0x6a8] sm:$0xff]
    %v657 = vld [vmem:[#allocation8 + $0x6b0] sm:$0xff]
    %v658 = vld [vmem:[#allocation8 + $0x6b8] sm:$0xff]
    %v659 = vld [vmem:[#allocation8 + $0x6c0] sm:$0xff]
    %v660 = vld [vmem:[#allocation8 + $0x6c8] sm:$0xff]
    %v661 = vld [vmem:[#allocation8 + $0x6d0] sm:$0xff]
    %v662 = vld [vmem:[#allocation8 + $0x6d8] sm:$0xff]
    %v663 = vld [vmem:[#allocation8 + $0x6e0] sm:$0xff]
    %v664 = vld [vmem:[#allocation8 + $0x6e8] sm:$0xff]
    %v665 = vld [vmem:[#allocation8 + $0x6f0] sm:$0xff]
    %v666 = vld [vmem:[#allocation8 + $0x6f8] sm:$0xff]
    %v667 = vld [vmem:[#allocation8 + $0x700] sm:$0xff]
    %v668 = vld [vmem:[#allocation8 + $0x708] sm:$0xff]
    %v669 = vld [vmem:[#allocation8 + $0x710] sm:$0xff]
    %v670 = vld [vmem:[#allocation8 + $0x718] sm:$0xff]
    %v671 = vld [vmem:[#allocation8 + $0x720] sm:$0xff]
    %v672 = vld [vmem:[#allocation8 + $0x728] sm:$0xff]
    %v673 = vld [vmem:[#allocation8 + $0x730] sm:$0xff]
    %v674 = vld [vmem:[#allocation8 + $0x738] sm:$0xff]
    %v675 = vld [vmem:[#allocation8 + $0x740] sm:$0xff]
    %v676 = vld [vmem:[#allocation8 + $0x748] sm:$0xff]
    %v677 = vld [vmem:[#allocation8 + $0x750] sm:$0xff]
    %v678 = vld [vmem:[#allocation8 + $0x758] sm:$0xff]
    %v679 = vld [vmem:[#allocation8 + $0x760] sm:$0xff]
    %v680 = vld [vmem:[#allocation8 + $0x768] sm:$0xff]
    %v681 = vld [vmem:[#allocation8 + $0x770] sm:$0xff]
    %v682 = vld [vmem:[#allocation8 + $0x778] sm:$0xff]
    %v683 = vld [vmem:[#allocation8 + $0x780] sm:$0xff]
    %v684 = vld [vmem:[#allocation8 + $0x788] sm:$0xff]
    %v685 = vld [vmem:[#allocation8 + $0x790] sm:$0xff]
    %v686 = vld [vmem:[#allocation8 + $0x798] sm:$0xff]
    %v687 = vld [vmem:[#allocation8 + $0x7a0] sm:$0xff]
    %v688 = vld [vmem:[#allocation8 + $0x7a8] sm:$0xff]
    %v689 = vld [vmem:[#allocation8 + $0x7b0] sm:$0xff]
    %v690 = vld [vmem:[#allocation8 + $0x7b8] sm:$0xff]
    %v691 = vld [vmem:[#allocation8 + $0x7c0] sm:$0xff]
    %v692 = vld [vmem:[#allocation8 + $0x7c8] sm:$0xff]
    %v693 = vld [vmem:[#allocation8 + $0x7d0] sm:$0xff]
    %v694 = vld [vmem:[#allocation8 + $0x7d8] sm:$0xff]
    %v695 = vld [vmem:[#allocation8 + $0x7e0] sm:$0xff]
    %v696 = vld [vmem:[#allocation8 + $0x7e8] sm:$0xff]
    %v697 = vld [vmem:[#allocation8 + $0x7f0] sm:$0xff]
    %v698 = vld [vmem:[#allocation8 + $0x7f8] sm:$0xff]
    %v699 = vld [vmem:[#allocation8 + $0x800] sm:$0xff]
    %v700 = vld [vmem:[#allocation8 + $0x808] sm:$0xff]
    %v701 = vld [vmem:[#allocation8 + $0x810] sm:$0xff]
    %v702 = vld [vmem:[#allocation8 + $0x818] sm:$0xff]
    %v703 = vld [vmem:[#allocation8 + $0x820] sm:$0xff]
    %v704 = vld [vmem:[#allocation8 + $0x828] sm:$0xff]
    %v705 = vld [vmem:[#allocation8 + $0x830] sm:$0xff]
    %v706 = vld [vmem:[#allocation8 + $0x838] sm:$0xff]
    %v707 = vld [vmem:[#allocation8 + $0x840] sm:$0xff]
    %v708 = vld [vmem:[#allocation8 + $0x848] sm:$0xff]
    %v709 = vld [vmem:[#allocation8 + $0x850] sm:$0xff]
    %v710 = vld [vmem:[#allocation8 + $0x858] sm:$0xff]
    %v711 = vld [vmem:[#allocation8 + $0x860] sm:$0xff]
    %v712 = vld [vmem:[#allocation8 + $0x868] sm:$0xff]
    %v713 = vld [vmem:[#allocation8 + $0x870] sm:$0xff]
    %v714 = vld [vmem:[#allocation8 + $0x878] sm:$0xff]
    %v715 = vld [vmem:[#allocation8 + $0x880] sm:$0xff]
    %v716 = vld [vmem:[#allocation8 + $0x888] sm:$0xff]
    %v717 = vld [vmem:[#allocation8 + $0x890] sm:$0xff]
    %v718 = vld [vmem:[#allocation8 + $0x898] sm:$0xff]
    %v719 = vld [vmem:[#allocation8 + $0x8a0] sm:$0xff]
    %v720 = vld [vmem:[#allocation8 + $0x8a8] sm:$0xff]
    %v721 = vld [vmem:[#allocation8 + $0x8b0] sm:$0xff]
    %v722 = vld [vmem:[#allocation8 + $0x8b8] sm:$0xff]
    %v723 = vld [vmem:[#allocation8 + $0x8c0] sm:$0xff]
    %v724 = vld [vmem:[#allocation8 + $0x8c8] sm:$0xff]
    %v725 = vld [vmem:[#allocation8 + $0x8d0] sm:$0xff]
    %v726 = vld [vmem:[#allocation8 + $0x8d8] sm:$0xff]
    %v727 = vld [vmem:[#allocation8 + $0x8e0] sm:$0xff]
    %v728 = vld [vmem:[#allocation8 + $0x8e8] sm:$0xff]
    %v729 = vld [vmem:[#allocation8 + $0x8f0] sm:$0xff]
    %v730 = vld [vmem:[#allocation8 + $0x8f8] sm:$0xff]
    %v731 = vld [vmem:[#allocation8 + $0x900] sm:$0xff]
    %v732 = vld [vmem:[#allocation8 + $0x908] sm:$0xff]
    %v733 = vld [vmem:[#allocation8 + $0x910] sm:$0xff]
    %v734 = vld [vmem:[#allocation8 + $0x918] sm:$0xff]
    %v735 = vld [vmem:[#allocation8 + $0x920] sm:$0xff]
    %v736 = vld [vmem:[#allocation8 + $0x928] sm:$0xff]
    %v737 = vld [vmem:[#allocation8 + $0x930] sm:$0xff]
    %v738 = vld [vmem:[#allocation8 + $0x938] sm:$0xff]
    %v739 = vld [vmem:[#allocation8 + $0x940] sm:$0xff]
    %v740 = vld [vmem:[#allocation8 + $0x948] sm:$0xff]
    %v741 = vld [vmem:[#allocation8 + $0x950] sm:$0xff]
    %v742 = vld [vmem:[#allocation8 + $0x958] sm:$0xff]
    %v743 = vld [vmem:[#allocation8 + $0x960] sm:$0xff]
    %v744 = vld [vmem:[#allocation8 + $0x968] sm:$0xff]
    %v745 = vld [vmem:[#allocation8 + $0x970] sm:$0xff]
    %v746 = vld [vmem:[#allocation8 + $0x978] sm:$0xff]
    %v747 = vld [vmem:[#allocation8 + $0x980] sm:$0xff]
    %v748 = vld [vmem:[#allocation8 + $0x988] sm:$0xff]
    %v749 = vld [vmem:[#allocation8 + $0x990] sm:$0xff]
    %v750 = vld [vmem:[#allocation8 + $0x998] sm:$0xff]
    %v751 = vld [vmem:[#allocation8 + $0x9a0] sm:$0xff]
    %v752 = vld [vmem:[#allocation8 + $0x9a8] sm:$0xff]
    %v753 = vld [vmem:[#allocation8 + $0x9b0] sm:$0xff]
    %v754 = vld [vmem:[#allocation8 + $0x9b8] sm:$0xff]
    %v755 = vld [vmem:[#allocation8 + $0x9c0] sm:$0xff]
    %v756 = vld [vmem:[#allocation8 + $0x9c8] sm:$0xff]
    %v757 = vld [vmem:[#allocation8 + $0x9d0] sm:$0xff]
    %v758 = vld [vmem:[#allocation8 + $0x9d8] sm:$0xff]
    %v759 = vld [vmem:[#allocation8 + $0x9e0] sm:$0xff]
    %v760 = vld [vmem:[#allocation8 + $0x9e8] sm:$0xff]
    %v761 = vld [vmem:[#allocation8 + $0x9f0] sm:$0xff]
    %v762 = vld [vmem:[#allocation8 + $0x9f8] sm:$0xff]
    %v763 = vld [vmem:[#allocation8 + $0xa00] sm:$0xff]
    %v764 = vld [vmem:[#allocation8 + $0xa08] sm:$0xff]
    %v765 = vld [vmem:[#allocation8 + $0xa10] sm:$0xff]
    %v766 = vld [vmem:[#allocation8 + $0xa18] sm:$0xff]
    %v767 = vld [vmem:[#allocation8 + $0xa20] sm:$0xff]
    %v768 = vld [vmem:[#allocation8 + $0xa28] sm:$0xff]
    %v769 = vld [vmem:[#allocation8 + $0xa30] sm:$0xff]
    %v770 = vld [vmem:[#allocation8 + $0xa38] sm:$0xff]
    %v771 = vld [vmem:[#allocation8 + $0xa40] sm:$0xff]
    %v772 = vld [vmem:[#allocation8 + $0xa48] sm:$0xff]
    %v773 = vld [vmem:[#allocation8 + $0xa50] sm:$0xff]
    %v774 = vld [vmem:[#allocation8 + $0xa58] sm:$0xff]
    %v775 = vld [vmem:[#allocation8 + $0xa60] sm:$0xff]
    %v776 = vld [vmem:[#allocation8 + $0xa68] sm:$0xff]
    %v777 = vld [vmem:[#allocation8 + $0xa70] sm:$0xff]
    %v778 = vld [vmem:[#allocation8 + $0xa78] sm:$0xff]
    %v779 = vld [vmem:[#allocation8 + $0xa80] sm:$0xff]
    %v780 = vld [vmem:[#allocation8 + $0xa88] sm:$0xff]
    %v781 = vld [vmem:[#allocation8 + $0xa90] sm:$0xff]
    %v782 = vld [vmem:[#allocation8 + $0xa98] sm:$0xff]
    %v783 = vld [vmem:[#allocation8 + $0xaa0] sm:$0xff]
    %v784 = vld [vmem:[#allocation8 + $0xaa8] sm:$0xff]
    %v785 = vld [vmem:[#allocation8 + $0xab0] sm:$0xff]
    %v786 = vld [vmem:[#allocation8 + $0xab8] sm:$0xff]
    %v787 = vld [vmem:[#allocation8 + $0xac0] sm:$0xff]
    %v788 = vld [vmem:[#allocation8 + $0xac8] sm:$0xff]
    %v789 = vld [vmem:[#allocation8 + $0xad0] sm:$0xff]
    %v790 = vld [vmem:[#allocation8 + $0xad8] sm:$0xff]
    %v791 = vld [vmem:[#allocation8 + $0xae0] sm:$0xff]
    %v792 = vld [vmem:[#allocation8 + $0xae8] sm:$0xff]
    %v793 = vld [vmem:[#allocation8 + $0xaf0] sm:$0xff]
    %v794 = vld [vmem:[#allocation8 + $0xaf8] sm:$0xff]
    %v795 = vld [vmem:[#allocation8 + $0xb00] sm:$0xff]
    %v796 = vld [vmem:[#allocation8 + $0xb08] sm:$0xff]
    %v797 = vld [vmem:[#allocation8 + $0xb10] sm:$0xff]
    %v798 = vld [vmem:[#allocation8 + $0xb18] sm:$0xff]
    %v799 = vld [vmem:[#allocation8 + $0xb20] sm:$0xff]
    %v800 = vld [vmem:[#allocation8 + $0xb28] sm:$0xff]
    %v801 = vld [vmem:[#allocation8 + $0xb30] sm:$0xff]
    %v802 = vld [vmem:[#allocation8 + $0xb38] sm:$0xff]
    %v803 = vld [vmem:[#allocation8 + $0xb40] sm:$0xff]
    %v804 = vld [vmem:[#allocation8 + $0xb48] sm:$0xff]
    %v805 = vld [vmem:[#allocation8 + $0xb50] sm:$0xff]
    %v806 = vld [vmem:[#allocation8 + $0xb58] sm:$0xff]
    %v807 = vld [vmem:[#allocation8 + $0xb60] sm:$0xff]
    %v808 = vld [vmem:[#allocation8 + $0xb68] sm:$0xff]
    %v809 = vld [vmem:[#allocation8 + $0xb70] sm:$0xff]
    %v810 = vld [vmem:[#allocation8 + $0xb78] sm:$0xff]
    %v811 = vld [vmem:[#allocation8 + $0xb80] sm:$0xff]
    %v812 = vld [vmem:[#allocation8 + $0xb88] sm:$0xff]
    %v813 = vld [vmem:[#allocation8 + $0xb90] sm:$0xff]
    %v814 = vld [vmem:[#allocation8 + $0xb98] sm:$0xff]
    %v815 = vld [vmem:[#allocation8 + $0xba0] sm:$0xff]
    %v816 = vld [vmem:[#allocation8 + $0xba8] sm:$0xff]
    %v817 = vld [vmem:[#allocation8 + $0xbb0] sm:$0xff]
    %v818 = vld [vmem:[#allocation8 + $0xbb8] sm:$0xff]
    %v819 = vld [vmem:[#allocation8 + $0xbc0] sm:$0xff]
    %v820 = vld [vmem:[#allocation8 + $0xbc8] sm:$0xff]
    %v821 = vld [vmem:[#allocation8 + $0xbd0] sm:$0xff]
    %v822 = vld [vmem:[#allocation8 + $0xbd8] sm:$0xff]
    %v823 = vld [vmem:[#allocation8 + $0xbe0] sm:$0xff]
    %v824 = vld [vmem:[#allocation8 + $0xbe8] sm:$0xff]
    %v825 = vld [vmem:[#allocation8 + $0xbf0] sm:$0xff]
    %v826 = vld [vmem:[#allocation8 + $0xbf8] sm:$0xff]
    %v827 = vld [vmem:[#allocation8 + $0xc00] sm:$0xff]
    %v828 = vld [vmem:[#allocation8 + $0xc08] sm:$0xff]
    %v829 = vld [vmem:[#allocation8 + $0xc10] sm:$0xff]
    %v830 = vld [vmem:[#allocation8 + $0xc18] sm:$0xff]
    %v831 = vld [vmem:[#allocation8 + $0xc20] sm:$0xff]
    %v832 = vld [vmem:[#allocation8 + $0xc28] sm:$0xff]
    %v833 = vld [vmem:[#allocation8 + $0xc30] sm:$0xff]
    %v834 = vld [vmem:[#allocation8 + $0xc38] sm:$0xff]
    %v835 = vld [vmem:[#allocation8 + $0xc40] sm:$0xff]
    %v836 = vld [vmem:[#allocation8 + $0xc48] sm:$0xff]
    %v837 = vld [vmem:[#allocation8 + $0xc50] sm:$0xff]
    %v838 = vld [vmem:[#allocation8 + $0xc58] sm:$0xff]
    %v839 = vld [vmem:[#allocation8 + $0xc60] sm:$0xff]
    %v840 = vld [vmem:[#allocation8 + $0xc68] sm:$0xff]
    %v841 = vld [vmem:[#allocation8 + $0xc70] sm:$0xff]
    %v842 = vld [vmem:[#allocation8 + $0xc78] sm:$0xff]
    %v843 = vld [vmem:[#allocation8 + $0xc80] sm:$0xff]
    %v844 = vld [vmem:[#allocation8 + $0xc88] sm:$0xff]
    %v845 = vld [vmem:[#allocation8 + $0xc90] sm:$0xff]
    %v846 = vld [vmem:[#allocation8 + $0xc98] sm:$0xff]
    %v847 = vld [vmem:[#allocation8 + $0xca0] sm:$0xff]
    %v848 = vld [vmem:[#allocation8 + $0xca8] sm:$0xff]
    %v849 = vld [vmem:[#allocation8 + $0xcb0] sm:$0xff]
    %v850 = vld [vmem:[#allocation8 + $0xcb8] sm:$0xff]
    %v851 = vld [vmem:[#allocation8 + $0xcc0] sm:$0xff]
    %v852 = vld [vmem:[#allocation8 + $0xcc8] sm:$0xff]
    %v853 = vld [vmem:[#allocation8 + $0xcd0] sm:$0xff]
    %v854 = vld [vmem:[#allocation8 + $0xcd8] sm:$0xff]
    %v855 = vld [vmem:[#allocation8 + $0xce0] sm:$0xff]
    %v856 = vld [vmem:[#allocation8 + $0xce8] sm:$0xff]
    %v857 = vld [vmem:[#allocation8 + $0xcf0] sm:$0xff]
    %v858 = vld [vmem:[#allocation8 + $0xcf8] sm:$0xff]
    %v859 = vld [vmem:[#allocation8 + $0xd00] sm:$0xff]
    %v860 = vld [vmem:[#allocation8 + $0xd08] sm:$0xff]
    %v861 = vld [vmem:[#allocation8 + $0xd10] sm:$0xff]
    %v862 = vld [vmem:[#allocation8 + $0xd18] sm:$0xff]
    %v863 = vld [vmem:[#allocation8 + $0xd20] sm:$0xff]
    %v864 = vld [vmem:[#allocation8 + $0xd28] sm:$0xff]
    %v865 = vld [vmem:[#allocation8 + $0xd30] sm:$0xff]
    %v866 = vld [vmem:[#allocation8 + $0xd38] sm:$0xff]
    %v867 = vld [vmem:[#allocation8 + $0xd40] sm:$0xff]
    %v868 = vld [vmem:[#allocation8 + $0xd48] sm:$0xff]
    %v869 = vld [vmem:[#allocation8 + $0xd50] sm:$0xff]
    %v870 = vld [vmem:[#allocation8 + $0xd58] sm:$0xff]
    %v871 = vld [vmem:[#allocation8 + $0xd60] sm:$0xff]
    %v872 = vld [vmem:[#allocation8 + $0xd68] sm:$0xff]
    %v873 = vld [vmem:[#allocation8 + $0xd70] sm:$0xff]
    %v874 = vld [vmem:[#allocation8 + $0xd78] sm:$0xff]
    %v875 = vld [vmem:[#allocation8 + $0xd80] sm:$0xff]
    %v876 = vld [vmem:[#allocation8 + $0xd88] sm:$0xff]
    %v877 = vld [vmem:[#allocation8 + $0xd90] sm:$0xff]
    %v878 = vld [vmem:[#allocation8 + $0xd98] sm:$0xff]
    %v879 = vld [vmem:[#allocation8 + $0xda0] sm:$0xff]
    %v880 = vld [vmem:[#allocation8 + $0xda8] sm:$0xff]
    %v881 = vld [vmem:[#allocation8 + $0xdb0] sm:$0xff]
    %v882 = vld [vmem:[#allocation8 + $0xdb8] sm:$0xff]
    %v883 = vld [vmem:[#allocation8 + $0xdc0] sm:$0xff]
    %v884 = vld [vmem:[#allocation8 + $0xdc8] sm:$0xff]
    %v885 = vld [vmem:[#allocation8 + $0xdd0] sm:$0xff]
    %v886 = vld [vmem:[#allocation8 + $0xdd8] sm:$0xff]
    %v887 = vld [vmem:[#allocation8 + $0xde0] sm:$0xff]
    %v888 = vld [vmem:[#allocation8 + $0xde8] sm:$0xff]
    %v889 = vld [vmem:[#allocation8 + $0xdf0] sm:$0xff]
    %v890 = vld [vmem:[#allocation8 + $0xdf8] sm:$0xff]
    %v891 = vld [vmem:[#allocation8 + $0xe00] sm:$0xff]
    %v892 = vld [vmem:[#allocation8 + $0xe08] sm:$0xff]
    %v893 = vld [vmem:[#allocation8 + $0xe10] sm:$0xff]
    %v894 = vld [vmem:[#allocation8 + $0xe18] sm:$0xff]
    %v895 = vld [vmem:[#allocation8 + $0xe20] sm:$0xff]
    %v896 = vld [vmem:[#allocation8 + $0xe28] sm:$0xff]
    %v897 = vld [vmem:[#allocation8 + $0xe30] sm:$0xff]
    %v898 = vld [vmem:[#allocation8 + $0xe38] sm:$0xff]
    %v899 = vld [vmem:[#allocation8 + $0xe40] sm:$0xff]
    %v900 = vld [vmem:[#allocation8 + $0xe48] sm:$0xff]
    %v901 = vld [vmem:[#allocation8 + $0xe50] sm:$0xff]
    %v902 = vld [vmem:[#allocation8 + $0xe58] sm:$0xff]
    %v903 = vld [vmem:[#allocation8 + $0xe60] sm:$0xff]
    %v904 = vld [vmem:[#allocation8 + $0xe68] sm:$0xff]
    %v905 = vld [vmem:[#allocation8 + $0xe70] sm:$0xff]
    %v906 = vld [vmem:[#allocation8 + $0xe78] sm:$0xff]
    %v907 = vld [vmem:[#allocation8 + $0xe80] sm:$0xff]
    %v908 = vld [vmem:[#allocation8 + $0xe88] sm:$0xff]
    %v909 = vld [vmem:[#allocation8 + $0xe90] sm:$0xff]
    %v910 = vld [vmem:[#allocation8 + $0xe98] sm:$0xff]
    %v911 = vld [vmem:[#allocation8 + $0xea0] sm:$0xff]
    %v912 = vld [vmem:[#allocation8 + $0xea8] sm:$0xff]
    %v913 = vld [vmem:[#allocation8 + $0xeb0] sm:$0xff]
    %v914 = vld [vmem:[#allocation8 + $0xeb8] sm:$0xff]
    %v915 = vld [vmem:[#allocation8 + $0xec0] sm:$0xff]
    %v916 = vld [vmem:[#allocation8 + $0xec8] sm:$0xff]
    %v917 = vld [vmem:[#allocation8 + $0xed0] sm:$0xff]
    %v918 = vld [vmem:[#allocation8 + $0xed8] sm:$0xff]
    %v919 = vld [vmem:[#allocation8 + $0xee0] sm:$0xff]
    %v920 = vld [vmem:[#allocation8 + $0xee8] sm:$0xff]
    %v921 = vld [vmem:[#allocation8 + $0xef0] sm:$0xff]
    %v922 = vld [vmem:[#allocation8 + $0xef8] sm:$0xff]
    %v923 = vld [vmem:[#allocation8 + $0xf00] sm:$0xff]
    %v924 = vld [vmem:[#allocation8 + $0xf08] sm:$0xff]
    %v925 = vld [vmem:[#allocation8 + $0xf10] sm:$0xff]
    %v926 = vld [vmem:[#allocation8 + $0xf18] sm:$0xff]
    %v927 = vld [vmem:[#allocation8 + $0xf20] sm:$0xff]
    %v928 = vld [vmem:[#allocation8 + $0xf28] sm:$0xff]
    %v929 = vld [vmem:[#allocation8 + $0xf30] sm:$0xff]
    %v930 = vld [vmem:[#allocation8 + $0xf38] sm:$0xff]
    %v931 = vld [vmem:[#allocation8 + $0xf40] sm:$0xff]
    %v932 = vld [vmem:[#allocation8 + $0xf48] sm:$0xff]
    %v933 = vld [vmem:[#allocation8 + $0xf50] sm:$0xff]
    %v934 = vld [vmem:[#allocation8 + $0xf58] sm:$0xff]
    %v935 = vld [vmem:[#allocation8 + $0xf60] sm:$0xff]
    %v936 = vld [vmem:[#allocation8 + $0xf68] sm:$0xff]
    %v937 = vld [vmem:[#allocation8 + $0xf70] sm:$0xff]
    %v938 = vld [vmem:[#allocation8 + $0xf78] sm:$0xff]
    %v939 = vld [vmem:[#allocation8 + $0xf80] sm:$0xff]
    %v940 = vld [vmem:[#allocation8 + $0xf88] sm:$0xff]
    %v941 = vld [vmem:[#allocation8 + $0xf90] sm:$0xff]
    %v942 = vld [vmem:[#allocation8 + $0xf98] sm:$0xff]
    %v943 = vld [vmem:[#allocation8 + $0xfa0] sm:$0xff]
    %v944 = vld [vmem:[#allocation8 + $0xfa8] sm:$0xff]
    %v945 = vld [vmem:[#allocation8 + $0xfb0] sm:$0xff]
    %v946 = vld [vmem:[#allocation8 + $0xfb8] sm:$0xff]
    %v947 = vld [vmem:[#allocation8 + $0xfc0] sm:$0xff]
    %v948 = vld [vmem:[#allocation8 + $0xfc8] sm:$0xff]
    %v949 = vld [vmem:[#allocation8 + $0xfd0] sm:$0xff]
    %v950 = vld [vmem:[#allocation8 + $0xfd8] sm:$0xff]
    %v951 = vld [vmem:[#allocation8 + $0xfe0] sm:$0xff]
    %v952 = vld [vmem:[#allocation8 + $0xfe8] sm:$0xff]
    %v953 = vld [vmem:[#allocation8 + $0xff0] sm:$0xff]
    %v954 = vld [vmem:[#allocation8 + $0xff8] sm:$0xff]
    %v955 = vld [vmem:[#allocation8 + $0x1000] sm:$0xff]
    %v956 = vld [vmem:[#allocation8 + $0x1008] sm:$0xff]
    %v957 = vld [vmem:[#allocation8 + $0x1010] sm:$0xff]
    %v958 = vld [vmem:[#allocation8 + $0x1018] sm:$0xff]
    %v959 = vld [vmem:[#allocation8 + $0x1020] sm:$0xff]
    %v960 = vld [vmem:[#allocation8 + $0x1028] sm:$0xff]
    %v961 = vld [vmem:[#allocation8 + $0x1030] sm:$0xff]
    %v962 = vld [vmem:[#allocation8 + $0x1038] sm:$0xff]
    %v963 = vld [vmem:[#allocation8 + $0x1040] sm:$0xff]
    %v964 = vld [vmem:[#allocation8 + $0x1048] sm:$0xff]
    %v965 = vld [vmem:[#allocation8 + $0x1050] sm:$0xff]
    %v966 = vld [vmem:[#allocation8 + $0x1058] sm:$0xff]
    %v967 = vld [vmem:[#allocation8 + $0x1060] sm:$0xff]
    %v968 = vld [vmem:[#allocation8 + $0x1068] sm:$0xff]
    %v969 = vld [vmem:[#allocation8 + $0x1070] sm:$0xff]
    %v970 = vld [vmem:[#allocation8 + $0x1078] sm:$0xff]
    %v971 = vld [vmem:[#allocation8 + $0x1080] sm:$0xff]
    %v972 = vld [vmem:[#allocation8 + $0x1088] sm:$0xff]
    %v973 = vld [vmem:[#allocation8 + $0x1090] sm:$0xff]
    %v974 = vld [vmem:[#allocation8 + $0x1098] sm:$0xff]
    %v975 = vld [vmem:[#allocation8 + $0x10a0] sm:$0xff]
    %v976 = vld [vmem:[#allocation8 + $0x10a8] sm:$0xff]
    %v977 = vld [vmem:[#allocation8 + $0x10b0] sm:$0xff]
    %v978 = vld [vmem:[#allocation8 + $0x10b8] sm:$0xff]
    %v979 = vld [vmem:[#allocation8 + $0x10c0] sm:$0xff]
    %v980 = vld [vmem:[#allocation8 + $0x10c8] sm:$0xff]
    %v981 = vld [vmem:[#allocation8 + $0x10d0] sm:$0xff]
    %v982 = vld [vmem:[#allocation8 + $0x10d8] sm:$0xff]
    %v983 = vld [vmem:[#allocation8 + $0x10e0] sm:$0xff]
    %v984 = vld [vmem:[#allocation8 + $0x10e8] sm:$0xff]
    %v985 = vld [vmem:[#allocation8 + $0x10f0] sm:$0xff]
    %v986 = vld [vmem:[#allocation8 + $0x10f8] sm:$0xff]
    %v987 = vld [vmem:[#allocation8 + $0x1100] sm:$0xff]
    %v988 = vld [vmem:[#allocation8 + $0x1108] sm:$0xff]
    %v989 = vld [vmem:[#allocation8 + $0x1110] sm:$0xff]
    %v990 = vld [vmem:[#allocation8 + $0x1118] sm:$0xff]
    %v991 = vld [vmem:[#allocation8 + $0x1120] sm:$0xff]
    %v992 = vld [vmem:[#allocation8 + $0x1128] sm:$0xff]
    %v993 = vld [vmem:[#allocation8 + $0x1130] sm:$0xff]
    %v994 = vld [vmem:[#allocation8 + $0x1138] sm:$0xff]
    %v995 = vld [vmem:[#allocation8 + $0x1140] sm:$0xff]
    %v996 = vld [vmem:[#allocation8 + $0x1148] sm:$0xff]
    %v997 = vld [vmem:[#allocation8 + $0x1150] sm:$0xff]
    %v998 = vld [vmem:[#allocation8 + $0x1158] sm:$0xff]
    %v999 = vld [vmem:[#allocation8 + $0x1160] sm:$0xff]
    %v1000 = vld [vmem:[#allocation8 + $0x1168] sm:$0xff]
    %v1001 = vld [vmem:[#allocation8 + $0x1170] sm:$0xff]
    %v1002 = vld [vmem:[#allocation8 + $0x1178] sm:$0xff]
    %v1003 = vld [vmem:[#allocation8 + $0x1180] sm:$0xff]
    %v1004 = vld [vmem:[#allocation8 + $0x1188] sm:$0xff]
    %v1005 = vld [vmem:[#allocation8 + $0x1190] sm:$0xff]
    %v1006 = vld [vmem:[#allocation8 + $0x1198] sm:$0xff]
    %v1007 = vld [vmem:[#allocation8 + $0x11a0] sm:$0xff]
    %v1008 = vld [vmem:[#allocation8 + $0x11a8] sm:$0xff]
    %v1009 = vld [vmem:[#allocation8 + $0x11b0] sm:$0xff]
    %v1010 = vld [vmem:[#allocation8 + $0x11b8] sm:$0xff]
    %v1011 = vld [vmem:[#allocation8 + $0x11c0] sm:$0xff]
    %v1012 = vld [vmem:[#allocation8 + $0x11c8] sm:$0xff]
    %v1013 = vld [vmem:[#allocation8 + $0x11d0] sm:$0xff]
    %v1014 = vld [vmem:[#allocation8 + $0x11d8] sm:$0xff]
    %v1015 = vld [vmem:[#allocation8 + $0x11e0] sm:$0xff]
    %v1016 = vld [vmem:[#allocation8 + $0x11e8] sm:$0xff]
    %v1017 = vld [vmem:[#allocation8 + $0x11f0] sm:$0xff]
    %v1018 = vld [vmem:[#allocation8 + $0x11f8] sm:$0xff]
    %v1019 = vld [vmem:[#allocation8 + $0x1200] sm:$0xff]
    %v1020 = vld [vmem:[#allocation8 + $0x1208] sm:$0xff]
    %v1021 = vld [vmem:[#allocation8 + $0x1210] sm:$0xff]
    %v1022 = vld [vmem:[#allocation8 + $0x1218] sm:$0xff]
    %v1023 = vld [vmem:[#allocation8 + $0x1220] sm:$0xff]
    %v1024 = vld [vmem:[#allocation8 + $0x1228] sm:$0xff]
    %v1025 = vld [vmem:[#allocation8 + $0x1230] sm:$0xff]
    %v1026 = vld [vmem:[#allocation8 + $0x1238] sm:$0xff]
    %v1027 = vld [vmem:[#allocation8 + $0x1240] sm:$0xff]
    %v1028 = vld [vmem:[#allocation8 + $0x1248] sm:$0xff]
    %v1029 = vld [vmem:[#allocation8 + $0x1250] sm:$0xff]
    %v1030 = vld [vmem:[#allocation8 + $0x1258] sm:$0xff]
    %v1031 = vld [vmem:[#allocation8 + $0x1260] sm:$0xff]
    %v1032 = vld [vmem:[#allocation8 + $0x1268] sm:$0xff]
    %v1033 = vld [vmem:[#allocation8 + $0x1270] sm:$0xff]
    %v1034 = vld [vmem:[#allocation8 + $0x1278] sm:$0xff]
    %v1035 = vld [vmem:[#allocation8 + $0x1280] sm:$0xff]
    %v1036 = vld [vmem:[#allocation8 + $0x1288] sm:$0xff]
    %v1037 = vld [vmem:[#allocation8 + $0x1290] sm:$0xff]
    %v1038 = vld [vmem:[#allocation8 + $0x1298] sm:$0xff]
    %v1039 = vld [vmem:[#allocation8 + $0x12a0] sm:$0xff]
    %v1040 = vld [vmem:[#allocation8 + $0x12a8] sm:$0xff]
    %v1041 = vld [vmem:[#allocation8 + $0x12b0] sm:$0xff]
    %v1042 = vld [vmem:[#allocation8 + $0x12b8] sm:$0xff]
    %v1043 = vld [vmem:[#allocation8 + $0x12c0] sm:$0xff]
    %v1044 = vld [vmem:[#allocation8 + $0x12c8] sm:$0xff]
    %v1045 = vld [vmem:[#allocation8 + $0x12d0] sm:$0xff]
    %v1046 = vld [vmem:[#allocation8 + $0x12d8] sm:$0xff]
    %v1047 = vld [vmem:[#allocation8 + $0x12e0] sm:$0xff]
    %v1048 = vld [vmem:[#allocation8 + $0x12e8] sm:$0xff]
    %v1049 = vld [vmem:[#allocation8 + $0x12f0] sm:$0xff]
    %v1050 = vld [vmem:[#allocation8 + $0x12f8] sm:$0xff]
    %v1051 = vld [vmem:[#allocation8 + $0x1300] sm:$0xff]
    %v1052 = vld [vmem:[#allocation8 + $0x1308] sm:$0xff]
    %v1053 = vld [vmem:[#allocation8 + $0x1310] sm:$0xff]
    %v1054 = vld [vmem:[#allocation8 + $0x1318] sm:$0xff]
    %v1055 = vld [vmem:[#allocation8 + $0x1320] sm:$0xff]
    %v1056 = vld [vmem:[#allocation8 + $0x1328] sm:$0xff]
    %v1057 = vld [vmem:[#allocation8 + $0x1330] sm:$0xff]
    %v1058 = vld [vmem:[#allocation8 + $0x1338] sm:$0xff]
    %v1059 = vld [vmem:[#allocation8 + $0x1340] sm:$0xff]
    %v1060 = vld [vmem:[#allocation8 + $0x1348] sm:$0xff]
    %v1061 = vld [vmem:[#allocation8 + $0x1350] sm:$0xff]
    %v1062 = vld [vmem:[#allocation8 + $0x1358] sm:$0xff]
    %v1063 = vld [vmem:[#allocation8 + $0x1360] sm:$0xff]
    %v1064 = vld [vmem:[#allocation8 + $0x1368] sm:$0xff]
    %v1065 = vld [vmem:[#allocation8 + $0x1370] sm:$0xff]
    %v1066 = vld [vmem:[#allocation8 + $0x1378] sm:$0xff]
    %v1067 = vld [vmem:[#allocation8 + $0x1380] sm:$0xff]
    %v1068 = vld [vmem:[#allocation8 + $0x1388] sm:$0xff]
    %v1069 = vld [vmem:[#allocation8 + $0x1390] sm:$0xff]
    %v1070 = vld [vmem:[#allocation8 + $0x1398] sm:$0xff]
    %v1071 = vld [vmem:[#allocation8 + $0x13a0] sm:$0xff]
    %v1072 = vld [vmem:[#allocation8 + $0x13a8] sm:$0xff]
    %v1073 = vld [vmem:[#allocation8 + $0x13b0] sm:$0xff]
    %v1074 = vld [vmem:[#allocation8 + $0x13b8] sm:$0xff]
    %v1075 = vld [vmem:[#allocation8 + $0x13c0] sm:$0xff]
    %v1076 = vld [vmem:[#allocation8 + $0x13c8] sm:$0xff]
    %v1077 = vld [vmem:[#allocation8 + $0x13d0] sm:$0xff]
    %v1078 = vld [vmem:[#allocation8 + $0x13d8] sm:$0xff]
    %v1079 = vld [vmem:[#allocation8 + $0x13e0] sm:$0xff]
    %v1080 = vld [vmem:[#allocation8 + $0x13e8] sm:$0xff]
    %v1081 = vld [vmem:[#allocation8 + $0x13f0] sm:$0xff]
    %v1082 = vld [vmem:[#allocation8 + $0x13f8] sm:$0xff]
    %v1083 = vld [vmem:[#allocation8 + $0x1400] sm:$0xff]
    %v1084 = vld [vmem:[#allocation8 + $0x1408] sm:$0xff]
    %v1085 = vld [vmem:[#allocation8 + $0x1410] sm:$0xff]
    %v1086 = vld [vmem:[#allocation8 + $0x1418] sm:$0xff]
    %v1087 = vld [vmem:[#allocation8 + $0x1420] sm:$0xff]
    %v1088 = vld [vmem:[#allocation8 + $0x1428] sm:$0xff]
    %v1089 = vld [vmem:[#allocation8 + $0x1430] sm:$0xff]
    %v1090 = vld [vmem:[#allocation8 + $0x1438] sm:$0xff]
    %v1091 = vld [vmem:[#allocation8 + $0x1440] sm:$0xff]
    %v1092 = vld [vmem:[#allocation8 + $0x1448] sm:$0xff]
    %v1093 = vld [vmem:[#allocation8 + $0x1450] sm:$0xff]
    %v1094 = vld [vmem:[#allocation8 + $0x1458] sm:$0xff]
    %v1095 = vld [vmem:[#allocation8 + $0x1460] sm:$0xff]
    %v1096 = vld [vmem:[#allocation8 + $0x1468] sm:$0xff]
    %v1097 = vld [vmem:[#allocation8 + $0x1470] sm:$0xff]
    %v1098 = vld [vmem:[#allocation8 + $0x1478] sm:$0xff]
    %v1099 = vld [vmem:[#allocation8 + $0x1480] sm:$0xff]
    %v1100 = vld [vmem:[#allocation8 + $0x1488] sm:$0xff]
    %v1101 = vld [vmem:[#allocation8 + $0x1490] sm:$0xff]
    %v1102 = vld [vmem:[#allocation8 + $0x1498] sm:$0xff]
    %v1103 = vld [vmem:[#allocation8 + $0x14a0] sm:$0xff]
    %v1104 = vld [vmem:[#allocation8 + $0x14a8] sm:$0xff]
    %v1105 = vld [vmem:[#allocation8 + $0x14b0] sm:$0xff]
    %v1106 = vld [vmem:[#allocation8 + $0x14b8] sm:$0xff]
    %v1107 = vld [vmem:[#allocation8 + $0x14c0] sm:$0xff]
    %v1108 = vld [vmem:[#allocation8 + $0x14c8] sm:$0xff]
    %v1109 = vld [vmem:[#allocation8 + $0x14d0] sm:$0xff]
    %v1110 = vld [vmem:[#allocation8 + $0x14d8] sm:$0xff]
    %v1111 = vld [vmem:[#allocation8 + $0x14e0] sm:$0xff]
    %v1112 = vld [vmem:[#allocation8 + $0x14e8] sm:$0xff]
    %v1113 = vld [vmem:[#allocation8 + $0x14f0] sm:$0xff]
    %v1114 = vld [vmem:[#allocation8 + $0x14f8] sm:$0xff]
    %v1115 = vld [vmem:[#allocation8 + $0x1500] sm:$0xff]
    %v1116 = vld [vmem:[#allocation8 + $0x1508] sm:$0xff]
    %v1117 = vld [vmem:[#allocation8 + $0x1510] sm:$0xff]
    %v1118 = vld [vmem:[#allocation8 + $0x1518] sm:$0xff]
    %v1119 = vld [vmem:[#allocation8 + $0x1520] sm:$0xff]
    %v1120 = vld [vmem:[#allocation8 + $0x1528] sm:$0xff]
    %v1121 = vld [vmem:[#allocation8 + $0x1530] sm:$0xff]
    %v1122 = vld [vmem:[#allocation8 + $0x1538] sm:$0xff]
    %v1123 = vld [vmem:[#allocation8 + $0x1540] sm:$0xff]
    %v1124 = vld [vmem:[#allocation8 + $0x1548] sm:$0xff]
    %v1125 = vld [vmem:[#allocation8 + $0x1550] sm:$0xff]
    %v1126 = vld [vmem:[#allocation8 + $0x1558] sm:$0xff]
    %v1127 = vld [vmem:[#allocation8 + $0x1560] sm:$0xff]
    %v1128 = vld [vmem:[#allocation8 + $0x1568] sm:$0xff]
    %v1129 = vld [vmem:[#allocation8 + $0x1570] sm:$0xff]
    %v1130 = vld [vmem:[#allocation8 + $0x1578] sm:$0xff]
    %v1131 = vld [vmem:[#allocation8 + $0x1580] sm:$0xff]
    %v1132 = vld [vmem:[#allocation8 + $0x1588] sm:$0xff]
    %v1133 = vld [vmem:[#allocation8 + $0x1590] sm:$0xff]
    %v1134 = vld [vmem:[#allocation8 + $0x1598] sm:$0xff]
    %v1135 = vld [vmem:[#allocation8 + $0x15a0] sm:$0xff]
    %v1136 = vld [vmem:[#allocation8 + $0x15a8] sm:$0xff]
    %v1137 = vld [vmem:[#allocation8 + $0x15b0] sm:$0xff]
    %v1138 = vld [vmem:[#allocation8 + $0x15b8] sm:$0xff]
    %v1139 = vld [vmem:[#allocation8 + $0x15c0] sm:$0xff]
    %v1140 = vld [vmem:[#allocation8 + $0x15c8] sm:$0xff]
    %v1141 = vld [vmem:[#allocation8 + $0x15d0] sm:$0xff]
    %v1142 = vld [vmem:[#allocation8 + $0x15d8] sm:$0xff]
    %v1143 = vld [vmem:[#allocation8 + $0x15e0] sm:$0xff]
    %v1144 = vld [vmem:[#allocation8 + $0x15e8] sm:$0xff]
    %v1145 = vld [vmem:[#allocation8 + $0x15f0] sm:$0xff]
    %v1146 = vld [vmem:[#allocation8 + $0x15f8] sm:$0xff]
    %v1147 = vld [vmem:[#allocation8 + $0x1600] sm:$0xff]
    %v1148 = vld [vmem:[#allocation8 + $0x1608] sm:$0xff]
    %v1149 = vld [vmem:[#allocation8 + $0x1610] sm:$0xff]
    %v1150 = vld [vmem:[#allocation8 + $0x1618] sm:$0xff]
    %v1151 = vld [vmem:[#allocation8 + $0x1620] sm:$0xff]
    %v1152 = vld [vmem:[#allocation8 + $0x1628] sm:$0xff]
    %v1153 = vld [vmem:[#allocation8 + $0x1630] sm:$0xff]
    %v1154 = vld [vmem:[#allocation8 + $0x1638] sm:$0xff]
    %v1155 = vld [vmem:[#allocation8 + $0x1640] sm:$0xff]
    %v1156 = vld [vmem:[#allocation8 + $0x1648] sm:$0xff]
    %v1157 = vld [vmem:[#allocation8 + $0x1650] sm:$0xff]
    %v1158 = vld [vmem:[#allocation8 + $0x1658] sm:$0xff]
    %v1159 = vld [vmem:[#allocation8 + $0x1660] sm:$0xff]
    %v1160 = vld [vmem:[#allocation8 + $0x1668] sm:$0xff]
    %v1161 = vld [vmem:[#allocation8 + $0x1670] sm:$0xff]
    %v1162 = vld [vmem:[#allocation8 + $0x1678] sm:$0xff]
    %v1163 = vld [vmem:[#allocation8 + $0x1680] sm:$0xff]
    %v1164 = vld [vmem:[#allocation8 + $0x1688] sm:$0xff]
    %v1165 = vld [vmem:[#allocation8 + $0x1690] sm:$0xff]
    %v1166 = vld [vmem:[#allocation8 + $0x1698] sm:$0xff]
    %v1167 = vld [vmem:[#allocation8 + $0x16a0] sm:$0xff]
    %v1168 = vld [vmem:[#allocation8 + $0x16a8] sm:$0xff]
    %v1169 = vld [vmem:[#allocation8 + $0x16b0] sm:$0xff]
    %v1170 = vld [vmem:[#allocation8 + $0x16b8] sm:$0xff]
    %v1171 = vld [vmem:[#allocation8 + $0x16c0] sm:$0xff]
    %v1172 = vld [vmem:[#allocation8 + $0x16c8] sm:$0xff]
    %v1173 = vld [vmem:[#allocation8 + $0x16d0] sm:$0xff]
    %v1174 = vld [vmem:[#allocation8 + $0x16d8] sm:$0xff]
    %v1175 = vld [vmem:[#allocation8 + $0x16e0] sm:$0xff]
    %v1176 = vld [vmem:[#allocation8 + $0x16e8] sm:$0xff]
    %v1177 = vld [vmem:[#allocation8 + $0x16f0] sm:$0xff]
    %v1178 = vld [vmem:[#allocation8 + $0x16f8] sm:$0xff]
    %v1179 = vld [vmem:[#allocation8 + $0x1700] sm:$0xff]
    %v1180 = vld [vmem:[#allocation8 + $0x1708] sm:$0xff]
    %v1181 = vld [vmem:[#allocation8 + $0x1710] sm:$0xff]
    %v1182 = vld [vmem:[#allocation8 + $0x1718] sm:$0xff]
    %v1183 = vld [vmem:[#allocation8 + $0x1720] sm:$0xff]
    %v1184 = vld [vmem:[#allocation8 + $0x1728] sm:$0xff]
    %v1185 = vld [vmem:[#allocation8 + $0x1730] sm:$0xff]
    %v1186 = vld [vmem:[#allocation8 + $0x1738] sm:$0xff]
    %v1187 = vld [vmem:[#allocation8 + $0x1740] sm:$0xff]
    %v1188 = vld [vmem:[#allocation8 + $0x1748] sm:$0xff]
    %v1189 = vld [vmem:[#allocation8 + $0x1750] sm:$0xff]
    %v1190 = vld [vmem:[#allocation8 + $0x1758] sm:$0xff]
    %v1191 = vld [vmem:[#allocation8 + $0x1760] sm:$0xff]
    %v1192 = vld [vmem:[#allocation8 + $0x1768] sm:$0xff]
    %v1193 = vld [vmem:[#allocation8 + $0x1770] sm:$0xff]
    %v1194 = vld [vmem:[#allocation8 + $0x1778] sm:$0xff]
    %v1195 = vld [vmem:[#allocation8 + $0x1780] sm:$0xff]
    %v1196 = vld [vmem:[#allocation8 + $0x1788] sm:$0xff]
    %v1197 = vld [vmem:[#allocation8 + $0x1790] sm:$0xff]
    %v1198 = vld [vmem:[#allocation8 + $0x1798] sm:$0xff]
    %v1199 = vld [vmem:[#allocation8 + $0x17a0] sm:$0xff]
    %v1200 = vld [vmem:[#allocation8 + $0x17a8] sm:$0xff]
    %v1201 = vld [vmem:[#allocation8 + $0x17b0] sm:$0xff]
    %v1202 = vld [vmem:[#allocation8 + $0x17b8] sm:$0xff]
    %v1203 = vld [vmem:[#allocation8 + $0x17c0] sm:$0xff]
    %v1204 = vld [vmem:[#allocation8 + $0x17c8] sm:$0xff]
    %v1205 = vld [vmem:[#allocation8 + $0x17d0] sm:$0xff]
    %v1206 = vld [vmem:[#allocation8 + $0x17d8] sm:$0xff]
    %v1207 = vld [vmem:[#allocation8 + $0x17e0] sm:$0xff]
    %v1208 = vld [vmem:[#allocation8 + $0x17e8] sm:$0xff]
    %v1209 = vld [vmem:[#allocation8 + $0x17f0] sm:$0xff]
    %v1210 = vld [vmem:[#allocation8 + $0x17f8] sm:$0xff]
    %v1211 = vld [vmem:[#allocation8 + $0x1800] sm:$0xff]
    %v1212 = vld [vmem:[#allocation8 + $0x1808] sm:$0xff]
    %v1213 = vld [vmem:[#allocation8 + $0x1810] sm:$0xff]
    %v1214 = vld [vmem:[#allocation8 + $0x1818] sm:$0xff]
    %v1215 = vld [vmem:[#allocation8 + $0x1820] sm:$0xff]
    %v1216 = vld [vmem:[#allocation8 + $0x1828] sm:$0xff]
    %v1217 = vld [vmem:[#allocation8 + $0x1830] sm:$0xff]
    %v1218 = vld [vmem:[#allocation8 + $0x1838] sm:$0xff]
    %v1219 = vld [vmem:[#allocation8 + $0x1840] sm:$0xff]
    %v1220 = vld [vmem:[#allocation8 + $0x1848] sm:$0xff]
    %v1221 = vld [vmem:[#allocation8 + $0x1850] sm:$0xff]
    %v1222 = vld [vmem:[#allocation8 + $0x1858] sm:$0xff]
    %v1223 = vld [vmem:[#allocation8 + $0x1860] sm:$0xff]
    %v1224 = vld [vmem:[#allocation8 + $0x1868] sm:$0xff]
    %v1225 = vld [vmem:[#allocation8 + $0x1870] sm:$0xff]
    %v1226 = vld [vmem:[#allocation8 + $0x1878] sm:$0xff]
    %v1227 = vld [vmem:[#allocation8 + $0x1880] sm:$0xff]
    %v1228 = vld [vmem:[#allocation8 + $0x1888] sm:$0xff]
    %v1229 = vld [vmem:[#allocation8 + $0x1890] sm:$0xff]
    %v1230 = vld [vmem:[#allocation8 + $0x1898] sm:$0xff]
    %v1231 = vld [vmem:[#allocation8 + $0x18a0] sm:$0xff]
    %v1232 = vld [vmem:[#allocation8 + $0x18a8] sm:$0xff]
    %v1233 = vld [vmem:[#allocation8 + $0x18b0] sm:$0xff]
    %v1234 = vld [vmem:[#allocation8 + $0x18b8] sm:$0xff]
    %v1235 = vld [vmem:[#allocation8 + $0x18c0] sm:$0xff]
    %v1236 = vld [vmem:[#allocation8 + $0x18c8] sm:$0xff]
    %v1237 = vld [vmem:[#allocation8 + $0x18d0] sm:$0xff]
    %v1238 = vld [vmem:[#allocation8 + $0x18d8] sm:$0xff]
    %v1239 = vld [vmem:[#allocation8 + $0x18e0] sm:$0xff]
    %v1240 = vld [vmem:[#allocation8 + $0x18e8] sm:$0xff]
    %v1241 = vld [vmem:[#allocation8 + $0x18f0] sm:$0xff]
    %v1242 = vld [vmem:[#allocation8 + $0x18f8] sm:$0xff]
    %v1243 = vld [vmem:[#allocation8 + $0x1900] sm:$0xff]
    %v1244 = vld [vmem:[#allocation8 + $0x1908] sm:$0xff]
    %v1245 = vld [vmem:[#allocation8 + $0x1910] sm:$0xff]
    %v1246 = vld [vmem:[#allocation8 + $0x1918] sm:$0xff]
    %v1247 = vld [vmem:[#allocation8 + $0x1920] sm:$0xff]
    %v1248 = vld [vmem:[#allocation8 + $0x1928] sm:$0xff]
    %v1249 = vld [vmem:[#allocation8 + $0x1930] sm:$0xff]
    %v1250 = vld [vmem:[#allocation8 + $0x1938] sm:$0xff]
    %v1251 = vld [vmem:[#allocation8 + $0x1940] sm:$0xff]
    %v1252 = vld [vmem:[#allocation8 + $0x1948] sm:$0xff]
    %v1253 = vld [vmem:[#allocation8 + $0x1950] sm:$0xff]
    %v1254 = vld [vmem:[#allocation8 + $0x1958] sm:$0xff]
    %v1255 = vld [vmem:[#allocation8 + $0x1960] sm:$0xff]
    %v1256 = vld [vmem:[#allocation8 + $0x1968] sm:$0xff]
    %v1257 = vld [vmem:[#allocation8 + $0x1970] sm:$0xff]
    %v1258 = vld [vmem:[#allocation8 + $0x1978] sm:$0xff]
    %v1259 = vld [vmem:[#allocation8 + $0x1980] sm:$0xff]
    %v1260 = vld [vmem:[#allocation8 + $0x1988] sm:$0xff]
    %v1261 = vld [vmem:[#allocation8 + $0x1990] sm:$0xff]
    %v1262 = vld [vmem:[#allocation8 + $0x1998] sm:$0xff]
    %v1263 = vld [vmem:[#allocation8 + $0x19a0] sm:$0xff]
    %v1264 = vld [vmem:[#allocation8 + $0x19a8] sm:$0xff]
    %v1265 = vld [vmem:[#allocation8 + $0x19b0] sm:$0xff]
    %v1266 = vld [vmem:[#allocation8 + $0x19b8] sm:$0xff]
    %v1267 = vld [vmem:[#allocation8 + $0x19c0] sm:$0xff]
    %v1268 = vld [vmem:[#allocation8 + $0x19c8] sm:$0xff]
    %v1269 = vld [vmem:[#allocation8 + $0x19d0] sm:$0xff]
    %v1270 = vld [vmem:[#allocation8 + $0x19d8] sm:$0xff]
    %v1271 = vld [vmem:[#allocation8 + $0x19e0] sm:$0xff]
    %v1272 = vld [vmem:[#allocation8 + $0x19e8] sm:$0xff]
    %v1273 = vld [vmem:[#allocation8 + $0x19f0] sm:$0xff]
    %v1274 = vld [vmem:[#allocation8 + $0x19f8] sm:$0xff]
    %v1275 = vld [vmem:[#allocation8 + $0x1a00] sm:$0xff]
    %v1276 = vld [vmem:[#allocation8 + $0x1a08] sm:$0xff]
    %v1277 = vld [vmem:[#allocation8 + $0x1a10] sm:$0xff]
    %v1278 = vld [vmem:[#allocation8 + $0x1a18] sm:$0xff]
    %v1279 = vld [vmem:[#allocation8 + $0x1a20] sm:$0xff]
    %v1280 = vld [vmem:[#allocation8 + $0x1a28] sm:$0xff]
    %v1281 = vld [vmem:[#allocation8 + $0x1a30] sm:$0xff]
    %v1282 = vld [vmem:[#allocation8 + $0x1a38] sm:$0xff]
    %v1283 = vld [vmem:[#allocation8 + $0x1a40] sm:$0xff]
    %v1284 = vld [vmem:[#allocation8 + $0x1a48] sm:$0xff]
    %v1285 = vld [vmem:[#allocation8 + $0x1a50] sm:$0xff]
    %v1286 = vld [vmem:[#allocation8 + $0x1a58] sm:$0xff]
    %v1287 = vld [vmem:[#allocation8 + $0x1a60] sm:$0xff]
    %v1288 = vld [vmem:[#allocation8 + $0x1a68] sm:$0xff]
    %v1289 = vld [vmem:[#allocation8 + $0x1a70] sm:$0xff]
    %v1290 = vld [vmem:[#allocation8 + $0x1a78] sm:$0xff]
    %v1291 = vld [vmem:[#allocation8 + $0x1a80] sm:$0xff]
    %v1292 = vld [vmem:[#allocation8 + $0x1a88] sm:$0xff]
    %v1293 = vld [vmem:[#allocation8 + $0x1a90] sm:$0xff]
    %v1294 = vld [vmem:[#allocation8 + $0x1a98] sm:$0xff]
    %v1295 = vld [vmem:[#allocation8 + $0x1aa0] sm:$0xff]
    %v1296 = vld [vmem:[#allocation8 + $0x1aa8] sm:$0xff]
    %v1297 = vld [vmem:[#allocation8 + $0x1ab0] sm:$0xff]
    %v1298 = vld [vmem:[#allocation8 + $0x1ab8] sm:$0xff]
    %v1299 = vld [vmem:[#allocation8 + $0x1ac0] sm:$0xff]
    %v1300 = vld [vmem:[#allocation8 + $0x1ac8] sm:$0xff]
    %v1301 = vld [vmem:[#allocation8 + $0x1ad0] sm:$0xff]
    %v1302 = vld [vmem:[#allocation8 + $0x1ad8] sm:$0xff]
    %v1303 = vld [vmem:[#allocation8 + $0x1ae0] sm:$0xff]
    %v1304 = vld [vmem:[#allocation8 + $0x1ae8] sm:$0xff]
    %v1305 = vld [vmem:[#allocation8 + $0x1af0] sm:$0xff]
    %v1306 = vld [vmem:[#allocation8 + $0x1af8] sm:$0xff]
    %v1307 = vld [vmem:[#allocation8 + $0x1b00] sm:$0xff]
    %v1308 = vld [vmem:[#allocation8 + $0x1b08] sm:$0xff]
    %v1309 = vld [vmem:[#allocation8 + $0x1b10] sm:$0xff]
    %v1310 = vld [vmem:[#allocation8 + $0x1b18] sm:$0xff]
    %v1311 = vld [vmem:[#allocation8 + $0x1b20] sm:$0xff]
    %v1312 = vld [vmem:[#allocation8 + $0x1b28] sm:$0xff]
    %v1313 = vld [vmem:[#allocation8 + $0x1b30] sm:$0xff]
    %v1314 = vld [vmem:[#allocation8 + $0x1b38] sm:$0xff]
    %v1315 = vld [vmem:[#allocation8 + $0x1b40] sm:$0xff]
    %v1316 = vld [vmem:[#allocation8 + $0x1b48] sm:$0xff]
    %v1317 = vld [vmem:[#allocation8 + $0x1b50] sm:$0xff]
    %v1318 = vld [vmem:[#allocation8 + $0x1b58] sm:$0xff]
    %v1319 = vld [vmem:[#allocation8 + $0x1b60] sm:$0xff]
    %v1320 = vld [vmem:[#allocation8 + $0x1b68] sm:$0xff]
    %v1321 = vld [vmem:[#allocation8 + $0x1b70] sm:$0xff]
    %v1322 = vld [vmem:[#allocation8 + $0x1b78] sm:$0xff]
    %v1323 = vld [vmem:[#allocation8 + $0x1b80] sm:$0xff]
    %v1324 = vld [vmem:[#allocation8 + $0x1b88] sm:$0xff]
    %v1325 = vld [vmem:[#allocation8 + $0x1b90] sm:$0xff]
    %v1326 = vld [vmem:[#allocation8 + $0x1b98] sm:$0xff]
    %v1327 = vld [vmem:[#allocation8 + $0x1ba0] sm:$0xff]
    %v1328 = vld [vmem:[#allocation8 + $0x1ba8] sm:$0xff]
    %v1329 = vld [vmem:[#allocation8 + $0x1bb0] sm:$0xff]
    %v1330 = vld [vmem:[#allocation8 + $0x1bb8] sm:$0xff]
    %v1331 = vld [vmem:[#allocation8 + $0x1bc0] sm:$0xff]
    %v1332 = vld [vmem:[#allocation8 + $0x1bc8] sm:$0xff]
    %v1333 = vld [vmem:[#allocation8 + $0x1bd0] sm:$0xff]
    %v1334 = vld [vmem:[#allocation8 + $0x1bd8] sm:$0xff]
    %v1335 = vld [vmem:[#allocation8 + $0x1be0] sm:$0xff]
    %v1336 = vld [vmem:[#allocation8 + $0x1be8] sm:$0xff]
    %v1337 = vld [vmem:[#allocation8 + $0x1bf0] sm:$0xff]
    %v1338 = vld [vmem:[#allocation8 + $0x1bf8] sm:$0xff]
    %v1339 = vld [vmem:[#allocation8 + $0x1c00] sm:$0xff]
    %v1340 = vld [vmem:[#allocation8 + $0x1c08] sm:$0xff]
    %v1341 = vld [vmem:[#allocation8 + $0x1c10] sm:$0xff]
    %v1342 = vld [vmem:[#allocation8 + $0x1c18] sm:$0xff]
    %v1343 = vld [vmem:[#allocation8 + $0x1c20] sm:$0xff]
    %v1344 = vld [vmem:[#allocation8 + $0x1c28] sm:$0xff]
    %v1345 = vld [vmem:[#allocation8 + $0x1c30] sm:$0xff]
    %v1346 = vld [vmem:[#allocation8 + $0x1c38] sm:$0xff]
    %v1347 = vld [vmem:[#allocation8 + $0x1c40] sm:$0xff]
    %v1348 = vld [vmem:[#allocation8 + $0x1c48] sm:$0xff]
    %v1349 = vld [vmem:[#allocation8 + $0x1c50] sm:$0xff]
    %v1350 = vld [vmem:[#allocation8 + $0x1c58] sm:$0xff]
    %v1351 = vld [vmem:[#allocation8 + $0x1c60] sm:$0xff]
    %v1352 = vld [vmem:[#allocation8 + $0x1c68] sm:$0xff]
    %v1353 = vld [vmem:[#allocation8 + $0x1c70] sm:$0xff]
    %v1354 = vld [vmem:[#allocation8 + $0x1c78] sm:$0xff]
    %v1355 = vld [vmem:[#allocation8 + $0x1c80] sm:$0xff]
    %v1356 = vld [vmem:[#allocation8 + $0x1c88] sm:$0xff]
    %v1357 = vld [vmem:[#allocation8 + $0x1c90] sm:$0xff]
    %v1358 = vld [vmem:[#allocation8 + $0x1c98] sm:$0xff]
    %v1359 = vld [vmem:[#allocation8 + $0x1ca0] sm:$0xff]
    %v1360 = vld [vmem:[#allocation8 + $0x1ca8] sm:$0xff]
    %v1361 = vld [vmem:[#allocation8 + $0x1cb0] sm:$0xff]
    %v1362 = vld [vmem:[#allocation8 + $0x1cb8] sm:$0xff]
    %v1363 = vld [vmem:[#allocation8 + $0x1cc0] sm:$0xff]
    %v1364 = vld [vmem:[#allocation8 + $0x1cc8] sm:$0xff]
    %v1365 = vld [vmem:[#allocation8 + $0x1cd0] sm:$0xff]
    %v1366 = vld [vmem:[#allocation8 + $0x1cd8] sm:$0xff]
    %v1367 = vld [vmem:[#allocation8 + $0x1ce0] sm:$0xff]
    %v1368 = vld [vmem:[#allocation8 + $0x1ce8] sm:$0xff]
    %v1369 = vld [vmem:[#allocation8 + $0x1cf0] sm:$0xff]
    %v1370 = vld [vmem:[#allocation8 + $0x1cf8] sm:$0xff]
    %v1371 = vld [vmem:[#allocation8 + $0x1d00] sm:$0xff]
    %v1372 = vld [vmem:[#allocation8 + $0x1d08] sm:$0xff]
    %v1373 = vld [vmem:[#allocation8 + $0x1d10] sm:$0xff]
    %v1374 = vld [vmem:[#allocation8 + $0x1d18] sm:$0xff]
    %v1375 = vld [vmem:[#allocation8 + $0x1d20] sm:$0xff]
    %v1376 = vld [vmem:[#allocation8 + $0x1d28] sm:$0xff]
    %v1377 = vld [vmem:[#allocation8 + $0x1d30] sm:$0xff]
    %v1378 = vld [vmem:[#allocation8 + $0x1d38] sm:$0xff]
    %v1379 = vld [vmem:[#allocation8 + $0x1d40] sm:$0xff]
    %v1380 = vld [vmem:[#allocation8 + $0x1d48] sm:$0xff]
    %v1381 = vld [vmem:[#allocation8 + $0x1d50] sm:$0xff]
    %v1382 = vld [vmem:[#allocation8 + $0x1d58] sm:$0xff]
    %v1383 = vld [vmem:[#allocation8 + $0x1d60] sm:$0xff]
    %v1384 = vld [vmem:[#allocation8 + $0x1d68] sm:$0xff]
    %v1385 = vld [vmem:[#allocation8 + $0x1d70] sm:$0xff]
    %v1386 = vld [vmem:[#allocation8 + $0x1d78] sm:$0xff]
    %v1387 = vld [vmem:[#allocation8 + $0x1d80] sm:$0xff]
    %v1388 = vld [vmem:[#allocation8 + $0x1d88] sm:$0xff]
    %v1389 = vld [vmem:[#allocation8 + $0x1d90] sm:$0xff]
    %v1390 = vld [vmem:[#allocation8 + $0x1d98] sm:$0xff]
    %v1391 = vld [vmem:[#allocation8 + $0x1da0] sm:$0xff]
    %v1392 = vld [vmem:[#allocation8 + $0x1da8] sm:$0xff]
    %v1393 = vld [vmem:[#allocation8 + $0x1db0] sm:$0xff]
    %v1394 = vld [vmem:[#allocation8 + $0x1db8] sm:$0xff]
    %v1395 = vld [vmem:[#allocation8 + $0x1dc0] sm:$0xff]
    %v1396 = vld [vmem:[#allocation8 + $0x1dc8] sm:$0xff]
    %v1397 = vld [vmem:[#allocation8 + $0x1dd0] sm:$0xff]
    %v1398 = vld [vmem:[#allocation8 + $0x1dd8] sm:$0xff]
    %v1399 = vld [vmem:[#allocation8 + $0x1de0] sm:$0xff]
    %v1400 = vld [vmem:[#allocation8 + $0x1de8] sm:$0xff]
    %v1401 = vld [vmem:[#allocation8 + $0x1df0] sm:$0xff]
    %v1402 = vld [vmem:[#allocation8 + $0x1df8] sm:$0xff]
    %v1403 = vld [vmem:[#allocation8 + $0x1e00] sm:$0xff]
    %v1404 = vld [vmem:[#allocation8 + $0x1e08] sm:$0xff]
    %v1405 = vld [vmem:[#allocation8 + $0x1e10] sm:$0xff]
    %v1406 = vld [vmem:[#allocation8 + $0x1e18] sm:$0xff]
    %v1407 = vld [vmem:[#allocation8 + $0x1e20] sm:$0xff]
    %v1408 = vld [vmem:[#allocation8 + $0x1e28] sm:$0xff]
    %v1409 = vld [vmem:[#allocation8 + $0x1e30] sm:$0xff]
    %v1410 = vld [vmem:[#allocation8 + $0x1e38] sm:$0xff]
    %v1411 = vld [vmem:[#allocation8 + $0x1e40] sm:$0xff]
    %v1412 = vld [vmem:[#allocation8 + $0x1e48] sm:$0xff]
    %v1413 = vld [vmem:[#allocation8 + $0x1e50] sm:$0xff]
    %v1414 = vld [vmem:[#allocation8 + $0x1e58] sm:$0xff]
    %v1415 = vld [vmem:[#allocation8 + $0x1e60] sm:$0xff]
    %v1416 = vld [vmem:[#allocation8 + $0x1e68] sm:$0xff]
    %v1417 = vld [vmem:[#allocation8 + $0x1e70] sm:$0xff]
    %v1418 = vld [vmem:[#allocation8 + $0x1e78] sm:$0xff]
    %v1419 = vld [vmem:[#allocation8 + $0x1e80] sm:$0xff]
    %v1420 = vld [vmem:[#allocation8 + $0x1e88] sm:$0xff]
    %v1421 = vld [vmem:[#allocation8 + $0x1e90] sm:$0xff]
    %v1422 = vld [vmem:[#allocation8 + $0x1e98] sm:$0xff]
    %v1423 = vld [vmem:[#allocation8 + $0x1ea0] sm:$0xff]
    %v1424 = vld [vmem:[#allocation8 + $0x1ea8] sm:$0xff]
    %v1425 = vld [vmem:[#allocation8 + $0x1eb0] sm:$0xff]
    %v1426 = vld [vmem:[#allocation8 + $0x1eb8] sm:$0xff]
    %v1427 = vld [vmem:[#allocation8 + $0x1ec0] sm:$0xff]
    %v1428 = vld [vmem:[#allocation8 + $0x1ec8] sm:$0xff]
    %v1429 = vld [vmem:[#allocation8 + $0x1ed0] sm:$0xff]
    %v1430 = vld [vmem:[#allocation8 + $0x1ed8] sm:$0xff]
    %v1431 = vld [vmem:[#allocation8 + $0x1ee0] sm:$0xff]
    %v1432 = vld [vmem:[#allocation8 + $0x1ee8] sm:$0xff]
    %v1433 = vld [vmem:[#allocation8 + $0x1ef0] sm:$0xff]
    %v1434 = vld [vmem:[#allocation8 + $0x1ef8] sm:$0xff]
    %v1435 = vld [vmem:[#allocation8 + $0x1f00] sm:$0xff]
    %v1436 = vld [vmem:[#allocation8 + $0x1f08] sm:$0xff]
    %v1437 = vld [vmem:[#allocation8 + $0x1f10] sm:$0xff]
    %v1438 = vld [vmem:[#allocation8 + $0x1f18] sm:$0xff]
    %v1439 = vld [vmem:[#allocation8 + $0x1f20] sm:$0xff]
    %v1440 = vld [vmem:[#allocation8 + $0x1f28] sm:$0xff]
    %v1441 = vld [vmem:[#allocation8 + $0x1f30] sm:$0xff]
    %v1442 = vld [vmem:[#allocation8 + $0x1f38] sm:$0xff]
    %v1443 = vld [vmem:[#allocation8 + $0x1f40] sm:$0xff]
    %v1444 = vld [vmem:[#allocation8 + $0x1f48] sm:$0xff]
    %v1445 = vld [vmem:[#allocation8 + $0x1f50] sm:$0xff]
    %v1446 = vld [vmem:[#allocation8 + $0x1f58] sm:$0xff]
    %v1447 = vld [vmem:[#allocation8 + $0x1f60] sm:$0xff]
    %v1448 = vld [vmem:[#allocation8 + $0x1f68] sm:$0xff]
    %v1449 = vld [vmem:[#allocation8 + $0x1f70] sm:$0xff]
    %v1450 = vld [vmem:[#allocation8 + $0x1f78] sm:$0xff]
    %v1451 = vld [vmem:[#allocation8 + $0x1f80] sm:$0xff]
    %v1452 = vld [vmem:[#allocation8 + $0x1f88] sm:$0xff]
    %v1453 = vld [vmem:[#allocation8 + $0x1f90] sm:$0xff]
    %v1454 = vld [vmem:[#allocation8 + $0x1f98] sm:$0xff]
    %v1455 = vld [vmem:[#allocation8 + $0x1fa0] sm:$0xff]
    %v1456 = vld [vmem:[#allocation8 + $0x1fa8] sm:$0xff]
    %v1457 = vld [vmem:[#allocation8 + $0x1fb0] sm:$0xff]
    %v1458 = vld [vmem:[#allocation8 + $0x1fb8] sm:$0xff]
    %v1459 = vld [vmem:[#allocation8 + $0x1fc0] sm:$0xff]
    %v1460 = vld [vmem:[#allocation8 + $0x1fc8] sm:$0xff]
    %v1461 = vld [vmem:[#allocation8 + $0x1fd0] sm:$0xff]
    %v1462 = vld [vmem:[#allocation8 + $0x1fd8] sm:$0xff]
    %v1463 = vld [vmem:[#allocation8 + $0x1fe0] sm:$0xff]
    %v1464 = vld [vmem:[#allocation8 + $0x1fe8] sm:$0xff]
    %v1465 = vld [vmem:[#allocation8 + $0x1ff0] sm:$0xff]
    %v1466 = vld [vmem:[#allocation8 + $0x1ff8] sm:$0xff]
    %v1467 = vld [vmem:[#allocation10] sm:$0xff]
    %v1469 = vperm.slane %v1467, 0
    %v1470 = vperm.slane %v1467, 1
    %v1471 = vperm.slane %v1467, 2
    %v1472 = vperm.slane %v1467, 3
    %v1473 = vperm.slane %v1467, 4
    %v1474 = vperm.slane %v1467, 5
    %v1475 = vperm.slane %v1467, 6
    %v1476 = vperm.slane %v1467, 7
    %1485 = vmatpush.msra.mxu0 %v563
    %1486 = vmatpush.msra.mxu0 %v555
    %1487 = vmatpush.msra.mxu0 %v547
    %1488 = vmatpush.msra.mxu0 %v539
    %1489 = vmatpush.msra.mxu0 %v531
    %1490 = vmatpush.msra.mxu0 %v523
    %1491 = vmatpush.msra.mxu0 %v515
    %1492 = vmatpush.msra.mxu0 %v507
    %1493 = vmatpush.msra.mxu0 %v499
    %1494 = vmatpush.msra.mxu0 %v491
    %1495 = vmatpush.msra.mxu0 %v483
    %1496 = vmatpush.msra.mxu0 %v475
    %1497 = vmatpush.msra.mxu0 %v467
    %1498 = vmatpush.msra.mxu0 %v459
    %1499 = vmatpush.msra.mxu0 %v451
    %1500 = vmatpush.msra.mxu0 %v443
    %1501 = vmatmul.f32.gmra.mxu0 %v435
    %v1502 = vpop.f32.mrf.mxu0
    %v1503 = vadd.f32 %v1469, %v1502
    %1504 = vdwg.mxu0
    %1505 = vmatpush.msra.mxu0 %v691
    %1506 = vmatpush.msra.mxu0 %v683
    %1507 = vmatpush.msra.mxu0 %v675
    %1508 = vmatpush.msra.mxu0 %v667
    %1509 = vmatpush.msra.mxu0 %v659
    %1510 = vmatpush.msra.mxu0 %v651
    %1511 = vmatpush.msra.mxu0 %v643
    %1512 = vmatpush.msra.mxu0 %v635
    %1513 = vmatpush.msra.mxu0 %v627
    %1514 = vmatpush.msra.mxu0 %v619
    %1515 = vmatpush.msra.mxu0 %v611
    %1516 = vmatpush.msra.mxu0 %v603
    %1517 = vmatpush.msra.mxu0 %v595
    %1518 = vmatpush.msra.mxu0 %v587
    %1519 = vmatpush.msra.mxu0 %v579
    %1520 = vmatpush.msra.mxu0 %v571
    %1521 = vmatmul.f32.gmra.mxu0 %v436
    %v1522 = vpop.f32.mrf.mxu0
    %v1523 = vadd.f32 %v1503, %v1522
    %1524 = vdwg.mxu0
    %1525 = vmatpush.msra.mxu0 %v819
    %1526 = vmatpush.msra.mxu0 %v811
    %1527 = vmatpush.msra.mxu0 %v803
    %1528 = vmatpush.msra.mxu0 %v795
    %1529 = vmatpush.msra.mxu0 %v787
    %1530 = vmatpush.msra.mxu0 %v779
    %1531 = vmatpush.msra.mxu0 %v771
    %1532 = vmatpush.msra.mxu0 %v763
    %1533 = vmatpush.msra.mxu0 %v755
    %1534 = vmatpush.msra.mxu0 %v747
    %1535 = vmatpush.msra.mxu0 %v739
    %1536 = vmatpush.msra.mxu0 %v731
    %1537 = vmatpush.msra.mxu0 %v723
    %1538 = vmatpush.msra.mxu0 %v715
    %1539 = vmatpush.msra.mxu0 %v707
    %1540 = vmatpush.msra.mxu0 %v699
    %1541 = vmatmul.f32.gmra.mxu0 %v437
    %v1542 = vpop.f32.mrf.mxu0
    %v1543 = vadd.f32 %v1523, %v1542
    %1544 = vdwg.mxu0
    %1545 = vmatpush.msra.mxu0 %v947
    %1546 = vmatpush.msra.mxu0 %v939
    %1547 = vmatpush.msra.mxu0 %v931
    %1548 = vmatpush.msra.mxu0 %v923
    %1549 = vmatpush.msra.mxu0 %v915
    %1550 = vmatpush.msra.mxu0 %v907
    %1551 = vmatpush.msra.mxu0 %v899
    %1552 = vmatpush.msra.mxu0 %v891
    %1553 = vmatpush.msra.mxu0 %v883
    %1554 = vmatpush.msra.mxu0 %v875
    %1555 = vmatpush.msra.mxu0 %v867
    %1556 = vmatpush.msra.mxu0 %v859
    %1557 = vmatpush.msra.mxu0 %v851
    %1558 = vmatpush.msra.mxu0 %v843
    %1559 = vmatpush.msra.mxu0 %v835
    %1560 = vmatpush.msra.mxu0 %v827
    %1561 = vmatmul.f32.gmra.mxu0 %v438
    %v1562 = vpop.f32.mrf.mxu0
    %v1563 = vadd.f32 %v1543, %v1562
    %1564 = vdwg.mxu0
    %1565 = vmatpush.msra.mxu0 %v1075
    %1566 = vmatpush.msra.mxu0 %v1067
    %1567 = vmatpush.msra.mxu0 %v1059
    %1568 = vmatpush.msra.mxu0 %v1051
    %1569 = vmatpush.msra.mxu0 %v1043
    %1570 = vmatpush.msra.mxu0 %v1035
    %1571 = vmatpush.msra.mxu0 %v1027
    %1572 = vmatpush.msra.mxu0 %v1019
    %1573 = vmatpush.msra.mxu0 %v1011
    %1574 = vmatpush.msra.mxu0 %v1003
    %1575 = vmatpush.msra.mxu0 %v995
    %1576 = vmatpush.msra.mxu0 %v987
    %1577 = vmatpush.msra.mxu0 %v979
    %1578 = vmatpush.msra.mxu0 %v971
    %1579 = vmatpush.msra.mxu0 %v963
    %1580 = vmatpush.msra.mxu0 %v955
    %1581 = vmatmul.f32.gmra.mxu0 %v439
    %v1582 = vpop.f32.mrf.mxu0
    %v1583 = vadd.f32 %v1563, %v1582
    %1584 = vdwg.mxu0
    %1585 = vmatpush.msra.mxu0 %v1203
    %1586 = vmatpush.msra.mxu0 %v1195
    %1587 = vmatpush.msra.mxu0 %v1187
    %1588 = vmatpush.msra.mxu0 %v1179
    %1589 = vmatpush.msra.mxu0 %v1171
    %1590 = vmatpush.msra.mxu0 %v1163
    %1591 = vmatpush.msra.mxu0 %v1155
    %1592 = vmatpush.msra.mxu0 %v1147
    %1593 = vmatpush.msra.mxu0 %v1139
    %1594 = vmatpush.msra.mxu0 %v1131
    %1595 = vmatpush.msra.mxu0 %v1123
    %1596 = vmatpush.msra.mxu0 %v1115
    %1597 = vmatpush.msra.mxu0 %v1107
    %1598 = vmatpush.msra.mxu0 %v1099
    %1599 = vmatpush.msra.mxu0 %v1091
    %1600 = vmatpush.msra.mxu0 %v1083
    %1601 = vmatmul.f32.gmra.mxu0 %v440
    %v1602 = vpop.f32.mrf.mxu0
    %v1603 = vadd.f32 %v1583, %v1602
    %1604 = vdwg.mxu0
    %1605 = vmatpush.msra.mxu0 %v1331
    %1606 = vmatpush.msra.mxu0 %v1323
    %1607 = vmatpush.msra.mxu0 %v1315
    %1608 = vmatpush.msra.mxu0 %v1307
    %1609 = vmatpush.msra.mxu0 %v1299
    %1610 = vmatpush.msra.mxu0 %v1291
    %1611 = vmatpush.msra.mxu0 %v1283
    %1612 = vmatpush.msra.mxu0 %v1275
    %1613 = vmatpush.msra.mxu0 %v1267
    %1614 = vmatpush.msra.mxu0 %v1259
    %1615 = vmatpush.msra.mxu0 %v1251
    %1616 = vmatpush.msra.mxu0 %v1243
    %1617 = vmatpush.msra.mxu0 %v1235
    %1618 = vmatpush.msra.mxu0 %v1227
    %1619 = vmatpush.msra.mxu0 %v1219
    %1620 = vmatpush.msra.mxu0 %v1211
    %1621 = vmatmul.f32.gmra.mxu0 %v441
    %v1622 = vpop.f32.mrf.mxu0
    %v1623 = vadd.f32 %v1603, %v1622
    %1624 = vdwg.mxu0
    %1625 = vmatpush.msra.mxu0 %v1459
    %1626 = vmatpush.msra.mxu0 %v1451
    %1627 = vmatpush.msra.mxu0 %v1443
    %1628 = vmatpush.msra.mxu0 %v1435
    %1629 = vmatpush.msra.mxu0 %v1427
    %1630 = vmatpush.msra.mxu0 %v1419
    %1631 = vmatpush.msra.mxu0 %v1411
    %1632 = vmatpush.msra.mxu0 %v1403
    %1633 = vmatpush.msra.mxu0 %v1395
    %1634 = vmatpush.msra.mxu0 %v1387
    %1635 = vmatpush.msra.mxu0 %v1379
    %1636 = vmatpush.msra.mxu0 %v1371
    %1637 = vmatpush.msra.mxu0 %v1363
    %1638 = vmatpush.msra.mxu0 %v1355
    %1639 = vmatpush.msra.mxu0 %v1347
    %1640 = vmatpush.msra.mxu0 %v1339
    %1641 = vmatmul.f32.gmra.mxu0 %v442
    %v1642 = vpop.f32.mrf.mxu0
    %v1643 = vadd.f32 %v1623, %v1642
    %1644 = vdwg.mxu0
    %1645 = vmatpush.msra.mxu0 %v564
    %1646 = vmatpush.msra.mxu0 %v556
    %1647 = vmatpush.msra.mxu0 %v548
    %1648 = vmatpush.msra.mxu0 %v540
    %1649 = vmatpush.msra.mxu0 %v532
    %1650 = vmatpush.msra.mxu0 %v524
    %1651 = vmatpush.msra.mxu0 %v516
    %1652 = vmatpush.msra.mxu0 %v508
    %1653 = vmatpush.msra.mxu0 %v500
    %1654 = vmatpush.msra.mxu0 %v492
    %1655 = vmatpush.msra.mxu0 %v484
    %1656 = vmatpush.msra.mxu0 %v476
    %1657 = vmatpush.msra.mxu0 %v468
    %1658 = vmatpush.msra.mxu0 %v460
    %1659 = vmatpush.msra.mxu0 %v452
    %1660 = vmatpush.msra.mxu0 %v444
    %1661 = vmatmul.f32.gmra.mxu0 %v435
    %v1662 = vpop.f32.mrf.mxu0
    %v1663 = vadd.f32 %v1470, %v1662
    %1664 = vdwg.mxu0
    %1665 = vmatpush.msra.mxu0 %v692
    %1666 = vmatpush.msra.mxu0 %v684
    %1667 = vmatpush.msra.mxu0 %v676
    %1668 = vmatpush.msra.mxu0 %v668
    %1669 = vmatpush.msra.mxu0 %v660
    %1670 = vmatpush.msra.mxu0 %v652
    %1671 = vmatpush.msra.mxu0 %v644
    %1672 = vmatpush.msra.mxu0 %v636
    %1673 = vmatpush.msra.mxu0 %v628
    %1674 = vmatpush.msra.mxu0 %v620
    %1675 = vmatpush.msra.mxu0 %v612
    %1676 = vmatpush.msra.mxu0 %v604
    %1677 = vmatpush.msra.mxu0 %v596
    %1678 = vmatpush.msra.mxu0 %v588
    %1679 = vmatpush.msra.mxu0 %v580
    %1680 = vmatpush.msra.mxu0 %v572
    %1681 = vmatmul.f32.gmra.mxu0 %v436
    %v1682 = vpop.f32.mrf.mxu0
    %v1683 = vadd.f32 %v1663, %v1682
    %1684 = vdwg.mxu0
    %1685 = vmatpush.msra.mxu0 %v820
    %1686 = vmatpush.msra.mxu0 %v812
    %1687 = vmatpush.msra.mxu0 %v804
    %1688 = vmatpush.msra.mxu0 %v796
    %1689 = vmatpush.msra.mxu0 %v788
    %1690 = vmatpush.msra.mxu0 %v780
    %1691 = vmatpush.msra.mxu0 %v772
    %1692 = vmatpush.msra.mxu0 %v764
    %1693 = vmatpush.msra.mxu0 %v756
    %1694 = vmatpush.msra.mxu0 %v748
    %1695 = vmatpush.msra.mxu0 %v740
    %1696 = vmatpush.msra.mxu0 %v732
    %1697 = vmatpush.msra.mxu0 %v724
    %1698 = vmatpush.msra.mxu0 %v716
    %1699 = vmatpush.msra.mxu0 %v708
    %1700 = vmatpush.msra.mxu0 %v700
    %1701 = vmatmul.f32.gmra.mxu0 %v437
    %v1702 = vpop.f32.mrf.mxu0
    %v1703 = vadd.f32 %v1683, %v1702
    %1704 = vdwg.mxu0
    %1705 = vmatpush.msra.mxu0 %v948
    %1706 = vmatpush.msra.mxu0 %v940
    %1707 = vmatpush.msra.mxu0 %v932
    %1708 = vmatpush.msra.mxu0 %v924
    %1709 = vmatpush.msra.mxu0 %v916
    %1710 = vmatpush.msra.mxu0 %v908
    %1711 = vmatpush.msra.mxu0 %v900
    %1712 = vmatpush.msra.mxu0 %v892
    %1713 = vmatpush.msra.mxu0 %v884
    %1714 = vmatpush.msra.mxu0 %v876
    %1715 = vmatpush.msra.mxu0 %v868
    %1716 = vmatpush.msra.mxu0 %v860
    %1717 = vmatpush.msra.mxu0 %v852
    %1718 = vmatpush.msra.mxu0 %v844
    %1719 = vmatpush.msra.mxu0 %v836
    %1720 = vmatpush.msra.mxu0 %v828
    %1721 = vmatmul.f32.gmra.mxu0 %v438
    %v1722 = vpop.f32.mrf.mxu0
    %v1723 = vadd.f32 %v1703, %v1722
    %1724 = vdwg.mxu0
    %1725 = vmatpush.msra.mxu0 %v1076
    %1726 = vmatpush.msra.mxu0 %v1068
    %1727 = vmatpush.msra.mxu0 %v1060
    %1728 = vmatpush.msra.mxu0 %v1052
    %1729 = vmatpush.msra.mxu0 %v1044
    %1730 = vmatpush.msra.mxu0 %v1036
    %1731 = vmatpush.msra.mxu0 %v1028
    %1732 = vmatpush.msra.mxu0 %v1020
    %1733 = vmatpush.msra.mxu0 %v1012
    %1734 = vmatpush.msra.mxu0 %v1004
    %1735 = vmatpush.msra.mxu0 %v996
    %1736 = vmatpush.msra.mxu0 %v988
    %1737 = vmatpush.msra.mxu0 %v980
    %1738 = vmatpush.msra.mxu0 %v972
    %1739 = vmatpush.msra.mxu0 %v964
    %1740 = vmatpush.msra.mxu0 %v956
    %1741 = vmatmul.f32.gmra.mxu0 %v439
    %v1742 = vpop.f32.mrf.mxu0
    %v1743 = vadd.f32 %v1723, %v1742
    %1744 = vdwg.mxu0
    %1745 = vmatpush.msra.mxu0 %v1204
    %1746 = vmatpush.msra.mxu0 %v1196
    %1747 = vmatpush.msra.mxu0 %v1188
    %1748 = vmatpush.msra.mxu0 %v1180
    %1749 = vmatpush.msra.mxu0 %v1172
    %1750 = vmatpush.msra.mxu0 %v1164
    %1751 = vmatpush.msra.mxu0 %v1156
    %1752 = vmatpush.msra.mxu0 %v1148
    %1753 = vmatpush.msra.mxu0 %v1140
    %1754 = vmatpush.msra.mxu0 %v1132
    %1755 = vmatpush.msra.mxu0 %v1124
    %1756 = vmatpush.msra.mxu0 %v1116
    %1757 = vmatpush.msra.mxu0 %v1108
    %1758 = vmatpush.msra.mxu0 %v1100
    %1759 = vmatpush.msra.mxu0 %v1092
    %1760 = vmatpush.msra.mxu0 %v1084
    %1761 = vmatmul.f32.gmra.mxu0 %v440
    %v1762 = vpop.f32.mrf.mxu0
    %v1763 = vadd.f32 %v1743, %v1762
    %1764 = vdwg.mxu0
    %1765 = vmatpush.msra.mxu0 %v1332
    %1766 = vmatpush.msra.mxu0 %v1324
    %1767 = vmatpush.msra.mxu0 %v1316
    %1768 = vmatpush.msra.mxu0 %v1308
    %1769 = vmatpush.msra.mxu0 %v1300
    %1770 = vmatpush.msra.mxu0 %v1292
    %1771 = vmatpush.msra.mxu0 %v1284
    %1772 = vmatpush.msra.mxu0 %v1276
    %1773 = vmatpush.msra.mxu0 %v1268
    %1774 = vmatpush.msra.mxu0 %v1260
    %1775 = vmatpush.msra.mxu0 %v1252
    %1776 = vmatpush.msra.mxu0 %v1244
    %1777 = vmatpush.msra.mxu0 %v1236
    %1778 = vmatpush.msra.mxu0 %v1228
    %1779 = vmatpush.msra.mxu0 %v1220
    %1780 = vmatpush.msra.mxu0 %v1212
    %1781 = vmatmul.f32.gmra.mxu0 %v441
    %v1782 = vpop.f32.mrf.mxu0
    %v1783 = vadd.f32 %v1763, %v1782
    %1784 = vdwg.mxu0
    %1785 = vmatpush.msra.mxu0 %v1460
    %1786 = vmatpush.msra.mxu0 %v1452
    %1787 = vmatpush.msra.mxu0 %v1444
    %1788 = vmatpush.msra.mxu0 %v1436
    %1789 = vmatpush.msra.mxu0 %v1428
    %1790 = vmatpush.msra.mxu0 %v1420
    %1791 = vmatpush.msra.mxu0 %v1412
    %1792 = vmatpush.msra.mxu0 %v1404
    %1793 = vmatpush.msra.mxu0 %v1396
    %1794 = vmatpush.msra.mxu0 %v1388
    %1795 = vmatpush.msra.mxu0 %v1380
    %1796 = vmatpush.msra.mxu0 %v1372
    %1797 = vmatpush.msra.mxu0 %v1364
    %1798 = vmatpush.msra.mxu0 %v1356
    %1799 = vmatpush.msra.mxu0 %v1348
    %1800 = vmatpush.msra.mxu0 %v1340
    %1801 = vmatmul.f32.gmra.mxu0 %v442
    %v1802 = vpop.f32.mrf.mxu0
    %v1803 = vadd.f32 %v1783, %v1802
    %1804 = vdwg.mxu0
    %1805 = vmatpush.msra.mxu0 %v565
    %1806 = vmatpush.msra.mxu0 %v557
    %1807 = vmatpush.msra.mxu0 %v549
    %1808 = vmatpush.msra.mxu0 %v541
    %1809 = vmatpush.msra.mxu0 %v533
    %1810 = vmatpush.msra.mxu0 %v525
    %1811 = vmatpush.msra.mxu0 %v517
    %1812 = vmatpush.msra.mxu0 %v509
    %1813 = vmatpush.msra.mxu0 %v501
    %1814 = vmatpush.msra.mxu0 %v493
    %1815 = vmatpush.msra.mxu0 %v485
    %1816 = vmatpush.msra.mxu0 %v477
    %1817 = vmatpush.msra.mxu0 %v469
    %1818 = vmatpush.msra.mxu0 %v461
    %1819 = vmatpush.msra.mxu0 %v453
    %1820 = vmatpush.msra.mxu0 %v445
    %1821 = vmatmul.f32.gmra.mxu0 %v435
    %v1822 = vpop.f32.mrf.mxu0
    %v1823 = vadd.f32 %v1471, %v1822
    %1824 = vdwg.mxu0
    %1825 = vmatpush.msra.mxu0 %v693
    %1826 = vmatpush.msra.mxu0 %v685
    %1827 = vmatpush.msra.mxu0 %v677
    %1828 = vmatpush.msra.mxu0 %v669
    %1829 = vmatpush.msra.mxu0 %v661
    %1830 = vmatpush.msra.mxu0 %v653
    %1831 = vmatpush.msra.mxu0 %v645
    %1832 = vmatpush.msra.mxu0 %v637
    %1833 = vmatpush.msra.mxu0 %v629
    %1834 = vmatpush.msra.mxu0 %v621
    %1835 = vmatpush.msra.mxu0 %v613
    %1836 = vmatpush.msra.mxu0 %v605
    %1837 = vmatpush.msra.mxu0 %v597
    %1838 = vmatpush.msra.mxu0 %v589
    %1839 = vmatpush.msra.mxu0 %v581
    %1840 = vmatpush.msra.mxu0 %v573
    %1841 = vmatmul.f32.gmra.mxu0 %v436
    %v1842 = vpop.f32.mrf.mxu0
    %v1843 = vadd.f32 %v1823, %v1842
    %1844 = vdwg.mxu0
    %1845 = vmatpush.msra.mxu0 %v821
    %1846 = vmatpush.msra.mxu0 %v813
    %1847 = vmatpush.msra.mxu0 %v805
    %1848 = vmatpush.msra.mxu0 %v797
    %1849 = vmatpush.msra.mxu0 %v789
    %1850 = vmatpush.msra.mxu0 %v781
    %1851 = vmatpush.msra.mxu0 %v773
    %1852 = vmatpush.msra.mxu0 %v765
    %1853 = vmatpush.msra.mxu0 %v757
    %1854 = vmatpush.msra.mxu0 %v749
    %1855 = vmatpush.msra.mxu0 %v741
    %1856 = vmatpush.msra.mxu0 %v733
    %1857 = vmatpush.msra.mxu0 %v725
    %1858 = vmatpush.msra.mxu0 %v717
    %1859 = vmatpush.msra.mxu0 %v709
    %1860 = vmatpush.msra.mxu0 %v701
    %1861 = vmatmul.f32.gmra.mxu0 %v437
    %v1862 = vpop.f32.mrf.mxu0
    %v1863 = vadd.f32 %v1843, %v1862
    %1864 = vdwg.mxu0
    %1865 = vmatpush.msra.mxu0 %v949
    %1866 = vmatpush.msra.mxu0 %v941
    %1867 = vmatpush.msra.mxu0 %v933
    %1868 = vmatpush.msra.mxu0 %v925
    %1869 = vmatpush.msra.mxu0 %v917
    %1870 = vmatpush.msra.mxu0 %v909
    %1871 = vmatpush.msra.mxu0 %v901
    %1872 = vmatpush.msra.mxu0 %v893
    %1873 = vmatpush.msra.mxu0 %v885
    %1874 = vmatpush.msra.mxu0 %v877
    %1875 = vmatpush.msra.mxu0 %v869
    %1876 = vmatpush.msra.mxu0 %v861
    %1877 = vmatpush.msra.mxu0 %v853
    %1878 = vmatpush.msra.mxu0 %v845
    %1879 = vmatpush.msra.mxu0 %v837
    %1880 = vmatpush.msra.mxu0 %v829
    %1881 = vmatmul.f32.gmra.mxu0 %v438
    %v1882 = vpop.f32.mrf.mxu0
    %v1883 = vadd.f32 %v1863, %v1882
    %1884 = vdwg.mxu0
    %1885 = vmatpush.msra.mxu0 %v1077
    %1886 = vmatpush.msra.mxu0 %v1069
    %1887 = vmatpush.msra.mxu0 %v1061
    %1888 = vmatpush.msra.mxu0 %v1053
    %1889 = vmatpush.msra.mxu0 %v1045
    %1890 = vmatpush.msra.mxu0 %v1037
    %1891 = vmatpush.msra.mxu0 %v1029
    %1892 = vmatpush.msra.mxu0 %v1021
    %1893 = vmatpush.msra.mxu0 %v1013
    %1894 = vmatpush.msra.mxu0 %v1005
    %1895 = vmatpush.msra.mxu0 %v997
    %1896 = vmatpush.msra.mxu0 %v989
    %1897 = vmatpush.msra.mxu0 %v981
    %1898 = vmatpush.msra.mxu0 %v973
    %1899 = vmatpush.msra.mxu0 %v965
    %1900 = vmatpush.msra.mxu0 %v957
    %1901 = vmatmul.f32.gmra.mxu0 %v439
    %v1902 = vpop.f32.mrf.mxu0
    %v1903 = vadd.f32 %v1883, %v1902
    %1904 = vdwg.mxu0
    %1905 = vmatpush.msra.mxu0 %v1205
    %1906 = vmatpush.msra.mxu0 %v1197
    %1907 = vmatpush.msra.mxu0 %v1189
    %1908 = vmatpush.msra.mxu0 %v1181
    %1909 = vmatpush.msra.mxu0 %v1173
    %1910 = vmatpush.msra.mxu0 %v1165
    %1911 = vmatpush.msra.mxu0 %v1157
    %1912 = vmatpush.msra.mxu0 %v1149
    %1913 = vmatpush.msra.mxu0 %v1141
    %1914 = vmatpush.msra.mxu0 %v1133
    %1915 = vmatpush.msra.mxu0 %v1125
    %1916 = vmatpush.msra.mxu0 %v1117
    %1917 = vmatpush.msra.mxu0 %v1109
    %1918 = vmatpush.msra.mxu0 %v1101
    %1919 = vmatpush.msra.mxu0 %v1093
    %1920 = vmatpush.msra.mxu0 %v1085
    %1921 = vmatmul.f32.gmra.mxu0 %v440
    %v1922 = vpop.f32.mrf.mxu0
    %v1923 = vadd.f32 %v1903, %v1922
    %1924 = vdwg.mxu0
    %1925 = vmatpush.msra.mxu0 %v1333
    %1926 = vmatpush.msra.mxu0 %v1325
    %1927 = vmatpush.msra.mxu0 %v1317
    %1928 = vmatpush.msra.mxu0 %v1309
    %1929 = vmatpush.msra.mxu0 %v1301
    %1930 = vmatpush.msra.mxu0 %v1293
    %1931 = vmatpush.msra.mxu0 %v1285
    %1932 = vmatpush.msra.mxu0 %v1277
    %1933 = vmatpush.msra.mxu0 %v1269
    %1934 = vmatpush.msra.mxu0 %v1261
    %1935 = vmatpush.msra.mxu0 %v1253
    %1936 = vmatpush.msra.mxu0 %v1245
    %1937 = vmatpush.msra.mxu0 %v1237
    %1938 = vmatpush.msra.mxu0 %v1229
    %1939 = vmatpush.msra.mxu0 %v1221
    %1940 = vmatpush.msra.mxu0 %v1213
    %1941 = vmatmul.f32.gmra.mxu0 %v441
    %v1942 = vpop.f32.mrf.mxu0
    %v1943 = vadd.f32 %v1923, %v1942
    %1944 = vdwg.mxu0
    %1945 = vmatpush.msra.mxu0 %v1461
    %1946 = vmatpush.msra.mxu0 %v1453
    %1947 = vmatpush.msra.mxu0 %v1445
    %1948 = vmatpush.msra.mxu0 %v1437
    %1949 = vmatpush.msra.mxu0 %v1429
    %1950 = vmatpush.msra.mxu0 %v1421
    %1951 = vmatpush.msra.mxu0 %v1413
    %1952 = vmatpush.msra.mxu0 %v1405
    %1953 = vmatpush.msra.mxu0 %v1397
    %1954 = vmatpush.msra.mxu0 %v1389
    %1955 = vmatpush.msra.mxu0 %v1381
    %1956 = vmatpush.msra.mxu0 %v1373
    %1957 = vmatpush.msra.mxu0 %v1365
    %1958 = vmatpush.msra.mxu0 %v1357
    %1959 = vmatpush.msra.mxu0 %v1349
    %1960 = vmatpush.msra.mxu0 %v1341
    %1961 = vmatmul.f32.gmra.mxu0 %v442
    %v1962 = vpop.f32.mrf.mxu0
    %v1963 = vadd.f32 %v1943, %v1962
    %1964 = vdwg.mxu0
    %1965 = vmatpush.msra.mxu0 %v566
    %1966 = vmatpush.msra.mxu0 %v558
    %1967 = vmatpush.msra.mxu0 %v550
    %1968 = vmatpush.msra.mxu0 %v542
    %1969 = vmatpush.msra.mxu0 %v534
    %1970 = vmatpush.msra.mxu0 %v526
    %1971 = vmatpush.msra.mxu0 %v518
    %1972 = vmatpush.msra.mxu0 %v510
    %1973 = vmatpush.msra.mxu0 %v502
    %1974 = vmatpush.msra.mxu0 %v494
    %1975 = vmatpush.msra.mxu0 %v486
    %1976 = vmatpush.msra.mxu0 %v478
    %1977 = vmatpush.msra.mxu0 %v470
    %1978 = vmatpush.msra.mxu0 %v462
    %1979 = vmatpush.msra.mxu0 %v454
    %1980 = vmatpush.msra.mxu0 %v446
    %1981 = vmatmul.f32.gmra.mxu0 %v435
    %v1982 = vpop.f32.mrf.mxu0
    %v1983 = vadd.f32 %v1472, %v1982
    %1984 = vdwg.mxu0
    %1985 = vmatpush.msra.mxu0 %v694
    %1986 = vmatpush.msra.mxu0 %v686
    %1987 = vmatpush.msra.mxu0 %v678
    %1988 = vmatpush.msra.mxu0 %v670
    %1989 = vmatpush.msra.mxu0 %v662
    %1990 = vmatpush.msra.mxu0 %v654
    %1991 = vmatpush.msra.mxu0 %v646
    %1992 = vmatpush.msra.mxu0 %v638
    %1993 = vmatpush.msra.mxu0 %v630
    %1994 = vmatpush.msra.mxu0 %v622
    %1995 = vmatpush.msra.mxu0 %v614
    %1996 = vmatpush.msra.mxu0 %v606
    %1997 = vmatpush.msra.mxu0 %v598
    %1998 = vmatpush.msra.mxu0 %v590
    %1999 = vmatpush.msra.mxu0 %v582
    %2000 = vmatpush.msra.mxu0 %v574
    %2001 = vmatmul.f32.gmra.mxu0 %v436
    %v2002 = vpop.f32.mrf.mxu0
    %v2003 = vadd.f32 %v1983, %v2002
    %2004 = vdwg.mxu0
    %2005 = vmatpush.msra.mxu0 %v822
    %2006 = vmatpush.msra.mxu0 %v814
    %2007 = vmatpush.msra.mxu0 %v806
    %2008 = vmatpush.msra.mxu0 %v798
    %2009 = vmatpush.msra.mxu0 %v790
    %2010 = vmatpush.msra.mxu0 %v782
    %2011 = vmatpush.msra.mxu0 %v774
    %2012 = vmatpush.msra.mxu0 %v766
    %2013 = vmatpush.msra.mxu0 %v758
    %2014 = vmatpush.msra.mxu0 %v750
    %2015 = vmatpush.msra.mxu0 %v742
    %2016 = vmatpush.msra.mxu0 %v734
    %2017 = vmatpush.msra.mxu0 %v726
    %2018 = vmatpush.msra.mxu0 %v718
    %2019 = vmatpush.msra.mxu0 %v710
    %2020 = vmatpush.msra.mxu0 %v702
    %2021 = vmatmul.f32.gmra.mxu0 %v437
    %v2022 = vpop.f32.mrf.mxu0
    %v2023 = vadd.f32 %v2003, %v2022
    %2024 = vdwg.mxu0
    %2025 = vmatpush.msra.mxu0 %v950
    %2026 = vmatpush.msra.mxu0 %v942
    %2027 = vmatpush.msra.mxu0 %v934
    %2028 = vmatpush.msra.mxu0 %v926
    %2029 = vmatpush.msra.mxu0 %v918
    %2030 = vmatpush.msra.mxu0 %v910
    %2031 = vmatpush.msra.mxu0 %v902
    %2032 = vmatpush.msra.mxu0 %v894
    %2033 = vmatpush.msra.mxu0 %v886
    %2034 = vmatpush.msra.mxu0 %v878
    %2035 = vmatpush.msra.mxu0 %v870
    %2036 = vmatpush.msra.mxu0 %v862
    %2037 = vmatpush.msra.mxu0 %v854
    %2038 = vmatpush.msra.mxu0 %v846
    %2039 = vmatpush.msra.mxu0 %v838
    %2040 = vmatpush.msra.mxu0 %v830
    %2041 = vmatmul.f32.gmra.mxu0 %v438
    %v2042 = vpop.f32.mrf.mxu0
    %v2043 = vadd.f32 %v2023, %v2042
    %2044 = vdwg.mxu0
    %2045 = vmatpush.msra.mxu0 %v1078
    %2046 = vmatpush.msra.mxu0 %v1070
    %2047 = vmatpush.msra.mxu0 %v1062
    %2048 = vmatpush.msra.mxu0 %v1054
    %2049 = vmatpush.msra.mxu0 %v1046
    %2050 = vmatpush.msra.mxu0 %v1038
    %2051 = vmatpush.msra.mxu0 %v1030
    %2052 = vmatpush.msra.mxu0 %v1022
    %2053 = vmatpush.msra.mxu0 %v1014
    %2054 = vmatpush.msra.mxu0 %v1006
    %2055 = vmatpush.msra.mxu0 %v998
    %2056 = vmatpush.msra.mxu0 %v990
    %2057 = vmatpush.msra.mxu0 %v982
    %2058 = vmatpush.msra.mxu0 %v974
    %2059 = vmatpush.msra.mxu0 %v966
    %2060 = vmatpush.msra.mxu0 %v958
    %2061 = vmatmul.f32.gmra.mxu0 %v439
    %v2062 = vpop.f32.mrf.mxu0
    %v2063 = vadd.f32 %v2043, %v2062
    %2064 = vdwg.mxu0
    %2065 = vmatpush.msra.mxu0 %v1206
    %2066 = vmatpush.msra.mxu0 %v1198
    %2067 = vmatpush.msra.mxu0 %v1190
    %2068 = vmatpush.msra.mxu0 %v1182
    %2069 = vmatpush.msra.mxu0 %v1174
    %2070 = vmatpush.msra.mxu0 %v1166
    %2071 = vmatpush.msra.mxu0 %v1158
    %2072 = vmatpush.msra.mxu0 %v1150
    %2073 = vmatpush.msra.mxu0 %v1142
    %2074 = vmatpush.msra.mxu0 %v1134
    %2075 = vmatpush.msra.mxu0 %v1126
    %2076 = vmatpush.msra.mxu0 %v1118
    %2077 = vmatpush.msra.mxu0 %v1110
    %2078 = vmatpush.msra.mxu0 %v1102
    %2079 = vmatpush.msra.mxu0 %v1094
    %2080 = vmatpush.msra.mxu0 %v1086
    %2081 = vmatmul.f32.gmra.mxu0 %v440
    %v2082 = vpop.f32.mrf.mxu0
    %v2083 = vadd.f32 %v2063, %v2082
    %2084 = vdwg.mxu0
    %2085 = vmatpush.msra.mxu0 %v1334
    %2086 = vmatpush.msra.mxu0 %v1326
    %2087 = vmatpush.msra.mxu0 %v1318
    %2088 = vmatpush.msra.mxu0 %v1310
    %2089 = vmatpush.msra.mxu0 %v1302
    %2090 = vmatpush.msra.mxu0 %v1294
    %2091 = vmatpush.msra.mxu0 %v1286
    %2092 = vmatpush.msra.mxu0 %v1278
    %2093 = vmatpush.msra.mxu0 %v1270
    %2094 = vmatpush.msra.mxu0 %v1262
    %2095 = vmatpush.msra.mxu0 %v1254
    %2096 = vmatpush.msra.mxu0 %v1246
    %2097 = vmatpush.msra.mxu0 %v1238
    %2098 = vmatpush.msra.mxu0 %v1230
    %2099 = vmatpush.msra.mxu0 %v1222
    %2100 = vmatpush.msra.mxu0 %v1214
    %2101 = vmatmul.f32.gmra.mxu0 %v441
    %v2102 = vpop.f32.mrf.mxu0
    %v2103 = vadd.f32 %v2083, %v2102
    %2104 = vdwg.mxu0
    %2105 = vmatpush.msra.mxu0 %v1462
    %2106 = vmatpush.msra.mxu0 %v1454
    %2107 = vmatpush.msra.mxu0 %v1446
    %2108 = vmatpush.msra.mxu0 %v1438
    %2109 = vmatpush.msra.mxu0 %v1430
    %2110 = vmatpush.msra.mxu0 %v1422
    %2111 = vmatpush.msra.mxu0 %v1414
    %2112 = vmatpush.msra.mxu0 %v1406
    %2113 = vmatpush.msra.mxu0 %v1398
    %2114 = vmatpush.msra.mxu0 %v1390
    %2115 = vmatpush.msra.mxu0 %v1382
    %2116 = vmatpush.msra.mxu0 %v1374
    %2117 = vmatpush.msra.mxu0 %v1366
    %2118 = vmatpush.msra.mxu0 %v1358
    %2119 = vmatpush.msra.mxu0 %v1350
    %2120 = vmatpush.msra.mxu0 %v1342
    %2121 = vmatmul.f32.gmra.mxu0 %v442
    %v2122 = vpop.f32.mrf.mxu0
    %v2123 = vadd.f32 %v2103, %v2122
    %2124 = vdwg.mxu0
    %2125 = vmatpush.msra.mxu0 %v567
    %2126 = vmatpush.msra.mxu0 %v559
    %2127 = vmatpush.msra.mxu0 %v551
    %2128 = vmatpush.msra.mxu0 %v543
    %2129 = vmatpush.msra.mxu0 %v535
    %2130 = vmatpush.msra.mxu0 %v527
    %2131 = vmatpush.msra.mxu0 %v519
    %2132 = vmatpush.msra.mxu0 %v511
    %2133 = vmatpush.msra.mxu0 %v503
    %2134 = vmatpush.msra.mxu0 %v495
    %2135 = vmatpush.msra.mxu0 %v487
    %2136 = vmatpush.msra.mxu0 %v479
    %2137 = vmatpush.msra.mxu0 %v471
    %2138 = vmatpush.msra.mxu0 %v463
    %2139 = vmatpush.msra.mxu0 %v455
    %2140 = vmatpush.msra.mxu0 %v447
    %2141 = vmatmul.f32.gmra.mxu0 %v435
    %v2142 = vpop.f32.mrf.mxu0
    %v2143 = vadd.f32 %v1473, %v2142
    %2144 = vdwg.mxu0
    %2145 = vmatpush.msra.mxu0 %v695
    %2146 = vmatpush.msra.mxu0 %v687
    %2147 = vmatpush.msra.mxu0 %v679
    %2148 = vmatpush.msra.mxu0 %v671
    %2149 = vmatpush.msra.mxu0 %v663
    %2150 = vmatpush.msra.mxu0 %v655
    %2151 = vmatpush.msra.mxu0 %v647
    %2152 = vmatpush.msra.mxu0 %v639
    %2153 = vmatpush.msra.mxu0 %v631
    %2154 = vmatpush.msra.mxu0 %v623
    %2155 = vmatpush.msra.mxu0 %v615
    %2156 = vmatpush.msra.mxu0 %v607
    %2157 = vmatpush.msra.mxu0 %v599
    %2158 = vmatpush.msra.mxu0 %v591
    %2159 = vmatpush.msra.mxu0 %v583
    %2160 = vmatpush.msra.mxu0 %v575
    %2161 = vmatmul.f32.gmra.mxu0 %v436
    %v2162 = vpop.f32.mrf.mxu0
    %v2163 = vadd.f32 %v2143, %v2162
    %2164 = vdwg.mxu0
    %2165 = vmatpush.msra.mxu0 %v823
    %2166 = vmatpush.msra.mxu0 %v815
    %2167 = vmatpush.msra.mxu0 %v807
    %2168 = vmatpush.msra.mxu0 %v799
    %2169 = vmatpush.msra.mxu0 %v791
    %2170 = vmatpush.msra.mxu0 %v783
    %2171 = vmatpush.msra.mxu0 %v775
    %2172 = vmatpush.msra.mxu0 %v767
    %2173 = vmatpush.msra.mxu0 %v759
    %2174 = vmatpush.msra.mxu0 %v751
    %2175 = vmatpush.msra.mxu0 %v743
    %2176 = vmatpush.msra.mxu0 %v735
    %2177 = vmatpush.msra.mxu0 %v727
    %2178 = vmatpush.msra.mxu0 %v719
    %2179 = vmatpush.msra.mxu0 %v711
    %2180 = vmatpush.msra.mxu0 %v703
    %2181 = vmatmul.f32.gmra.mxu0 %v437
    %v2182 = vpop.f32.mrf.mxu0
    %v2183 = vadd.f32 %v2163, %v2182
    %2184 = vdwg.mxu0
    %2185 = vmatpush.msra.mxu0 %v951
    %2186 = vmatpush.msra.mxu0 %v943
    %2187 = vmatpush.msra.mxu0 %v935
    %2188 = vmatpush.msra.mxu0 %v927
    %2189 = vmatpush.msra.mxu0 %v919
    %2190 = vmatpush.msra.mxu0 %v911
    %2191 = vmatpush.msra.mxu0 %v903
    %2192 = vmatpush.msra.mxu0 %v895
    %2193 = vmatpush.msra.mxu0 %v887
    %2194 = vmatpush.msra.mxu0 %v879
    %2195 = vmatpush.msra.mxu0 %v871
    %2196 = vmatpush.msra.mxu0 %v863
    %2197 = vmatpush.msra.mxu0 %v855
    %2198 = vmatpush.msra.mxu0 %v847
    %2199 = vmatpush.msra.mxu0 %v839
    %2200 = vmatpush.msra.mxu0 %v831
    %2201 = vmatmul.f32.gmra.mxu0 %v438
    %v2202 = vpop.f32.mrf.mxu0
    %v2203 = vadd.f32 %v2183, %v2202
    %2204 = vdwg.mxu0
    %2205 = vmatpush.msra.mxu0 %v1079
    %2206 = vmatpush.msra.mxu0 %v1071
    %2207 = vmatpush.msra.mxu0 %v1063
    %2208 = vmatpush.msra.mxu0 %v1055
    %2209 = vmatpush.msra.mxu0 %v1047
    %2210 = vmatpush.msra.mxu0 %v1039
    %2211 = vmatpush.msra.mxu0 %v1031
    %2212 = vmatpush.msra.mxu0 %v1023
    %2213 = vmatpush.msra.mxu0 %v1015
    %2214 = vmatpush.msra.mxu0 %v1007
    %2215 = vmatpush.msra.mxu0 %v999
    %2216 = vmatpush.msra.mxu0 %v991
    %2217 = vmatpush.msra.mxu0 %v983
    %2218 = vmatpush.msra.mxu0 %v975
    %2219 = vmatpush.msra.mxu0 %v967
    %2220 = vmatpush.msra.mxu0 %v959
    %2221 = vmatmul.f32.gmra.mxu0 %v439
    %v2222 = vpop.f32.mrf.mxu0
    %v2223 = vadd.f32 %v2203, %v2222
    %2224 = vdwg.mxu0
    %2225 = vmatpush.msra.mxu0 %v1207
    %2226 = vmatpush.msra.mxu0 %v1199
    %2227 = vmatpush.msra.mxu0 %v1191
    %2228 = vmatpush.msra.mxu0 %v1183
    %2229 = vmatpush.msra.mxu0 %v1175
    %2230 = vmatpush.msra.mxu0 %v1167
    %2231 = vmatpush.msra.mxu0 %v1159
    %2232 = vmatpush.msra.mxu0 %v1151
    %2233 = vmatpush.msra.mxu0 %v1143
    %2234 = vmatpush.msra.mxu0 %v1135
    %2235 = vmatpush.msra.mxu0 %v1127
    %2236 = vmatpush.msra.mxu0 %v1119
    %2237 = vmatpush.msra.mxu0 %v1111
    %2238 = vmatpush.msra.mxu0 %v1103
    %2239 = vmatpush.msra.mxu0 %v1095
    %2240 = vmatpush.msra.mxu0 %v1087
    %2241 = vmatmul.f32.gmra.mxu0 %v440
    %v2242 = vpop.f32.mrf.mxu0
    %v2243 = vadd.f32 %v2223, %v2242
    %2244 = vdwg.mxu0
    %2245 = vmatpush.msra.mxu0 %v1335
    %2246 = vmatpush.msra.mxu0 %v1327
    %2247 = vmatpush.msra.mxu0 %v1319
    %2248 = vmatpush.msra.mxu0 %v1311
    %2249 = vmatpush.msra.mxu0 %v1303
    %2250 = vmatpush.msra.mxu0 %v1295
    %2251 = vmatpush.msra.mxu0 %v1287
    %2252 = vmatpush.msra.mxu0 %v1279
    %2253 = vmatpush.msra.mxu0 %v1271
    %2254 = vmatpush.msra.mxu0 %v1263
    %2255 = vmatpush.msra.mxu0 %v1255
    %2256 = vmatpush.msra.mxu0 %v1247
    %2257 = vmatpush.msra.mxu0 %v1239
    %2258 = vmatpush.msra.mxu0 %v1231
    %2259 = vmatpush.msra.mxu0 %v1223
    %2260 = vmatpush.msra.mxu0 %v1215
    %2261 = vmatmul.f32.gmra.mxu0 %v441
    %v2262 = vpop.f32.mrf.mxu0
    %v2263 = vadd.f32 %v2243, %v2262
    %2264 = vdwg.mxu0
    %2265 = vmatpush.msra.mxu0 %v1463
    %2266 = vmatpush.msra.mxu0 %v1455
    %2267 = vmatpush.msra.mxu0 %v1447
    %2268 = vmatpush.msra.mxu0 %v1439
    %2269 = vmatpush.msra.mxu0 %v1431
    %2270 = vmatpush.msra.mxu0 %v1423
    %2271 = vmatpush.msra.mxu0 %v1415
    %2272 = vmatpush.msra.mxu0 %v1407
    %2273 = vmatpush.msra.mxu0 %v1399
    %2274 = vmatpush.msra.mxu0 %v1391
    %2275 = vmatpush.msra.mxu0 %v1383
    %2276 = vmatpush.msra.mxu0 %v1375
    %2277 = vmatpush.msra.mxu0 %v1367
    %2278 = vmatpush.msra.mxu0 %v1359
    %2279 = vmatpush.msra.mxu0 %v1351
    %2280 = vmatpush.msra.mxu0 %v1343
    %2281 = vmatmul.f32.gmra.mxu0 %v442
    %v2282 = vpop.f32.mrf.mxu0
    %v2283 = vadd.f32 %v2263, %v2282
    %2284 = vdwg.mxu0
    %2285 = vmatpush.msra.mxu0 %v568
    %2286 = vmatpush.msra.mxu0 %v560
    %2287 = vmatpush.msra.mxu0 %v552
    %2288 = vmatpush.msra.mxu0 %v544
    %2289 = vmatpush.msra.mxu0 %v536
    %2290 = vmatpush.msra.mxu0 %v528
    %2291 = vmatpush.msra.mxu0 %v520
    %2292 = vmatpush.msra.mxu0 %v512
    %2293 = vmatpush.msra.mxu0 %v504
    %2294 = vmatpush.msra.mxu0 %v496
    %2295 = vmatpush.msra.mxu0 %v488
    %2296 = vmatpush.msra.mxu0 %v480
    %2297 = vmatpush.msra.mxu0 %v472
    %2298 = vmatpush.msra.mxu0 %v464
    %2299 = vmatpush.msra.mxu0 %v456
    %2300 = vmatpush.msra.mxu0 %v448
    %2301 = vmatmul.f32.gmra.mxu0 %v435
    %v2302 = vpop.f32.mrf.mxu0
    %v2303 = vadd.f32 %v1474, %v2302
    %2304 = vdwg.mxu0
    %2305 = vmatpush.msra.mxu0 %v696
    %2306 = vmatpush.msra.mxu0 %v688
    %2307 = vmatpush.msra.mxu0 %v680
    %2308 = vmatpush.msra.mxu0 %v672
    %2309 = vmatpush.msra.mxu0 %v664
    %2310 = vmatpush.msra.mxu0 %v656
    %2311 = vmatpush.msra.mxu0 %v648
    %2312 = vmatpush.msra.mxu0 %v640
    %2313 = vmatpush.msra.mxu0 %v632
    %2314 = vmatpush.msra.mxu0 %v624
    %2315 = vmatpush.msra.mxu0 %v616
    %2316 = vmatpush.msra.mxu0 %v608
    %2317 = vmatpush.msra.mxu0 %v600
    %2318 = vmatpush.msra.mxu0 %v592
    %2319 = vmatpush.msra.mxu0 %v584
    %2320 = vmatpush.msra.mxu0 %v576
    %2321 = vmatmul.f32.gmra.mxu0 %v436
    %v2322 = vpop.f32.mrf.mxu0
    %v2323 = vadd.f32 %v2303, %v2322
    %2324 = vdwg.mxu0
    %2325 = vmatpush.msra.mxu0 %v824
    %2326 = vmatpush.msra.mxu0 %v816
    %2327 = vmatpush.msra.mxu0 %v808
    %2328 = vmatpush.msra.mxu0 %v800
    %2329 = vmatpush.msra.mxu0 %v792
    %2330 = vmatpush.msra.mxu0 %v784
    %2331 = vmatpush.msra.mxu0 %v776
    %2332 = vmatpush.msra.mxu0 %v768
    %2333 = vmatpush.msra.mxu0 %v760
    %2334 = vmatpush.msra.mxu0 %v752
    %2335 = vmatpush.msra.mxu0 %v744
    %2336 = vmatpush.msra.mxu0 %v736
    %2337 = vmatpush.msra.mxu0 %v728
    %2338 = vmatpush.msra.mxu0 %v720
    %2339 = vmatpush.msra.mxu0 %v712
    %2340 = vmatpush.msra.mxu0 %v704
    %2341 = vmatmul.f32.gmra.mxu0 %v437
    %v2342 = vpop.f32.mrf.mxu0
    %v2343 = vadd.f32 %v2323, %v2342
    %2344 = vdwg.mxu0
    %2345 = vmatpush.msra.mxu0 %v952
    %2346 = vmatpush.msra.mxu0 %v944
    %2347 = vmatpush.msra.mxu0 %v936
    %2348 = vmatpush.msra.mxu0 %v928
    %2349 = vmatpush.msra.mxu0 %v920
    %2350 = vmatpush.msra.mxu0 %v912
    %2351 = vmatpush.msra.mxu0 %v904
    %2352 = vmatpush.msra.mxu0 %v896
    %2353 = vmatpush.msra.mxu0 %v888
    %2354 = vmatpush.msra.mxu0 %v880
    %2355 = vmatpush.msra.mxu0 %v872
    %2356 = vmatpush.msra.mxu0 %v864
    %2357 = vmatpush.msra.mxu0 %v856
    %2358 = vmatpush.msra.mxu0 %v848
    %2359 = vmatpush.msra.mxu0 %v840
    %2360 = vmatpush.msra.mxu0 %v832
    %2361 = vmatmul.f32.gmra.mxu0 %v438
    %v2362 = vpop.f32.mrf.mxu0
    %v2363 = vadd.f32 %v2343, %v2362
    %2364 = vdwg.mxu0
    %2365 = vmatpush.msra.mxu0 %v1080
    %2366 = vmatpush.msra.mxu0 %v1072
    %2367 = vmatpush.msra.mxu0 %v1064
    %2368 = vmatpush.msra.mxu0 %v1056
    %2369 = vmatpush.msra.mxu0 %v1048
    %2370 = vmatpush.msra.mxu0 %v1040
    %2371 = vmatpush.msra.mxu0 %v1032
    %2372 = vmatpush.msra.mxu0 %v1024
    %2373 = vmatpush.msra.mxu0 %v1016
    %2374 = vmatpush.msra.mxu0 %v1008
    %2375 = vmatpush.msra.mxu0 %v1000
    %2376 = vmatpush.msra.mxu0 %v992
    %2377 = vmatpush.msra.mxu0 %v984
    %2378 = vmatpush.msra.mxu0 %v976
    %2379 = vmatpush.msra.mxu0 %v968
    %2380 = vmatpush.msra.mxu0 %v960
    %2381 = vmatmul.f32.gmra.mxu0 %v439
    %v2382 = vpop.f32.mrf.mxu0
    %v2383 = vadd.f32 %v2363, %v2382
    %2384 = vdwg.mxu0
    %2385 = vmatpush.msra.mxu0 %v1208
    %2386 = vmatpush.msra.mxu0 %v1200
    %2387 = vmatpush.msra.mxu0 %v1192
    %2388 = vmatpush.msra.mxu0 %v1184
    %2389 = vmatpush.msra.mxu0 %v1176
    %2390 = vmatpush.msra.mxu0 %v1168
    %2391 = vmatpush.msra.mxu0 %v1160
    %2392 = vmatpush.msra.mxu0 %v1152
    %2393 = vmatpush.msra.mxu0 %v1144
    %2394 = vmatpush.msra.mxu0 %v1136
    %2395 = vmatpush.msra.mxu0 %v1128
    %2396 = vmatpush.msra.mxu0 %v1120
    %2397 = vmatpush.msra.mxu0 %v1112
    %2398 = vmatpush.msra.mxu0 %v1104
    %2399 = vmatpush.msra.mxu0 %v1096
    %2400 = vmatpush.msra.mxu0 %v1088
    %2401 = vmatmul.f32.gmra.mxu0 %v440
    %v2402 = vpop.f32.mrf.mxu0
    %v2403 = vadd.f32 %v2383, %v2402
    %2404 = vdwg.mxu0
    %2405 = vmatpush.msra.mxu0 %v1336
    %2406 = vmatpush.msra.mxu0 %v1328
    %2407 = vmatpush.msra.mxu0 %v1320
    %2408 = vmatpush.msra.mxu0 %v1312
    %2409 = vmatpush.msra.mxu0 %v1304
    %2410 = vmatpush.msra.mxu0 %v1296
    %2411 = vmatpush.msra.mxu0 %v1288
    %2412 = vmatpush.msra.mxu0 %v1280
    %2413 = vmatpush.msra.mxu0 %v1272
    %2414 = vmatpush.msra.mxu0 %v1264
    %2415 = vmatpush.msra.mxu0 %v1256
    %2416 = vmatpush.msra.mxu0 %v1248
    %2417 = vmatpush.msra.mxu0 %v1240
    %2418 = vmatpush.msra.mxu0 %v1232
    %2419 = vmatpush.msra.mxu0 %v1224
    %2420 = vmatpush.msra.mxu0 %v1216
    %2421 = vmatmul.f32.gmra.mxu0 %v441
    %v2422 = vpop.f32.mrf.mxu0
    %v2423 = vadd.f32 %v2403, %v2422
    %2424 = vdwg.mxu0
    %2425 = vmatpush.msra.mxu0 %v1464
    %2426 = vmatpush.msra.mxu0 %v1456
    %2427 = vmatpush.msra.mxu0 %v1448
    %2428 = vmatpush.msra.mxu0 %v1440
    %2429 = vmatpush.msra.mxu0 %v1432
    %2430 = vmatpush.msra.mxu0 %v1424
    %2431 = vmatpush.msra.mxu0 %v1416
    %2432 = vmatpush.msra.mxu0 %v1408
    %2433 = vmatpush.msra.mxu0 %v1400
    %2434 = vmatpush.msra.mxu0 %v1392
    %2435 = vmatpush.msra.mxu0 %v1384
    %2436 = vmatpush.msra.mxu0 %v1376
    %2437 = vmatpush.msra.mxu0 %v1368
    %2438 = vmatpush.msra.mxu0 %v1360
    %2439 = vmatpush.msra.mxu0 %v1352
    %2440 = vmatpush.msra.mxu0 %v1344
    %2441 = vmatmul.f32.gmra.mxu0 %v442
    %v2442 = vpop.f32.mrf.mxu0
    %v2443 = vadd.f32 %v2423, %v2442
    %2444 = vdwg.mxu0
    %2445 = vmatpush.msra.mxu0 %v569
    %2446 = vmatpush.msra.mxu0 %v561
    %2447 = vmatpush.msra.mxu0 %v553
    %2448 = vmatpush.msra.mxu0 %v545
    %2449 = vmatpush.msra.mxu0 %v537
    %2450 = vmatpush.msra.mxu0 %v529
    %2451 = vmatpush.msra.mxu0 %v521
    %2452 = vmatpush.msra.mxu0 %v513
    %2453 = vmatpush.msra.mxu0 %v505
    %2454 = vmatpush.msra.mxu0 %v497
    %2455 = vmatpush.msra.mxu0 %v489
    %2456 = vmatpush.msra.mxu0 %v481
    %2457 = vmatpush.msra.mxu0 %v473
    %2458 = vmatpush.msra.mxu0 %v465
    %2459 = vmatpush.msra.mxu0 %v457
    %2460 = vmatpush.msra.mxu0 %v449
    %2461 = vmatmul.f32.gmra.mxu0 %v435
    %v2462 = vpop.f32.mrf.mxu0
    %v2463 = vadd.f32 %v1475, %v2462
    %2464 = vdwg.mxu0
    %2465 = vmatpush.msra.mxu0 %v697
    %2466 = vmatpush.msra.mxu0 %v689
    %2467 = vmatpush.msra.mxu0 %v681
    %2468 = vmatpush.msra.mxu0 %v673
    %2469 = vmatpush.msra.mxu0 %v665
    %2470 = vmatpush.msra.mxu0 %v657
    %2471 = vmatpush.msra.mxu0 %v649
    %2472 = vmatpush.msra.mxu0 %v641
    %2473 = vmatpush.msra.mxu0 %v633
    %2474 = vmatpush.msra.mxu0 %v625
    %2475 = vmatpush.msra.mxu0 %v617
    %2476 = vmatpush.msra.mxu0 %v609
    %2477 = vmatpush.msra.mxu0 %v601
    %2478 = vmatpush.msra.mxu0 %v593
    %2479 = vmatpush.msra.mxu0 %v585
    %2480 = vmatpush.msra.mxu0 %v577
    %2481 = vmatmul.f32.gmra.mxu0 %v436
    %v2482 = vpop.f32.mrf.mxu0
    %v2483 = vadd.f32 %v2463, %v2482
    %2484 = vdwg.mxu0
    %2485 = vmatpush.msra.mxu0 %v825
    %2486 = vmatpush.msra.mxu0 %v817
    %2487 = vmatpush.msra.mxu0 %v809
    %2488 = vmatpush.msra.mxu0 %v801
    %2489 = vmatpush.msra.mxu0 %v793
    %2490 = vmatpush.msra.mxu0 %v785
    %2491 = vmatpush.msra.mxu0 %v777
    %2492 = vmatpush.msra.mxu0 %v769
    %2493 = vmatpush.msra.mxu0 %v761
    %2494 = vmatpush.msra.mxu0 %v753
    %2495 = vmatpush.msra.mxu0 %v745
    %2496 = vmatpush.msra.mxu0 %v737
    %2497 = vmatpush.msra.mxu0 %v729
    %2498 = vmatpush.msra.mxu0 %v721
    %2499 = vmatpush.msra.mxu0 %v713
    %2500 = vmatpush.msra.mxu0 %v705
    %2501 = vmatmul.f32.gmra.mxu0 %v437
    %v2502 = vpop.f32.mrf.mxu0
    %v2503 = vadd.f32 %v2483, %v2502
    %2504 = vdwg.mxu0
    %2505 = vmatpush.msra.mxu0 %v953
    %2506 = vmatpush.msra.mxu0 %v945
    %2507 = vmatpush.msra.mxu0 %v937
    %2508 = vmatpush.msra.mxu0 %v929
    %2509 = vmatpush.msra.mxu0 %v921
    %2510 = vmatpush.msra.mxu0 %v913
    %2511 = vmatpush.msra.mxu0 %v905
    %2512 = vmatpush.msra.mxu0 %v897
    %2513 = vmatpush.msra.mxu0 %v889
    %2514 = vmatpush.msra.mxu0 %v881
    %2515 = vmatpush.msra.mxu0 %v873
    %2516 = vmatpush.msra.mxu0 %v865
    %2517 = vmatpush.msra.mxu0 %v857
    %2518 = vmatpush.msra.mxu0 %v849
    %2519 = vmatpush.msra.mxu0 %v841
    %2520 = vmatpush.msra.mxu0 %v833
    %2521 = vmatmul.f32.gmra.mxu0 %v438
    %v2522 = vpop.f32.mrf.mxu0
    %v2523 = vadd.f32 %v2503, %v2522
    %2524 = vdwg.mxu0
    %2525 = vmatpush.msra.mxu0 %v1081
    %2526 = vmatpush.msra.mxu0 %v1073
    %2527 = vmatpush.msra.mxu0 %v1065
    %2528 = vmatpush.msra.mxu0 %v1057
    %2529 = vmatpush.msra.mxu0 %v1049
    %2530 = vmatpush.msra.mxu0 %v1041
    %2531 = vmatpush.msra.mxu0 %v1033
    %2532 = vmatpush.msra.mxu0 %v1025
    %2533 = vmatpush.msra.mxu0 %v1017
    %2534 = vmatpush.msra.mxu0 %v1009
    %2535 = vmatpush.msra.mxu0 %v1001
    %2536 = vmatpush.msra.mxu0 %v993
    %2537 = vmatpush.msra.mxu0 %v985
    %2538 = vmatpush.msra.mxu0 %v977
    %2539 = vmatpush.msra.mxu0 %v969
    %2540 = vmatpush.msra.mxu0 %v961
    %2541 = vmatmul.f32.gmra.mxu0 %v439
    %v2542 = vpop.f32.mrf.mxu0
    %v2543 = vadd.f32 %v2523, %v2542
    %2544 = vdwg.mxu0
    %2545 = vmatpush.msra.mxu0 %v1209
    %2546 = vmatpush.msra.mxu0 %v1201
    %2547 = vmatpush.msra.mxu0 %v1193
    %2548 = vmatpush.msra.mxu0 %v1185
    %2549 = vmatpush.msra.mxu0 %v1177
    %2550 = vmatpush.msra.mxu0 %v1169
    %2551 = vmatpush.msra.mxu0 %v1161
    %2552 = vmatpush.msra.mxu0 %v1153
    %2553 = vmatpush.msra.mxu0 %v1145
    %2554 = vmatpush.msra.mxu0 %v1137
    %2555 = vmatpush.msra.mxu0 %v1129
    %2556 = vmatpush.msra.mxu0 %v1121
    %2557 = vmatpush.msra.mxu0 %v1113
    %2558 = vmatpush.msra.mxu0 %v1105
    %2559 = vmatpush.msra.mxu0 %v1097
    %2560 = vmatpush.msra.mxu0 %v1089
    %2561 = vmatmul.f32.gmra.mxu0 %v440
    %v2562 = vpop.f32.mrf.mxu0
    %v2563 = vadd.f32 %v2543, %v2562
    %2564 = vdwg.mxu0
    %2565 = vmatpush.msra.mxu0 %v1337
    %2566 = vmatpush.msra.mxu0 %v1329
    %2567 = vmatpush.msra.mxu0 %v1321
    %2568 = vmatpush.msra.mxu0 %v1313
    %2569 = vmatpush.msra.mxu0 %v1305
    %2570 = vmatpush.msra.mxu0 %v1297
    %2571 = vmatpush.msra.mxu0 %v1289
    %2572 = vmatpush.msra.mxu0 %v1281
    %2573 = vmatpush.msra.mxu0 %v1273
    %2574 = vmatpush.msra.mxu0 %v1265
    %2575 = vmatpush.msra.mxu0 %v1257
    %2576 = vmatpush.msra.mxu0 %v1249
    %2577 = vmatpush.msra.mxu0 %v1241
    %2578 = vmatpush.msra.mxu0 %v1233
    %2579 = vmatpush.msra.mxu0 %v1225
    %2580 = vmatpush.msra.mxu0 %v1217
    %2581 = vmatmul.f32.gmra.mxu0 %v441
    %v2582 = vpop.f32.mrf.mxu0
    %v2583 = vadd.f32 %v2563, %v2582
    %2584 = vdwg.mxu0
    %2585 = vmatpush.msra.mxu0 %v1465
    %2586 = vmatpush.msra.mxu0 %v1457
    %2587 = vmatpush.msra.mxu0 %v1449
    %2588 = vmatpush.msra.mxu0 %v1441
    %2589 = vmatpush.msra.mxu0 %v1433
    %2590 = vmatpush.msra.mxu0 %v1425
    %2591 = vmatpush.msra.mxu0 %v1417
    %2592 = vmatpush.msra.mxu0 %v1409
    %2593 = vmatpush.msra.mxu0 %v1401
    %2594 = vmatpush.msra.mxu0 %v1393
    %2595 = vmatpush.msra.mxu0 %v1385
    %2596 = vmatpush.msra.mxu0 %v1377
    %2597 = vmatpush.msra.mxu0 %v1369
    %2598 = vmatpush.msra.mxu0 %v1361
    %2599 = vmatpush.msra.mxu0 %v1353
    %2600 = vmatpush.msra.mxu0 %v1345
    %2601 = vmatmul.f32.gmra.mxu0 %v442
    %v2602 = vpop.f32.mrf.mxu0
    %v2603 = vadd.f32 %v2583, %v2602
    %2604 = vdwg.mxu0
    %2605 = vmatpush.msra.mxu0 %v570
    %2606 = vmatpush.msra.mxu0 %v562
    %2607 = vmatpush.msra.mxu0 %v554
    %2608 = vmatpush.msra.mxu0 %v546
    %2609 = vmatpush.msra.mxu0 %v538
    %2610 = vmatpush.msra.mxu0 %v530
    %2611 = vmatpush.msra.mxu0 %v522
    %2612 = vmatpush.msra.mxu0 %v514
    %2613 = vmatpush.msra.mxu0 %v506
    %2614 = vmatpush.msra.mxu0 %v498
    %2615 = vmatpush.msra.mxu0 %v490
    %2616 = vmatpush.msra.mxu0 %v482
    %2617 = vmatpush.msra.mxu0 %v474
    %2618 = vmatpush.msra.mxu0 %v466
    %2619 = vmatpush.msra.mxu0 %v458
    %2620 = vmatpush.msra.mxu0 %v450
    %2621 = vmatmul.f32.gmra.mxu0 %v435
    %v2622 = vpop.f32.mrf.mxu0
    %v2623 = vadd.f32 %v1476, %v2622
    %2624 = vdwg.mxu0
    %2625 = vmatpush.msra.mxu0 %v698
    %2626 = vmatpush.msra.mxu0 %v690
    %2627 = vmatpush.msra.mxu0 %v682
    %2628 = vmatpush.msra.mxu0 %v674
    %2629 = vmatpush.msra.mxu0 %v666
    %2630 = vmatpush.msra.mxu0 %v658
    %2631 = vmatpush.msra.mxu0 %v650
    %2632 = vmatpush.msra.mxu0 %v642
    %2633 = vmatpush.msra.mxu0 %v634
    %2634 = vmatpush.msra.mxu0 %v626
    %2635 = vmatpush.msra.mxu0 %v618
    %2636 = vmatpush.msra.mxu0 %v610
    %2637 = vmatpush.msra.mxu0 %v602
    %2638 = vmatpush.msra.mxu0 %v594
    %2639 = vmatpush.msra.mxu0 %v586
    %2640 = vmatpush.msra.mxu0 %v578
    %2641 = vmatmul.f32.gmra.mxu0 %v436
    %v2642 = vpop.f32.mrf.mxu0
    %v2643 = vadd.f32 %v2623, %v2642
    %2644 = vdwg.mxu0
    %2645 = vmatpush.msra.mxu0 %v826
    %2646 = vmatpush.msra.mxu0 %v818
    %2647 = vmatpush.msra.mxu0 %v810
    %2648 = vmatpush.msra.mxu0 %v802
    %2649 = vmatpush.msra.mxu0 %v794
    %2650 = vmatpush.msra.mxu0 %v786
    %2651 = vmatpush.msra.mxu0 %v778
    %2652 = vmatpush.msra.mxu0 %v770
    %2653 = vmatpush.msra.mxu0 %v762
    %2654 = vmatpush.msra.mxu0 %v754
    %2655 = vmatpush.msra.mxu0 %v746
    %2656 = vmatpush.msra.mxu0 %v738
    %2657 = vmatpush.msra.mxu0 %v730
    %2658 = vmatpush.msra.mxu0 %v722
    %2659 = vmatpush.msra.mxu0 %v714
    %2660 = vmatpush.msra.mxu0 %v706
    %2661 = vmatmul.f32.gmra.mxu0 %v437
    %v2662 = vpop.f32.mrf.mxu0
    %v2663 = vadd.f32 %v2643, %v2662
    %2664 = vdwg.mxu0
    %2665 = vmatpush.msra.mxu0 %v954
    %2666 = vmatpush.msra.mxu0 %v946
    %2667 = vmatpush.msra.mxu0 %v938
    %2668 = vmatpush.msra.mxu0 %v930
    %2669 = vmatpush.msra.mxu0 %v922
    %2670 = vmatpush.msra.mxu0 %v914
    %2671 = vmatpush.msra.mxu0 %v906
    %2672 = vmatpush.msra.mxu0 %v898
    %2673 = vmatpush.msra.mxu0 %v890
    %2674 = vmatpush.msra.mxu0 %v882
    %2675 = vmatpush.msra.mxu0 %v874
    %2676 = vmatpush.msra.mxu0 %v866
    %2677 = vmatpush.msra.mxu0 %v858
    %2678 = vmatpush.msra.mxu0 %v850
    %2679 = vmatpush.msra.mxu0 %v842
    %2680 = vmatpush.msra.mxu0 %v834
    %2681 = vmatmul.f32.gmra.mxu0 %v438
    %v2682 = vpop.f32.mrf.mxu0
    %v2683 = vadd.f32 %v2663, %v2682
    %2684 = vdwg.mxu0
    %2685 = vmatpush.msra.mxu0 %v1082
    %2686 = vmatpush.msra.mxu0 %v1074
    %2687 = vmatpush.msra.mxu0 %v1066
    %2688 = vmatpush.msra.mxu0 %v1058
    %2689 = vmatpush.msra.mxu0 %v1050
    %2690 = vmatpush.msra.mxu0 %v1042
    %2691 = vmatpush.msra.mxu0 %v1034
    %2692 = vmatpush.msra.mxu0 %v1026
    %2693 = vmatpush.msra.mxu0 %v1018
    %2694 = vmatpush.msra.mxu0 %v1010
    %2695 = vmatpush.msra.mxu0 %v1002
    %2696 = vmatpush.msra.mxu0 %v994
    %2697 = vmatpush.msra.mxu0 %v986
    %2698 = vmatpush.msra.mxu0 %v978
    %2699 = vmatpush.msra.mxu0 %v970
    %2700 = vmatpush.msra.mxu0 %v962
    %2701 = vmatmul.f32.gmra.mxu0 %v439
    %v2702 = vpop.f32.mrf.mxu0
    %v2703 = vadd.f32 %v2683, %v2702
    %2704 = vdwg.mxu0
    %2705 = vmatpush.msra.mxu0 %v1210
    %2706 = vmatpush.msra.mxu0 %v1202
    %2707 = vmatpush.msra.mxu0 %v1194
    %2708 = vmatpush.msra.mxu0 %v1186
    %2709 = vmatpush.msra.mxu0 %v1178
    %2710 = vmatpush.msra.mxu0 %v1170
    %2711 = vmatpush.msra.mxu0 %v1162
    %2712 = vmatpush.msra.mxu0 %v1154
    %2713 = vmatpush.msra.mxu0 %v1146
    %2714 = vmatpush.msra.mxu0 %v1138
    %2715 = vmatpush.msra.mxu0 %v1130
    %2716 = vmatpush.msra.mxu0 %v1122
    %2717 = vmatpush.msra.mxu0 %v1114
    %2718 = vmatpush.msra.mxu0 %v1106
    %2719 = vmatpush.msra.mxu0 %v1098
    %2720 = vmatpush.msra.mxu0 %v1090
    %2721 = vmatmul.f32.gmra.mxu0 %v440
    %v2722 = vpop.f32.mrf.mxu0
    %v2723 = vadd.f32 %v2703, %v2722
    %2724 = vdwg.mxu0
    %2725 = vmatpush.msra.mxu0 %v1338
    %2726 = vmatpush.msra.mxu0 %v1330
    %2727 = vmatpush.msra.mxu0 %v1322
    %2728 = vmatpush.msra.mxu0 %v1314
    %2729 = vmatpush.msra.mxu0 %v1306
    %2730 = vmatpush.msra.mxu0 %v1298
    %2731 = vmatpush.msra.mxu0 %v1290
    %2732 = vmatpush.msra.mxu0 %v1282
    %2733 = vmatpush.msra.mxu0 %v1274
    %2734 = vmatpush.msra.mxu0 %v1266
    %2735 = vmatpush.msra.mxu0 %v1258
    %2736 = vmatpush.msra.mxu0 %v1250
    %2737 = vmatpush.msra.mxu0 %v1242
    %2738 = vmatpush.msra.mxu0 %v1234
    %2739 = vmatpush.msra.mxu0 %v1226
    %2740 = vmatpush.msra.mxu0 %v1218
    %2741 = vmatmul.f32.gmra.mxu0 %v441
    %v2742 = vpop.f32.mrf.mxu0
    %v2743 = vadd.f32 %v2723, %v2742
    %2744 = vdwg.mxu0
    %2745 = vmatpush.msra.mxu0 %v1466
    %2746 = vmatpush.msra.mxu0 %v1458
    %2747 = vmatpush.msra.mxu0 %v1450
    %2748 = vmatpush.msra.mxu0 %v1442
    %2749 = vmatpush.msra.mxu0 %v1434
    %2750 = vmatpush.msra.mxu0 %v1426
    %2751 = vmatpush.msra.mxu0 %v1418
    %2752 = vmatpush.msra.mxu0 %v1410
    %2753 = vmatpush.msra.mxu0 %v1402
    %2754 = vmatpush.msra.mxu0 %v1394
    %2755 = vmatpush.msra.mxu0 %v1386
    %2756 = vmatpush.msra.mxu0 %v1378
    %2757 = vmatpush.msra.mxu0 %v1370
    %2758 = vmatpush.msra.mxu0 %v1362
    %2759 = vmatpush.msra.mxu0 %v1354
    %2760 = vmatpush.msra.mxu0 %v1346
    %2761 = vmatmul.f32.gmra.mxu0 %v442
    %v2762 = vpop.f32.mrf.mxu0
    %v2763 = vadd.f32 %v2743, %v2762
    %2764 = vdwg.mxu0
    %v2765 = vmax.f32 %v1643, 0.0
    %v2766 = vmax.f32 %v1803, 0.0
    %v2767 = vmax.f32 %v1963, 0.0
    %v2768 = vmax.f32 %v2123, 0.0
    %v2769 = vmax.f32 %v2283, 0.0
    %v2770 = vmax.f32 %v2443, 0.0
    %v2771 = vmax.f32 %v2603, 0.0
    %v2772 = vmax.f32 %v2763, 0.0
    %v2773 = vld [vmem:[#allocation11] sm:$0xff]
    %v2774 = vld [vmem:[#allocation11 + $0x8] sm:$0xff]
    %v2775 = vld [vmem:[#allocation11 + $0x10] sm:$0xff]
    %v2776 = vld [vmem:[#allocation11 + $0x18] sm:$0xff]
    %v2777 = vld [vmem:[#allocation11 + $0x20] sm:$0xff]
    %v2778 = vld [vmem:[#allocation11 + $0x28] sm:$0xff]
    %v2779 = vld [vmem:[#allocation11 + $0x30] sm:$0xff]
    %v2780 = vld [vmem:[#allocation11 + $0x38] sm:$0xff]
    %v2781 = vld [vmem:[#allocation11 + $0x40] sm:$0xff]
    %v2782 = vld [vmem:[#allocation11 + $0x48] sm:$0xff]
    %v2783 = vld [vmem:[#allocation11 + $0x50] sm:$0xff]
    %v2784 = vld [vmem:[#allocation11 + $0x58] sm:$0xff]
    %v2785 = vld [vmem:[#allocation11 + $0x60] sm:$0xff]
    %v2786 = vld [vmem:[#allocation11 + $0x68] sm:$0xff]
    %v2787 = vld [vmem:[#allocation11 + $0x70] sm:$0xff]
    %v2788 = vld [vmem:[#allocation11 + $0x78] sm:$0xff]
    %v2789 = vld [vmem:[#allocation11 + $0x80] sm:$0xff]
    %v2790 = vld [vmem:[#allocation11 + $0x88] sm:$0xff]
    %v2791 = vld [vmem:[#allocation11 + $0x90] sm:$0xff]
    %v2792 = vld [vmem:[#allocation11 + $0x98] sm:$0xff]
    %v2793 = vld [vmem:[#allocation11 + $0xa0] sm:$0xff]
    %v2794 = vld [vmem:[#allocation11 + $0xa8] sm:$0xff]
    %v2795 = vld [vmem:[#allocation11 + $0xb0] sm:$0xff]
    %v2796 = vld [vmem:[#allocation11 + $0xb8] sm:$0xff]
    %v2797 = vld [vmem:[#allocation11 + $0xc0] sm:$0xff]
    %v2798 = vld [vmem:[#allocation11 + $0xc8] sm:$0xff]
    %v2799 = vld [vmem:[#allocation11 + $0xd0] sm:$0xff]
    %v2800 = vld [vmem:[#allocation11 + $0xd8] sm:$0xff]
    %v2801 = vld [vmem:[#allocation11 + $0xe0] sm:$0xff]
    %v2802 = vld [vmem:[#allocation11 + $0xe8] sm:$0xff]
    %v2803 = vld [vmem:[#allocation11 + $0xf0] sm:$0xff]
    %v2804 = vld [vmem:[#allocation11 + $0xf8] sm:$0xff]
    %v2805 = vld [vmem:[#allocation11 + $0x100] sm:$0xff]
    %v2806 = vld [vmem:[#allocation11 + $0x108] sm:$0xff]
    %v2807 = vld [vmem:[#allocation11 + $0x110] sm:$0xff]
    %v2808 = vld [vmem:[#allocation11 + $0x118] sm:$0xff]
    %v2809 = vld [vmem:[#allocation11 + $0x120] sm:$0xff]
    %v2810 = vld [vmem:[#allocation11 + $0x128] sm:$0xff]
    %v2811 = vld [vmem:[#allocation11 + $0x130] sm:$0xff]
    %v2812 = vld [vmem:[#allocation11 + $0x138] sm:$0xff]
    %v2813 = vld [vmem:[#allocation11 + $0x140] sm:$0xff]
    %v2814 = vld [vmem:[#allocation11 + $0x148] sm:$0xff]
    %v2815 = vld [vmem:[#allocation11 + $0x150] sm:$0xff]
    %v2816 = vld [vmem:[#allocation11 + $0x158] sm:$0xff]
    %v2817 = vld [vmem:[#allocation11 + $0x160] sm:$0xff]
    %v2818 = vld [vmem:[#allocation11 + $0x168] sm:$0xff]
    %v2819 = vld [vmem:[#allocation11 + $0x170] sm:$0xff]
    %v2820 = vld [vmem:[#allocation11 + $0x178] sm:$0xff]
    %v2821 = vld [vmem:[#allocation11 + $0x180] sm:$0xff]
    %v2822 = vld [vmem:[#allocation11 + $0x188] sm:$0xff]
    %v2823 = vld [vmem:[#allocation11 + $0x190] sm:$0xff]
    %v2824 = vld [vmem:[#allocation11 + $0x198] sm:$0xff]
    %v2825 = vld [vmem:[#allocation11 + $0x1a0] sm:$0xff]
    %v2826 = vld [vmem:[#allocation11 + $0x1a8] sm:$0xff]
    %v2827 = vld [vmem:[#allocation11 + $0x1b0] sm:$0xff]
    %v2828 = vld [vmem:[#allocation11 + $0x1b8] sm:$0xff]
    %v2829 = vld [vmem:[#allocation11 + $0x1c0] sm:$0xff]
    %v2830 = vld [vmem:[#allocation11 + $0x1c8] sm:$0xff]
    %v2831 = vld [vmem:[#allocation11 + $0x1d0] sm:$0xff]
    %v2832 = vld [vmem:[#allocation11 + $0x1d8] sm:$0xff]
    %v2833 = vld [vmem:[#allocation11 + $0x1e0] sm:$0xff]
    %v2834 = vld [vmem:[#allocation11 + $0x1e8] sm:$0xff]
    %v2835 = vld [vmem:[#allocation11 + $0x1f0] sm:$0xff]
    %v2836 = vld [vmem:[#allocation11 + $0x1f8] sm:$0xff]
    %v2837 = vld [vmem:[#allocation11 + $0x200] sm:$0xff]
    %v2838 = vld [vmem:[#allocation11 + $0x208] sm:$0xff]
    %v2839 = vld [vmem:[#allocation11 + $0x210] sm:$0xff]
    %v2840 = vld [vmem:[#allocation11 + $0x218] sm:$0xff]
    %v2841 = vld [vmem:[#allocation11 + $0x220] sm:$0xff]
    %v2842 = vld [vmem:[#allocation11 + $0x228] sm:$0xff]
    %v2843 = vld [vmem:[#allocation11 + $0x230] sm:$0xff]
    %v2844 = vld [vmem:[#allocation11 + $0x238] sm:$0xff]
    %v2845 = vld [vmem:[#allocation11 + $0x240] sm:$0xff]
    %v2846 = vld [vmem:[#allocation11 + $0x248] sm:$0xff]
    %v2847 = vld [vmem:[#allocation11 + $0x250] sm:$0xff]
    %v2848 = vld [vmem:[#allocation11 + $0x258] sm:$0xff]
    %v2849 = vld [vmem:[#allocation11 + $0x260] sm:$0xff]
    %v2850 = vld [vmem:[#allocation11 + $0x268] sm:$0xff]
    %v2851 = vld [vmem:[#allocation11 + $0x270] sm:$0xff]
    %v2852 = vld [vmem:[#allocation11 + $0x278] sm:$0xff]
    %v2853 = vld [vmem:[#allocation11 + $0x280] sm:$0xff]
    %v2854 = vld [vmem:[#allocation11 + $0x288] sm:$0xff]
    %v2855 = vld [vmem:[#allocation11 + $0x290] sm:$0xff]
    %v2856 = vld [vmem:[#allocation11 + $0x298] sm:$0xff]
    %v2857 = vld [vmem:[#allocation11 + $0x2a0] sm:$0xff]
    %v2858 = vld [vmem:[#allocation11 + $0x2a8] sm:$0xff]
    %v2859 = vld [vmem:[#allocation11 + $0x2b0] sm:$0xff]
    %v2860 = vld [vmem:[#allocation11 + $0x2b8] sm:$0xff]
    %v2861 = vld [vmem:[#allocation11 + $0x2c0] sm:$0xff]
    %v2862 = vld [vmem:[#allocation11 + $0x2c8] sm:$0xff]
    %v2863 = vld [vmem:[#allocation11 + $0x2d0] sm:$0xff]
    %v2864 = vld [vmem:[#allocation11 + $0x2d8] sm:$0xff]
    %v2865 = vld [vmem:[#allocation11 + $0x2e0] sm:$0xff]
    %v2866 = vld [vmem:[#allocation11 + $0x2e8] sm:$0xff]
    %v2867 = vld [vmem:[#allocation11 + $0x2f0] sm:$0xff]
    %v2868 = vld [vmem:[#allocation11 + $0x2f8] sm:$0xff]
    %v2869 = vld [vmem:[#allocation11 + $0x300] sm:$0xff]
    %v2870 = vld [vmem:[#allocation11 + $0x308] sm:$0xff]
    %v2871 = vld [vmem:[#allocation11 + $0x310] sm:$0xff]
    %v2872 = vld [vmem:[#allocation11 + $0x318] sm:$0xff]
    %v2873 = vld [vmem:[#allocation11 + $0x320] sm:$0xff]
    %v2874 = vld [vmem:[#allocation11 + $0x328] sm:$0xff]
    %v2875 = vld [vmem:[#allocation11 + $0x330] sm:$0xff]
    %v2876 = vld [vmem:[#allocation11 + $0x338] sm:$0xff]
    %v2877 = vld [vmem:[#allocation11 + $0x340] sm:$0xff]
    %v2878 = vld [vmem:[#allocation11 + $0x348] sm:$0xff]
    %v2879 = vld [vmem:[#allocation11 + $0x350] sm:$0xff]
    %v2880 = vld [vmem:[#allocation11 + $0x358] sm:$0xff]
    %v2881 = vld [vmem:[#allocation11 + $0x360] sm:$0xff]
    %v2882 = vld [vmem:[#allocation11 + $0x368] sm:$0xff]
    %v2883 = vld [vmem:[#allocation11 + $0x370] sm:$0xff]
    %v2884 = vld [vmem:[#allocation11 + $0x378] sm:$0xff]
    %v2885 = vld [vmem:[#allocation11 + $0x380] sm:$0xff]
    %v2886 = vld [vmem:[#allocation11 + $0x388] sm:$0xff]
    %v2887 = vld [vmem:[#allocation11 + $0x390] sm:$0xff]
    %v2888 = vld [vmem:[#allocation11 + $0x398] sm:$0xff]
    %v2889 = vld [vmem:[#allocation11 + $0x3a0] sm:$0xff]
    %v2890 = vld [vmem:[#allocation11 + $0x3a8] sm:$0xff]
    %v2891 = vld [vmem:[#allocation11 + $0x3b0] sm:$0xff]
    %v2892 = vld [vmem:[#allocation11 + $0x3b8] sm:$0xff]
    %v2893 = vld [vmem:[#allocation11 + $0x3c0] sm:$0xff]
    %v2894 = vld [vmem:[#allocation11 + $0x3c8] sm:$0xff]
    %v2895 = vld [vmem:[#allocation11 + $0x3d0] sm:$0xff]
    %v2896 = vld [vmem:[#allocation11 + $0x3d8] sm:$0xff]
    %v2897 = vld [vmem:[#allocation11 + $0x3e0] sm:$0xff]
    %v2898 = vld [vmem:[#allocation11 + $0x3e8] sm:$0xff]
    %v2899 = vld [vmem:[#allocation11 + $0x3f0] sm:$0xff]
    %v2900 = vld [vmem:[#allocation11 + $0x3f8] sm:$0xff]
    %v2901 = vld [vmem:[#allocation13] sm:$0x1]
    %v2903 = vperm.slane %v2901, 0
    %2905 = vmatpush.msra.mxu0 %v2788
    %2906 = vmatpush.msra.mxu0 %v2787
    %2907 = vmatpush.msra.mxu0 %v2786
    %2908 = vmatpush.msra.mxu0 %v2785
    %2909 = vmatpush.msra.mxu0 %v2784
    %2910 = vmatpush.msra.mxu0 %v2783
    %2911 = vmatpush.msra.mxu0 %v2782
    %2912 = vmatpush.msra.mxu0 %v2781
    %2913 = vmatpush.msra.mxu0 %v2780
    %2914 = vmatpush.msra.mxu0 %v2779
    %2915 = vmatpush.msra.mxu0 %v2778
    %2916 = vmatpush.msra.mxu0 %v2777
    %2917 = vmatpush.msra.mxu0 %v2776
    %2918 = vmatpush.msra.mxu0 %v2775
    %2919 = vmatpush.msra.mxu0 %v2774
    %2920 = vmatpush.msra.mxu0 %v2773
    %2921 = vmatmul.f32.gmra.mxu0 %v2765
    %v2922 = vpop.f32.mrf.mxu0
    %v2923 = vadd.f32 %v2903, %v2922
    %2924 = vdwg.mxu0
    %2925 = vmatpush.msra.mxu0 %v2804
    %2926 = vmatpush.msra.mxu0 %v2803
    %2927 = vmatpush.msra.mxu0 %v2802
    %2928 = vmatpush.msra.mxu0 %v2801
    %2929 = vmatpush.msra.mxu0 %v2800
    %2930 = vmatpush.msra.mxu0 %v2799
    %2931 = vmatpush.msra.mxu0 %v2798
    %2932 = vmatpush.msra.mxu0 %v2797
    %2933 = vmatpush.msra.mxu0 %v2796
    %2934 = vmatpush.msra.mxu0 %v2795
    %2935 = vmatpush.msra.mxu0 %v2794
    %2936 = vmatpush.msra.mxu0 %v2793
    %2937 = vmatpush.msra.mxu0 %v2792
    %2938 = vmatpush.msra.mxu0 %v2791
    %2939 = vmatpush.msra.mxu0 %v2790
    %2940 = vmatpush.msra.mxu0 %v2789
    %2941 = vmatmul.f32.gmra.mxu0 %v2766
    %v2942 = vpop.f32.mrf.mxu0
    %v2943 = vadd.f32 %v2923, %v2942
    %2944 = vdwg.mxu0
    %2945 = vmatpush.msra.mxu0 %v2820
    %2946 = vmatpush.msra.mxu0 %v2819
    %2947 = vmatpush.msra.mxu0 %v2818
    %2948 = vmatpush.msra.mxu0 %v2817
    %2949 = vmatpush.msra.mxu0 %v2816
    %2950 = vmatpush.msra.mxu0 %v2815
    %2951 = vmatpush.msra.mxu0 %v2814
    %2952 = vmatpush.msra.mxu0 %v2813
    %2953 = vmatpush.msra.mxu0 %v2812
    %2954 = vmatpush.msra.mxu0 %v2811
    %2955 = vmatpush.msra.mxu0 %v2810
    %2956 = vmatpush.msra.mxu0 %v2809
    %2957 = vmatpush.msra.mxu0 %v2808
    %2958 = vmatpush.msra.mxu0 %v2807
    %2959 = vmatpush.msra.mxu0 %v2806
    %2960 = vmatpush.msra.mxu0 %v2805
    %2961 = vmatmul.f32.gmra.mxu0 %v2767
    %v2962 = vpop.f32.mrf.mxu0
    %v2963 = vadd.f32 %v2943, %v2962
    %2964 = vdwg.mxu0
    %2965 = vmatpush.msra.mxu0 %v2836
    %2966 = vmatpush.msra.mxu0 %v2835
    %2967 = vmatpush.msra.mxu0 %v2834
    %2968 = vmatpush.msra.mxu0 %v2833
    %2969 = vmatpush.msra.mxu0 %v2832
    %2970 = vmatpush.msra.mxu0 %v2831
    %2971 = vmatpush.msra.mxu0 %v2830
    %2972 = vmatpush.msra.mxu0 %v2829
    %2973 = vmatpush.msra.mxu0 %v2828
    %2974 = vmatpush.msra.mxu0 %v2827
    %2975 = vmatpush.msra.mxu0 %v2826
    %2976 = vmatpush.msra.mxu0 %v2825
    %2977 = vmatpush.msra.mxu0 %v2824
    %2978 = vmatpush.msra.mxu0 %v2823
    %2979 = vmatpush.msra.mxu0 %v2822
    %2980 = vmatpush.msra.mxu0 %v2821
    %2981 = vmatmul.f32.gmra.mxu0 %v2768
    %v2982 = vpop.f32.mrf.mxu0
    %v2983 = vadd.f32 %v2963, %v2982
    %2984 = vdwg.mxu0
    %2985 = vmatpush.msra.mxu0 %v2852
    %2986 = vmatpush.msra.mxu0 %v2851
    %2987 = vmatpush.msra.mxu0 %v2850
    %2988 = vmatpush.msra.mxu0 %v2849
    %2989 = vmatpush.msra.mxu0 %v2848
    %2990 = vmatpush.msra.mxu0 %v2847
    %2991 = vmatpush.msra.mxu0 %v2846
    %2992 = vmatpush.msra.mxu0 %v2845
    %2993 = vmatpush.msra.mxu0 %v2844
    %2994 = vmatpush.msra.mxu0 %v2843
    %2995 = vmatpush.msra.mxu0 %v2842
    %2996 = vmatpush.msra.mxu0 %v2841
    %2997 = vmatpush.msra.mxu0 %v2840
    %2998 = vmatpush.msra.mxu0 %v2839
    %2999 = vmatpush.msra.mxu0 %v2838
    %3000 = vmatpush.msra.mxu0 %v2837
    %3001 = vmatmul.f32.gmra.mxu0 %v2769
    %v3002 = vpop.f32.mrf.mxu0
    %v3003 = vadd.f32 %v2983, %v3002
    %3004 = vdwg.mxu0
    %3005 = vmatpush.msra.mxu0 %v2868
    %3006 = vmatpush.msra.mxu0 %v2867
    %3007 = vmatpush.msra.mxu0 %v2866
    %3008 = vmatpush.msra.mxu0 %v2865
    %3009 = vmatpush.msra.mxu0 %v2864
    %3010 = vmatpush.msra.mxu0 %v2863
    %3011 = vmatpush.msra.mxu0 %v2862
    %3012 = vmatpush.msra.mxu0 %v2861
    %3013 = vmatpush.msra.mxu0 %v2860
    %3014 = vmatpush.msra.mxu0 %v2859
    %3015 = vmatpush.msra.mxu0 %v2858
    %3016 = vmatpush.msra.mxu0 %v2857
    %3017 = vmatpush.msra.mxu0 %v2856
    %3018 = vmatpush.msra.mxu0 %v2855
    %3019 = vmatpush.msra.mxu0 %v2854
    %3020 = vmatpush.msra.mxu0 %v2853
    %3021 = vmatmul.f32.gmra.mxu0 %v2770
    %v3022 = vpop.f32.mrf.mxu0
    %v3023 = vadd.f32 %v3003, %v3022
    %3024 = vdwg.mxu0
    %3025 = vmatpush.msra.mxu0 %v2884
    %3026 = vmatpush.msra.mxu0 %v2883
    %3027 = vmatpush.msra.mxu0 %v2882
    %3028 = vmatpush.msra.mxu0 %v2881
    %3029 = vmatpush.msra.mxu0 %v2880
    %3030 = vmatpush.msra.mxu0 %v2879
    %3031 = vmatpush.msra.mxu0 %v2878
    %3032 = vmatpush.msra.mxu0 %v2877
    %3033 = vmatpush.msra.mxu0 %v2876
    %3034 = vmatpush.msra.mxu0 %v2875
    %3035 = vmatpush.msra.mxu0 %v2874
    %3036 = vmatpush.msra.mxu0 %v2873
    %3037 = vmatpush.msra.mxu0 %v2872
    %3038 = vmatpush.msra.mxu0 %v2871
    %3039 = vmatpush.msra.mxu0 %v2870
    %3040 = vmatpush.msra.mxu0 %v2869
    %3041 = vmatmul.f32.gmra.mxu0 %v2771
    %v3042 = vpop.f32.mrf.mxu0
    %v3043 = vadd.f32 %v3023, %v3042
    %3044 = vdwg.mxu0
    %3045 = vmatpush.msra.mxu0 %v2900
    %3046 = vmatpush.msra.mxu0 %v2899
    %3047 = vmatpush.msra.mxu0 %v2898
    %3048 = vmatpush.msra.mxu0 %v2897
    %3049 = vmatpush.msra.mxu0 %v2896
    %3050 = vmatpush.msra.mxu0 %v2895
    %3051 = vmatpush.msra.mxu0 %v2894
    %3052 = vmatpush.msra.mxu0 %v2893
    %3053 = vmatpush.msra.mxu0 %v2892
    %3054 = vmatpush.msra.mxu0 %v2891
    %3055 = vmatpush.msra.mxu0 %v2890
    %3056 = vmatpush.msra.mxu0 %v2889
    %3057 = vmatpush.msra.mxu0 %v2888
    %3058 = vmatpush.msra.mxu0 %v2887
    %3059 = vmatpush.msra.mxu0 %v2886
    %3060 = vmatpush.msra.mxu0 %v2885
    %3061 = vmatmul.f32.gmra.mxu0 %v2772
    %v3062 = vpop.f32.mrf.mxu0
    %v3063 = vadd.f32 %v3043, %v3062
    %3064 = vdwg.mxu0
    %3065 = vst [vmem:[#allocation14] sm:$0xff] %v3063
    // Predicated region
    $region58: #{tpu_custom_call.1} parent=1 // pred_check
      _
    $region59: #{tpu_custom_call.1} parent=1 // pred_check_branch
      %3067 = sbr.rel (0) target = $region61
    $region60: #{tpu_custom_call.1} parent=1 // pred_region
      %3069 = vsyncadd [#allocation4], 0
      %s3071 = sshll.u32 [#allocation14], 4
      %s3072 = int_to_ptr.vmem [resolvable:$true] %s3071
      %s3073 = sshll.u32 %s7, 4
      %s3074 = int_to_ptr.hbm [resolvable:$true] %s3073
      %3076 = dma.vmem_to_hbm [thread:$0]  %s3072, 128, %s3074, [#allocation4]
    $region61: #{tpu_custom_call.1} parent=1 // pred_fallthru
      _
    // Predicated region
    $region62: #{tpu_custom_call.1} parent=1 // pred_check
      _
    $region63: #{tpu_custom_call.1} parent=1 // pred_check_branch
      %3078 = sbr.rel (0) target = $region65
    $region64: #{tpu_custom_call.1} parent=1 // pred_region
      %3080 = dma.done [#allocation4], 128
    $region65: #{tpu_custom_call.1} parent=1 // pred_fallthru
      _
    %3081 = vsyncpa [#allocation3], 1
    %3082 = vsyncpa [#allocation6], 1
    %3083 = vsyncpa [#allocation9], 1
    %3084 = vsyncpa [#allocation12], 1
    %3085 = vsyncpa [#allocation4], 1

</llo_original>
